<compile_context>
chip_gen: v7x
topology: tpu7x:2x2x1
jax: 0.10.0
libtpu: 0.0.40
codegen_flags: <defaults>
</compile_context>

<pallas_src>
import jax
import jax.numpy as jnp
from jax.experimental import pallas as pl
from jax.experimental.pallas import tpu as pltpu

B, DX, DZ = 1024, 128, 32        # batch, data dim, latent dim
TB = 512                         # batch tile: grid=(2,) -> one tile per TC on v7x
NT = B // TB
_LOG2PI = 1.8378770664093453     # log(2*pi)


def _elbo_kernel(x_ref, eps_ref, wenc_ref, benc_ref, wdec_ref, bdec_ref, out_ref):
    x_bf = x_ref[...]                   # (TB, DX) bf16 (binary values -> exact)
    eps = eps_ref[...]                  # (TB, DZ) f32

    # ---- fused variational net q(z|x): one bf16 MXU dot for [mu | logstd] --
    h = jnp.dot(x_bf, wenc_ref[...],
                preferred_element_type=jnp.float32) + benc_ref[...]   # (TB, 2*DZ) f32
    mu = h[:, :DZ]                      # (TB, DZ)
    logstd = h[:, DZ:]                  # (TB, DZ)

    # reparameterization trick (sgvb requires is_reparameterized=True)
    z = mu + jnp.exp(logstd) * eps      # (TB, DZ) f32

    # ---- logpz - logqz, algebraically fused (constants cancel), reduced ----
    #   logqz = sum(-0.5*log2pi - logstd - 0.5*eps^2)
    #   logpz = sum(-0.5*log2pi - 0.5*z^2)
    #   logpz - logqz = sum(logstd + 0.5*eps^2 - 0.5*z^2)
    kl_neg = jnp.sum(logstd + 0.5 * (eps * eps) - 0.5 * (z * z),
                     keepdims=True)                    # (1, 1) tile partial

    # ---- likelihood term: Bernoulli.log_prob(x; logits) = x*l - softplus(l) -
    logits = jnp.dot(z.astype(jnp.bfloat16), wdec_ref[...],
                     preferred_element_type=jnp.float32) + bdec_ref[...]  # (TB, DX) f32
    x32 = x_bf.astype(jnp.float32)
    logpx_z = jnp.sum(x32 * logits - jax.nn.softplus(logits),
                      keepdims=True)                   # (1, 1) tile partial

    # one partial sum of (logpxz - logqz) per tile; mean + negation in wrapper
    out_ref[...] = (kl_neg + logpx_z)[None, :, :]      # (1, 1, 1)


@jax.jit
def elbo_sgvb(x, eps, w_enc, b_enc, w_dec, b_dec):
    """Returns the scalar surrogate cost -ELBO (reduce_mean=True)."""
    partial = pl.pallas_call(
        _elbo_kernel,
        out_shape=jax.ShapeDtypeStruct((NT, 1, 1), jnp.float32),
        grid=(NT,),
        in_specs=[
            pl.BlockSpec((TB, DX), lambda i: (i, 0)),       # x tile (streams, bf16)
            pl.BlockSpec((TB, DZ), lambda i: (i, 0)),       # eps tile (streams, f32)
            pl.BlockSpec((DX, 2 * DZ), lambda i: (0, 0)),   # [W_mu | W_logstd] (bf16, resident)
            pl.BlockSpec((1, 2 * DZ), lambda i: (0, 0)),    # [b_mu | b_logstd]
            pl.BlockSpec((DZ, DX), lambda i: (0, 0)),       # W_dec (bf16, resident)
            pl.BlockSpec((1, DX), lambda i: (0, 0)),        # b_dec
        ],
        out_specs=pl.BlockSpec((1, 1, 1), lambda i: (i, 0, 0)),
        compiler_params=pltpu.CompilerParams(
            dimension_semantics=("parallel",)),
    )(x, eps, w_enc, b_enc, w_dec, b_dec)
    # divide by B (not NT): partial holds per-tile SUMS of (logpxz - logqz)
    return -(jnp.sum(partial) / B)


def _reference(x, eps, w_mu, b_mu, w_ls, b_ls, w_dec, b_dec):
    mu = x @ w_mu + b_mu
    logstd = x @ w_ls + b_ls
    std = jnp.exp(logstd)
    z = mu + std * eps
    logqz = jnp.sum(-0.5 * _LOG2PI - logstd - 0.5 * eps**2, axis=-1)
    logpz = jnp.sum(-0.5 * _LOG2PI - 0.5 * z**2, axis=-1)
    logits = z @ w_dec + b_dec
    logpx_z = jnp.sum(x * logits - jax.nn.softplus(logits), axis=-1)
    return -jnp.mean(logpz + logpx_z - logqz)


if __name__ == "__main__":
    key = jax.random.PRNGKey(0)
    ks = jax.random.split(key, 6)

    # Observed data (binary, like Bernoulli-VAE inputs; exact in bf16) + noise.
    x = (jax.random.uniform(ks[0], (B, DX)) > 0.5).astype(jnp.bfloat16)
    eps = jax.random.normal(ks[1], (B, DZ), dtype=jnp.float32)

    # Deterministic synthetic parameters (no checkpoint load), stored bf16.
    scale_e = 1.0 / jnp.sqrt(jnp.float32(DX))
    scale_d = 1.0 / jnp.sqrt(jnp.float32(DZ))
    w_mu = (jax.random.normal(ks[2], (DX, DZ), jnp.float32) * scale_e).astype(jnp.bfloat16)
    b_mu = jnp.zeros((1, DZ), dtype=jnp.float32)
    w_ls = (jax.random.normal(ks[3], (DX, DZ), jnp.float32) * scale_e).astype(jnp.bfloat16)
    b_ls = jnp.full((1, DZ), -1.0, dtype=jnp.float32)
    w_dec = (jax.random.normal(ks[4], (DZ, DX), jnp.float32) * scale_d).astype(jnp.bfloat16)
    b_dec = jnp.zeros((1, DX), dtype=jnp.float32)

    # Fused encoder parameters for the single-dot encoder.
    w_enc = jnp.concatenate([w_mu, w_ls], axis=1)      # (DX, 2*DZ) bf16
    b_enc = jnp.concatenate([b_mu, b_ls], axis=1)      # (1, 2*DZ)  f32

    neg_elbo = jax.block_until_ready(elbo_sgvb(x, eps, w_enc, b_enc, w_dec, b_dec))

    # f32 reference over the same (bf16-stored) parameter values.
    ref = _reference(x.astype(jnp.float32), eps,
                     w_mu.astype(jnp.float32), b_mu[0],
                     w_ls.astype(jnp.float32), b_ls[0],
                     w_dec.astype(jnp.float32), b_dec[0])
    # bf16 MXU operands (z cast) -> loosened tolerance per review.
    assert jnp.allclose(neg_elbo, ref, rtol=1e-2, atol=1e-2), (neg_elbo, ref)

    print("KERNEL_OK")
</pallas_src>

<mosaic_0001>
module attributes {stable_mosaic.version = 11 : i64} {
  func.func @_elbo_kernel(%arg0: i32, %arg1: memref<512x128xbf16, #tpu.memory_space<vmem>>, %arg2: memref<512x32xf32, #tpu.memory_space<vmem>>, %arg3: memref<128x64xbf16, #tpu.memory_space<vmem>>, %arg4: memref<1x64xf32, #tpu.memory_space<vmem>>, %arg5: memref<32x128xbf16, #tpu.memory_space<vmem>>, %arg6: memref<1x128xf32, #tpu.memory_space<vmem>>, %arg7: memref<1x1x1xf32, #tpu.memory_space<vmem>>) attributes {dimension_semantics = [#tpu.dimension_semantics<parallel>], iteration_bounds = array<i64: 2>, scalar_prefetch = 0 : i64, scratch_operands = 0 : i64, tpu.core_type = #tpu.core_type<tc>, window_params = [{transform_indices = @transform_0, window_bounds = array<i64: 512, 128>}, {transform_indices = @transform_1, window_bounds = array<i64: 512, 32>}, {pipeline_mode = #tpu.pipeline_mode<synchronous>, transform_indices = @transform_2, window_bounds = array<i64: 128, 64>}, {pipeline_mode = #tpu.pipeline_mode<synchronous>, transform_indices = @transform_3, window_bounds = array<i64: 1, 64>}, {pipeline_mode = #tpu.pipeline_mode<synchronous>, transform_indices = @transform_4, window_bounds = array<i64: 32, 128>}, {pipeline_mode = #tpu.pipeline_mode<synchronous>, transform_indices = @transform_5, window_bounds = array<i64: 1, 128>}, {transform_indices = @transform_6, window_bounds = array<i64: 1, 1, 1>}]} {
    %c0 = arith.constant 0 : index
    %c0_0 = arith.constant 0 : index
    %0 = vector.load %arg1[%c0, %c0_0] : memref<512x128xbf16, #tpu.memory_space<vmem>>, vector<512x128xbf16>
    %c0_1 = arith.constant 0 : index
    %c0_2 = arith.constant 0 : index
    %1 = vector.load %arg2[%c0_1, %c0_2] : memref<512x32xf32, #tpu.memory_space<vmem>>, vector<512x32xf32>
    %c0_3 = arith.constant 0 : index
    %c0_4 = arith.constant 0 : index
    %2 = vector.load %arg3[%c0_3, %c0_4] : memref<128x64xbf16, #tpu.memory_space<vmem>>, vector<128x64xbf16>
    %cst = arith.constant dense<0.000000e+00> : vector<512x64xf32>
    %3 = tpu.matmul %0, %2, %cst {dimension_numbers = #tpu.dot_dimension_numbers<[1], [0], [0], [1], [0, 0, 1, 1], [], []>} : vector<512x128xbf16>, vector<128x64xbf16>, vector<512x64xf32> -> vector<512x64xf32>
    %c0_5 = arith.constant 0 : index
    %c0_6 = arith.constant 0 : index
    %4 = vector.load %arg4[%c0_5, %c0_6] : memref<1x64xf32, #tpu.memory_space<vmem>>, vector<1x64xf32>
    %5 = vector.broadcast %4 : vector<1x64xf32> to vector<512x64xf32>
    %6 = arith.addf %3, %5 : vector<512x64xf32>
    %7 = vector.extract_strided_slice %6 {offsets = [0, 0], sizes = [512, 32], strides = [1, 1]} : vector<512x64xf32> to vector<512x32xf32>
    %8 = vector.extract_strided_slice %6 {offsets = [0, 32], sizes = [512, 32], strides = [1, 1]} : vector<512x64xf32> to vector<512x32xf32>
    %9 = math.exp %8 : vector<512x32xf32>
    %10 = arith.mulf %9, %1 : vector<512x32xf32>
    %11 = arith.addf %7, %10 : vector<512x32xf32>
    %12 = arith.mulf %1, %1 : vector<512x32xf32>
    %cst_7 = arith.constant 5.000000e-01 : f32
    %13 = vector.broadcast %cst_7 : f32 to vector<512x32xf32>
    %14 = arith.mulf %13, %12 : vector<512x32xf32>
    %15 = arith.addf %8, %14 : vector<512x32xf32>
    %16 = arith.mulf %11, %11 : vector<512x32xf32>
    %cst_8 = arith.constant 5.000000e-01 : f32
    %17 = vector.broadcast %cst_8 : f32 to vector<512x32xf32>
    %18 = arith.mulf %17, %16 : vector<512x32xf32>
    %19 = arith.subf %15, %18 : vector<512x32xf32>
    %20 = vector.shape_cast %19 : vector<512x32xf32> to vector<1x512x32xf32>
    %cst_9 = arith.constant dense<0.000000e+00> : vector<1xf32>
    %21 = vector.multi_reduction <add>, %20, %cst_9 [1, 2] : vector<1x512x32xf32> to vector<1xf32>
    %22 = vector.shape_cast %21 : vector<1xf32> to vector<1x1x1xf32>
    %23 = vector.extract %22[0, 0, 0] : f32 from vector<1x1x1xf32>
    %24 = vector.broadcast %23 : f32 to vector<1x1xf32>
    %25 = arith.truncf %11 : vector<512x32xf32> to vector<512x32xbf16>
    %c0_10 = arith.constant 0 : index
    %c0_11 = arith.constant 0 : index
    %26 = vector.load %arg5[%c0_10, %c0_11] : memref<32x128xbf16, #tpu.memory_space<vmem>>, vector<32x128xbf16>
    %cst_12 = arith.constant dense<0.000000e+00> : vector<512x128xf32>
    %27 = tpu.matmul %25, %26, %cst_12 {dimension_numbers = #tpu.dot_dimension_numbers<[1], [0], [0], [1], [0, 0, 1, 1], [], []>} : vector<512x32xbf16>, vector<32x128xbf16>, vector<512x128xf32> -> vector<512x128xf32>
    %c0_13 = arith.constant 0 : index
    %c0_14 = arith.constant 0 : index
    %28 = vector.load %arg6[%c0_13, %c0_14] : memref<1x128xf32, #tpu.memory_space<vmem>>, vector<1x128xf32>
    %29 = vector.broadcast %28 : vector<1x128xf32> to vector<512x128xf32>
    %30 = arith.addf %27, %29 : vector<512x128xf32>
    %31 = arith.extf %0 : vector<512x128xbf16> to vector<512x128xf32>
    %32 = arith.mulf %31, %30 : vector<512x128xf32>
    %cst_15 = arith.constant 0.000000e+00 : f32
    %33 = vector.broadcast %cst_15 : f32 to vector<512x128xf32>
    %34 = arith.maximumf %30, %33 : vector<512x128xf32>
    %35 = vector.broadcast %cst_15 : f32 to vector<512x128xf32>
    %36 = arith.subf %30, %35 : vector<512x128xf32>
    %37 = arith.cmpf one, %36, %36 : vector<512x128xf32>
    %38 = vector.broadcast %cst_15 : f32 to vector<512x128xf32>
    %39 = arith.addf %30, %38 : vector<512x128xf32>
    %40 = math.absf %36 : vector<512x128xf32>
    %cst_16 = arith.constant 0.000000e+00 : f32
    %41 = vector.broadcast %cst_16 : f32 to vector<512x128xf32>
    %42 = arith.subf %41, %40 : vector<512x128xf32>
    %43 = math.exp %42 : vector<512x128xf32>
    %44 = math.log1p %43 : vector<512x128xf32>
    %45 = arith.addf %34, %44 : vector<512x128xf32>
    %46 = arith.select %37, %39, %45 : vector<512x128xi1>, vector<512x128xf32>
    %47 = arith.subf %32, %46 : vector<512x128xf32>
    %48 = vector.shape_cast %47 : vector<512x128xf32> to vector<1x512x128xf32>
    %cst_17 = arith.constant dense<0.000000e+00> : vector<1xf32>
    %49 = vector.multi_reduction <add>, %48, %cst_17 [1, 2] : vector<1x512x128xf32> to vector<1xf32>
    %50 = vector.shape_cast %49 : vector<1xf32> to vector<1x1x1xf32>
    %51 = vector.extract %50[0, 0, 0] : f32 from vector<1x1x1xf32>
    %52 = vector.broadcast %51 : f32 to vector<1x1xf32>
    %53 = arith.addf %24, %52 : vector<1x1xf32>
    %54 = vector.shape_cast %53 : vector<1x1xf32> to vector<1x1x1xf32>
    %c0_18 = arith.constant 0 : index
    %c0_19 = arith.constant 0 : index
    %c0_20 = arith.constant 0 : index
    %55 = vector.load %arg7[%c0_18, %c0_19, %c0_20] : memref<1x1x1xf32, #tpu.memory_space<vmem>>, vector<1x1x1xf32>
    tpu.vector_store %arg7[%c0_18, %c0_19, %c0_20], %54 {strides = array<i32>} : memref<1x1x1xf32, #tpu.memory_space<vmem>>, vector<1x1x1xf32>,
    return
  }
  func.func @transform_0(%arg0: i32) -> (i32, i32) {
    %c0_i32 = arith.constant 0 : i32
    %c0_i32_0 = arith.constant 0 : i32
    return %arg0, %c0_i32 : i32, i32
  }
  func.func @transform_1(%arg0: i32) -> (i32, i32) {
    %c0_i32 = arith.constant 0 : i32
    %c0_i32_0 = arith.constant 0 : i32
    return %arg0, %c0_i32 : i32, i32
  }
  func.func @transform_2(%arg0: i32) -> (i32, i32) {
    %c0_i32 = arith.constant 0 : i32
    %c0_i32_0 = arith.constant 0 : i32
    %c0_i32_1 = arith.constant 0 : i32
    return %c0_i32, %c0_i32_0 : i32, i32
  }
  func.func @transform_3(%arg0: i32) -> (i32, i32) {
    %c0_i32 = arith.constant 0 : i32
    %c0_i32_0 = arith.constant 0 : i32
    %c0_i32_1 = arith.constant 0 : i32
    return %c0_i32, %c0_i32_0 : i32, i32
  }
  func.func @transform_4(%arg0: i32) -> (i32, i32) {
    %c0_i32 = arith.constant 0 : i32
    %c0_i32_0 = arith.constant 0 : i32
    %c0_i32_1 = arith.constant 0 : i32
    return %c0_i32, %c0_i32_0 : i32, i32
  }
  func.func @transform_5(%arg0: i32) -> (i32, i32) {
    %c0_i32 = arith.constant 0 : i32
    %c0_i32_0 = arith.constant 0 : i32
    %c0_i32_1 = arith.constant 0 : i32
    return %c0_i32, %c0_i32_0 : i32, i32
  }
  func.func @transform_6(%arg0: i32) -> (i32, i32, i32) {
    %c0_i32 = arith.constant 0 : i32
    %c0_i32_0 = arith.constant 0 : i32
    %c0_i32_1 = arith.constant 0 : i32
    return %arg0, %c0_i32, %c0_i32_0 : i32, i32, i32
  }
}

</mosaic_0001>

<llo_original>
// kernel: elbo_sgvb.1
$region0: #{elbo_sgvb.1}
  #allocation0 [shape = 'u32[]', space=smem, size = 0x4, offset = 0x4, fixed_abs, tag = 'smem constant byte address 0x4 - core index']
  #allocation1 [shape = 'u32[144,128]{1,0:T(1,128)}', space=vmem, size = 0x12000, scoped, tag = 'internal scratch']
  %s0 = inlined_call_operand.vmem [shape: bf16[1024,128], index: 0, kind: input, shape index: {}]
  %s1 = inlined_call_operand.vmem [shape: f32[1024,32], index: 1, kind: input, shape index: {}]
  %s2 = inlined_call_operand.vmem [shape: bf16[128,64], index: 2, kind: input, shape index: {}]
  %s3 = inlined_call_operand.vmem [shape: f32[1,64], index: 3, kind: input, shape index: {}]
  %s4 = inlined_call_operand.vmem [shape: bf16[32,128], index: 4, kind: input, shape index: {}]
  %s5 = inlined_call_operand.vmem [shape: f32[1,128], index: 5, kind: input, shape index: {}]
  %s6 = inlined_call_operand.vmem [shape: f32[2,1,1], index: 6, kind: output, shape index: {}]
  %s7 = sld [smem:[#allocation0]]
  $region57: #{elbo_sgvb.1} parent=0
    _
  %s9 = ssub.s32 1, %s7
  %s10 = scalar_select 0, %s9, %s7
  loop: start=0, step=1, limit=4
  $region2: #{elbo_sgvb.1} parent=0 // loop_pre_header
    _
  $region3: #{elbo_sgvb.1} parent=0 // loop_header
    %s12 = sphi 0, %s16
    %p13 = scmp.ge.s32.totalorder %s12, 4
    %s22 = sphi 0, %s24
    %s25 = sphi 0, %s22
    %s26 = sphi 0, %s25
    %s42 = sphi 0, %s26
    %s48 = sphi 0, %s50
    %s51 = sphi 0, %s48
    %s52 = sphi 0, %s51
    %s68 = sphi 0, %s52
    %s72 = sphi 0, %s72
    %s74 = sphi 0, %s72
    %s75 = sphi 0, %s74
    %s89 = sphi 0, %s75
    %s93 = sphi 0, %s93
    %s95 = sphi 0, %s93
    %s96 = sphi 0, %s95
    %s110 = sphi 0, %s96
    %s114 = sphi 0, %s114
    %s116 = sphi 0, %s114
    %s117 = sphi 0, %s116
    %s131 = sphi 0, %s117
    %s135 = sphi 0, %s135
    %s137 = sphi 0, %s135
    %s138 = sphi 0, %s137
    %s152 = sphi 0, %s138
    %s158 = sphi 0, %s160
    %s161 = sphi 0, %s158
    %s162 = sphi 0, %s161
    %s178 = sphi 0, %s162
  $region4: #{elbo_sgvb.1} parent=0 // loop_header_branch
    %15 = sbr.rel (%p13) target = $region8
  $region5: #{elbo_sgvb.1} parent=0 // loop_body
    %s17 = ssub.s32 %s12, 1
    %s18 = ssub.s32 %s12, 2
    %s19 = sadd.s32 %s12, 1
    %s20 = ssub.s32 %s12, %s19
    %p21 = scmp.eq.s32.totalorder %s20, 0
    %s23 = sadd.s32 %s22, 1
    %s24 = scalar_select %p21, %s22, %s23
    %p27 = pneg %p21
    %p28 = scmp.eq.s32.totalorder %s12, 1
    %p29 = por %p27, %p28
    %p30 = scmp.ne.s32.totalorder %s22, %s25
    %p31 = scmp.eq.s32.totalorder %s12, 0
    %p32 = por %p30, %p31
    %p33 = scmp.ne.s32.totalorder %s22, %s25
    %p34 = scmp.eq.s32.totalorder %s17, 1
    %p35 = por %p33, %p34
    %p36 = scmp.ne.s32.totalorder %s25, %s26
    %p37 = scmp.eq.s32.totalorder %s17, 0
    %p38 = por %p36, %p37
    %p39 = scmp.ne.s32.totalorder %s25, %s26
    %p40 = scmp.eq.s32.totalorder %s18, 1
    %p41 = por %p39, %p40
    %p43 = scmp.ne.s32.totalorder %s26, %s42
    %p44 = scmp.eq.s32.totalorder %s18, 0
    %p45 = por %p43, %p44
    %s46 = ssub.s32 %s12, %s19
    %p47 = scmp.eq.s32.totalorder %s46, 0
    %s49 = sadd.s32 %s48, 1
    %s50 = scalar_select %p47, %s48, %s49
    %p53 = pneg %p47
    %p54 = scmp.eq.s32.totalorder %s12, 1
    %p55 = por %p53, %p54
    %p56 = scmp.ne.s32.totalorder %s48, %s51
    %p57 = scmp.eq.s32.totalorder %s12, 0
    %p58 = por %p56, %p57
    %p59 = scmp.ne.s32.totalorder %s48, %s51
    %p60 = scmp.eq.s32.totalorder %s17, 1
    %p61 = por %p59, %p60
    %p62 = scmp.ne.s32.totalorder %s51, %s52
    %p63 = scmp.eq.s32.totalorder %s17, 0
    %p64 = por %p62, %p63
    %p65 = scmp.ne.s32.totalorder %s51, %s52
    %p66 = scmp.eq.s32.totalorder %s18, 1
    %p67 = por %p65, %p66
    %p69 = scmp.ne.s32.totalorder %s52, %s68
    %p70 = scmp.eq.s32.totalorder %s18, 0
    %p71 = por %p69, %p70
    %s73 = sadd.s32 %s72, 1
    %p76 = scmp.eq.s32.totalorder %s12, 1
    %p77 = scmp.ne.s32.totalorder %s72, %s74
    %p78 = scmp.eq.s32.totalorder %s12, 0
    %p79 = por %p77, %p78
    %p80 = scmp.ne.s32.totalorder %s72, %s74
    %p81 = scmp.eq.s32.totalorder %s17, 1
    %p82 = por %p80, %p81
    %p83 = scmp.ne.s32.totalorder %s74, %s75
    %p84 = scmp.eq.s32.totalorder %s17, 0
    %p85 = por %p83, %p84
    %p86 = scmp.ne.s32.totalorder %s74, %s75
    %p87 = scmp.eq.s32.totalorder %s18, 1
    %p88 = por %p86, %p87
    %p90 = scmp.ne.s32.totalorder %s75, %s89
    %p91 = scmp.eq.s32.totalorder %s18, 0
    %p92 = por %p90, %p91
    %s94 = sadd.s32 %s93, 1
    %p97 = scmp.eq.s32.totalorder %s12, 1
    %p98 = scmp.ne.s32.totalorder %s93, %s95
    %p99 = scmp.eq.s32.totalorder %s12, 0
    %p100 = por %p98, %p99
    %p101 = scmp.ne.s32.totalorder %s93, %s95
    %p102 = scmp.eq.s32.totalorder %s17, 1
    %p103 = por %p101, %p102
    %p104 = scmp.ne.s32.totalorder %s95, %s96
    %p105 = scmp.eq.s32.totalorder %s17, 0
    %p106 = por %p104, %p105
    %p107 = scmp.ne.s32.totalorder %s95, %s96
    %p108 = scmp.eq.s32.totalorder %s18, 1
    %p109 = por %p107, %p108
    %p111 = scmp.ne.s32.totalorder %s96, %s110
    %p112 = scmp.eq.s32.totalorder %s18, 0
    %p113 = por %p111, %p112
    %s115 = sadd.s32 %s114, 1
    %p118 = scmp.eq.s32.totalorder %s12, 1
    %p119 = scmp.ne.s32.totalorder %s114, %s116
    %p120 = scmp.eq.s32.totalorder %s12, 0
    %p121 = por %p119, %p120
    %p122 = scmp.ne.s32.totalorder %s114, %s116
    %p123 = scmp.eq.s32.totalorder %s17, 1
    %p124 = por %p122, %p123
    %p125 = scmp.ne.s32.totalorder %s116, %s117
    %p126 = scmp.eq.s32.totalorder %s17, 0
    %p127 = por %p125, %p126
    %p128 = scmp.ne.s32.totalorder %s116, %s117
    %p129 = scmp.eq.s32.totalorder %s18, 1
    %p130 = por %p128, %p129
    %p132 = scmp.ne.s32.totalorder %s117, %s131
    %p133 = scmp.eq.s32.totalorder %s18, 0
    %p134 = por %p132, %p133
    %s136 = sadd.s32 %s135, 1
    %p139 = scmp.eq.s32.totalorder %s12, 1
    %p140 = scmp.ne.s32.totalorder %s135, %s137
    %p141 = scmp.eq.s32.totalorder %s12, 0
    %p142 = por %p140, %p141
    %p143 = scmp.ne.s32.totalorder %s135, %s137
    %p144 = scmp.eq.s32.totalorder %s17, 1
    %p145 = por %p143, %p144
    %p146 = scmp.ne.s32.totalorder %s137, %s138
    %p147 = scmp.eq.s32.totalorder %s17, 0
    %p148 = por %p146, %p147
    %p149 = scmp.ne.s32.totalorder %s137, %s138
    %p150 = scmp.eq.s32.totalorder %s18, 1
    %p151 = por %p149, %p150
    %p153 = scmp.ne.s32.totalorder %s138, %s152
    %p154 = scmp.eq.s32.totalorder %s18, 0
    %p155 = por %p153, %p154
    %s156 = ssub.s32 %s12, %s19
    %p157 = scmp.eq.s32.totalorder %s156, 0
    %s159 = sadd.s32 %s158, 1
    %s160 = scalar_select %p157, %s158, %s159
    %p163 = pneg %p157
    %p164 = scmp.eq.s32.totalorder %s12, 1
    %p165 = por %p163, %p164
    %p166 = scmp.ne.s32.totalorder %s158, %s161
    %p167 = scmp.eq.s32.totalorder %s12, 0
    %p168 = por %p166, %p167
    %p169 = scmp.ne.s32.totalorder %s158, %s161
    %p170 = scmp.eq.s32.totalorder %s17, 1
    %p171 = por %p169, %p170
    %p172 = scmp.ne.s32.totalorder %s161, %s162
    %p173 = scmp.eq.s32.totalorder %s17, 0
    %p174 = por %p172, %p173
    %p175 = scmp.ne.s32.totalorder %s161, %s162
    %p176 = scmp.eq.s32.totalorder %s18, 1
    %p177 = por %p175, %p176
    %p179 = scmp.ne.s32.totalorder %s162, %s178
    %p180 = scmp.eq.s32.totalorder %s18, 0
    %p181 = por %p179, %p180
    %p182 = scmp.le.s32.totalorder 1, %s12
    %p183 = scmp.lt.s32.totalorder %s12, 3
    %p184 = pnand %p182, %p183
    %p185 = pneg %p184
    // Predicated region
    $region9: #{elbo_sgvb.1} parent=5 // pred_check
      _
    $region10: #{elbo_sgvb.1} parent=5 // pred_check_branch
      %187 = sbr.rel (%p184) target = $region12
    $region11: #{elbo_sgvb.1} parent=5 // pred_region
      %s188 = ssub.s32 %s12, 1
      // Predicated region
      $region13: #{elbo_sgvb.1} parent=11 // pred_check
        %p189 = pneg %p85
      $region14: #{elbo_sgvb.1} parent=11 // pred_check_branch
        %191 = sbr.rel (%p189) target = $region16
      $region15: #{elbo_sgvb.1} parent=11 // pred_region
        _
      $region16: #{elbo_sgvb.1} parent=11 // pred_fallthru
        _
      // Predicated region
      $region17: #{elbo_sgvb.1} parent=11 // pred_check
        %p192 = pneg %p106
      $region18: #{elbo_sgvb.1} parent=11 // pred_check_branch
        %194 = sbr.rel (%p192) target = $region20
      $region19: #{elbo_sgvb.1} parent=11 // pred_region
        _
      $region20: #{elbo_sgvb.1} parent=11 // pred_fallthru
        _
      // Predicated region
      $region21: #{elbo_sgvb.1} parent=11 // pred_check
        %p195 = pneg %p127
      $region22: #{elbo_sgvb.1} parent=11 // pred_check_branch
        %197 = sbr.rel (%p195) target = $region24
      $region23: #{elbo_sgvb.1} parent=11 // pred_region
        _
      $region24: #{elbo_sgvb.1} parent=11 // pred_fallthru
        _
      // Predicated region
      $region25: #{elbo_sgvb.1} parent=11 // pred_check
        %p198 = pneg %p148
      $region26: #{elbo_sgvb.1} parent=11 // pred_check_branch
        %200 = sbr.rel (%p198) target = $region28
      $region27: #{elbo_sgvb.1} parent=11 // pred_region
        _
      $region28: #{elbo_sgvb.1} parent=11 // pred_fallthru
        _
    $region12: #{elbo_sgvb.1} parent=5 // pred_fallthru
      _
    %p201 = scmp.lt.s32.totalorder %s12, 2
    // Predicated region
    $region29: #{elbo_sgvb.1} parent=5 // pred_check
      %p202 = pneg %p201
    $region30: #{elbo_sgvb.1} parent=5 // pred_check_branch
      %204 = sbr.rel (%p202) target = $region32
    $region31: #{elbo_sgvb.1} parent=5 // pred_region
      // Predicated region
      $region33: #{elbo_sgvb.1} parent=31 // pred_check
        %p205 = pneg %p32
      $region34: #{elbo_sgvb.1} parent=31 // pred_check_branch
        %207 = sbr.rel (%p205) target = $region36
      $region35: #{elbo_sgvb.1} parent=31 // pred_region
        %s208 = smul.u32 64, %s12
        %p209 = scmp.lt.s32.totalorder %s208, 127
        %s210 = scalar_select %p209, %s208, 127
        %s211 = smul.addr %s210, 4
        %s212 = scalar_lea.vmem %s0, %s211
        %s213 = smul.u32 64, %s12
      $region36: #{elbo_sgvb.1} parent=31 // pred_fallthru
        _
      // Predicated region
      $region37: #{elbo_sgvb.1} parent=31 // pred_check
        %p214 = pneg %p58
      $region38: #{elbo_sgvb.1} parent=31 // pred_check_branch
        %216 = sbr.rel (%p214) target = $region40
      $region39: #{elbo_sgvb.1} parent=31 // pred_region
        %s217 = smul.u32 64, %s12
        %p218 = scmp.lt.s32.totalorder %s217, 127
        %s219 = scalar_select %p218, %s217, 127
        %s220 = smul.addr %s219, 8
        %s221 = scalar_lea.vmem %s1, %s220
        %s222 = smul.u32 64, %s12
      $region40: #{elbo_sgvb.1} parent=31 // pred_fallthru
        _
    $region32: #{elbo_sgvb.1} parent=5 // pred_fallthru
      _
    %p223 = scmp.le.s32.totalorder 1, %s12
    %p224 = scmp.lt.s32.totalorder %s12, 3
    %p225 = pnand %p223, %p224
    %p226 = pneg %p225
    // Predicated region
    $region41: #{elbo_sgvb.1} parent=5 // pred_check
      _
    $region42: #{elbo_sgvb.1} parent=5 // pred_check_branch
      %228 = sbr.rel (%p225) target = $region44
    $region43: #{elbo_sgvb.1} parent=5 // pred_region
      %s229 = ssub.s32 %s12, 1
      %s230 = smul.u32 64, %s17
      %p231 = scmp.lt.s32.totalorder %s230, 127
      %s232 = scalar_select %p231, %s230, 127
      %s233 = smul.addr %s232, 4
      %s234 = scalar_lea.vmem %s0, %s233
      %p235 = pneg %p38
      %p236 = pneg %p35
      %s237 = smul.u32 64, %s17
      %p238 = scmp.lt.s32.totalorder %s237, 127
      %s239 = scalar_select %p238, %s237, 127
      %s240 = smul.addr %s239, 8
      %s241 = scalar_lea.vmem %s1, %s240
      %p242 = pneg %p64
      %p243 = pneg %p61
      %p244 = pneg %p85
      %p245 = pneg %p82
      %p246 = pneg %p106
      %p247 = pneg %p103
      %p248 = pneg %p127
      %p249 = pneg %p124
      %p250 = pneg %p148
      %p251 = pneg %p145
      %p252 = pneg %p174
      %p253 = pneg %p171
      %p254 = scmp.lt.s32.totalorder %s17, 1
      %s255 = scalar_select %p254, %s17, 1
      %s256 = scalar_lea.vmem %s6, %s255
      %s257 = smul.u32 64, %s17
      %p258 = scmp.lt.s32.totalorder %s257, 127
      %s259 = scalar_select %p258, %s257, 127
      %s260 = smul.addr %s259, 4
      %s261 = scalar_lea.vmem %s0, %s260
      %s262 = smul.u32 64, %s17
      %s263 = smul.u32 64, %s17
      %p264 = scmp.lt.s32.totalorder %s263, 127
      %s265 = scalar_select %p264, %s263, 127
      %s266 = smul.addr %s265, 8
      %s267 = scalar_lea.vmem %s1, %s266
      %s268 = smul.u32 64, %s17
      %p269 = scmp.lt.s32.totalorder %s17, 1
      %s270 = scalar_select %p269, %s17, 1
      %s271 = scalar_lea.vmem %s6, %s270
      %v273 = vld [vmem:[%s261] sm:$0xf]
      %v274 = vld [vmem:[%s261 + $0x4] sm:$0xf]
      %v275 = vld [vmem:[%s261 + $0x8] sm:$0xf]
      %v276 = vld [vmem:[%s261 + $0xc] sm:$0xf]
      %v277 = vld [vmem:[%s261 + $0x10] sm:$0xf]
      %v278 = vld [vmem:[%s261 + $0x14] sm:$0xf]
      %v279 = vld [vmem:[%s261 + $0x18] sm:$0xf]
      %v280 = vld [vmem:[%s261 + $0x1c] sm:$0xf]
      %v281 = vld [vmem:[%s261 + $0x20] sm:$0xf]
      %v282 = vld [vmem:[%s261 + $0x24] sm:$0xf]
      %v283 = vld [vmem:[%s261 + $0x28] sm:$0xf]
      %v284 = vld [vmem:[%s261 + $0x2c] sm:$0xf]
      %v285 = vld [vmem:[%s261 + $0x30] sm:$0xf]
      %v286 = vld [vmem:[%s261 + $0x34] sm:$0xf]
      %v287 = vld [vmem:[%s261 + $0x38] sm:$0xf]
      %v288 = vld [vmem:[%s261 + $0x3c] sm:$0xf]
      %v289 = vld [vmem:[%s261 + $0x40] sm:$0xf]
      %v290 = vld [vmem:[%s261 + $0x44] sm:$0xf]
      %v291 = vld [vmem:[%s261 + $0x48] sm:$0xf]
      %v292 = vld [vmem:[%s261 + $0x4c] sm:$0xf]
      %v293 = vld [vmem:[%s261 + $0x50] sm:$0xf]
      %v294 = vld [vmem:[%s261 + $0x54] sm:$0xf]
      %v295 = vld [vmem:[%s261 + $0x58] sm:$0xf]
      %v296 = vld [vmem:[%s261 + $0x5c] sm:$0xf]
      %v297 = vld [vmem:[%s261 + $0x60] sm:$0xf]
      %v298 = vld [vmem:[%s261 + $0x64] sm:$0xf]
      %v299 = vld [vmem:[%s261 + $0x68] sm:$0xf]
      %v300 = vld [vmem:[%s261 + $0x6c] sm:$0xf]
      %v301 = vld [vmem:[%s261 + $0x70] sm:$0xf]
      %v302 = vld [vmem:[%s261 + $0x74] sm:$0xf]
      %v303 = vld [vmem:[%s261 + $0x78] sm:$0xf]
      %v304 = vld [vmem:[%s261 + $0x7c] sm:$0xf]
      %v305 = vld [vmem:[%s261 + $0x80] sm:$0xf]
      %v306 = vld [vmem:[%s261 + $0x84] sm:$0xf]
      %v307 = vld [vmem:[%s261 + $0x88] sm:$0xf]
      %v308 = vld [vmem:[%s261 + $0x8c] sm:$0xf]
      %v309 = vld [vmem:[%s261 + $0x90] sm:$0xf]
      %v310 = vld [vmem:[%s261 + $0x94] sm:$0xf]
      %v311 = vld [vmem:[%s261 + $0x98] sm:$0xf]
      %v312 = vld [vmem:[%s261 + $0x9c] sm:$0xf]
      %v313 = vld [vmem:[%s261 + $0xa0] sm:$0xf]
      %v314 = vld [vmem:[%s261 + $0xa4] sm:$0xf]
      %v315 = vld [vmem:[%s261 + $0xa8] sm:$0xf]
      %v316 = vld [vmem:[%s261 + $0xac] sm:$0xf]
      %v317 = vld [vmem:[%s261 + $0xb0] sm:$0xf]
      %v318 = vld [vmem:[%s261 + $0xb4] sm:$0xf]
      %v319 = vld [vmem:[%s261 + $0xb8] sm:$0xf]
      %v320 = vld [vmem:[%s261 + $0xbc] sm:$0xf]
      %v321 = vld [vmem:[%s261 + $0xc0] sm:$0xf]
      %v322 = vld [vmem:[%s261 + $0xc4] sm:$0xf]
      %v323 = vld [vmem:[%s261 + $0xc8] sm:$0xf]
      %v324 = vld [vmem:[%s261 + $0xcc] sm:$0xf]
      %v325 = vld [vmem:[%s261 + $0xd0] sm:$0xf]
      %v326 = vld [vmem:[%s261 + $0xd4] sm:$0xf]
      %v327 = vld [vmem:[%s261 + $0xd8] sm:$0xf]
      %v328 = vld [vmem:[%s261 + $0xdc] sm:$0xf]
      %v329 = vld [vmem:[%s261 + $0xe0] sm:$0xf]
      %v330 = vld [vmem:[%s261 + $0xe4] sm:$0xf]
      %v331 = vld [vmem:[%s261 + $0xe8] sm:$0xf]
      %v332 = vld [vmem:[%s261 + $0xec] sm:$0xf]
      %v333 = vld [vmem:[%s261 + $0xf0] sm:$0xf]
      %v334 = vld [vmem:[%s261 + $0xf4] sm:$0xf]
      %v335 = vld [vmem:[%s261 + $0xf8] sm:$0xf]
      %v336 = vld [vmem:[%s261 + $0xfc] sm:$0xf]
      %v337 = vld [vmem:[%s267] sm:$0xff]
      %v338 = vld [vmem:[%s267 + $0x8] sm:$0xff]
      %v339 = vld [vmem:[%s267 + $0x10] sm:$0xff]
      %v340 = vld [vmem:[%s267 + $0x18] sm:$0xff]
      %v341 = vld [vmem:[%s267 + $0x20] sm:$0xff]
      %v342 = vld [vmem:[%s267 + $0x28] sm:$0xff]
      %v343 = vld [vmem:[%s267 + $0x30] sm:$0xff]
      %v344 = vld [vmem:[%s267 + $0x38] sm:$0xff]
      %v345 = vld [vmem:[%s267 + $0x40] sm:$0xff]
      %v346 = vld [vmem:[%s267 + $0x48] sm:$0xff]
      %v347 = vld [vmem:[%s267 + $0x50] sm:$0xff]
      %v348 = vld [vmem:[%s267 + $0x58] sm:$0xff]
      %v349 = vld [vmem:[%s267 + $0x60] sm:$0xff]
      %v350 = vld [vmem:[%s267 + $0x68] sm:$0xff]
      %v351 = vld [vmem:[%s267 + $0x70] sm:$0xff]
      %v352 = vld [vmem:[%s267 + $0x78] sm:$0xff]
      %v353 = vld [vmem:[%s267 + $0x80] sm:$0xff]
      %v354 = vld [vmem:[%s267 + $0x88] sm:$0xff]
      %v355 = vld [vmem:[%s267 + $0x90] sm:$0xff]
      %v356 = vld [vmem:[%s267 + $0x98] sm:$0xff]
      %v357 = vld [vmem:[%s267 + $0xa0] sm:$0xff]
      %v358 = vld [vmem:[%s267 + $0xa8] sm:$0xff]
      %v359 = vld [vmem:[%s267 + $0xb0] sm:$0xff]
      %v360 = vld [vmem:[%s267 + $0xb8] sm:$0xff]
      %v361 = vld [vmem:[%s267 + $0xc0] sm:$0xff]
      %v362 = vld [vmem:[%s267 + $0xc8] sm:$0xff]
      %v363 = vld [vmem:[%s267 + $0xd0] sm:$0xff]
      %v364 = vld [vmem:[%s267 + $0xd8] sm:$0xff]
      %v365 = vld [vmem:[%s267 + $0xe0] sm:$0xff]
      %v366 = vld [vmem:[%s267 + $0xe8] sm:$0xff]
      %v367 = vld [vmem:[%s267 + $0xf0] sm:$0xff]
      %v368 = vld [vmem:[%s267 + $0xf8] sm:$0xff]
      %v369 = vld [vmem:[%s267 + $0x100] sm:$0xff]
      %v370 = vld [vmem:[%s267 + $0x108] sm:$0xff]
      %v371 = vld [vmem:[%s267 + $0x110] sm:$0xff]
      %v372 = vld [vmem:[%s267 + $0x118] sm:$0xff]
      %v373 = vld [vmem:[%s267 + $0x120] sm:$0xff]
      %v374 = vld [vmem:[%s267 + $0x128] sm:$0xff]
      %v375 = vld [vmem:[%s267 + $0x130] sm:$0xff]
      %v376 = vld [vmem:[%s267 + $0x138] sm:$0xff]
      %v377 = vld [vmem:[%s267 + $0x140] sm:$0xff]
      %v378 = vld [vmem:[%s267 + $0x148] sm:$0xff]
      %v379 = vld [vmem:[%s267 + $0x150] sm:$0xff]
      %v380 = vld [vmem:[%s267 + $0x158] sm:$0xff]
      %v381 = vld [vmem:[%s267 + $0x160] sm:$0xff]
      %v382 = vld [vmem:[%s267 + $0x168] sm:$0xff]
      %v383 = vld [vmem:[%s267 + $0x170] sm:$0xff]
      %v384 = vld [vmem:[%s267 + $0x178] sm:$0xff]
      %v385 = vld [vmem:[%s267 + $0x180] sm:$0xff]
      %v386 = vld [vmem:[%s267 + $0x188] sm:$0xff]
      %v387 = vld [vmem:[%s267 + $0x190] sm:$0xff]
      %v388 = vld [vmem:[%s267 + $0x198] sm:$0xff]
      %v389 = vld [vmem:[%s267 + $0x1a0] sm:$0xff]
      %v390 = vld [vmem:[%s267 + $0x1a8] sm:$0xff]
      %v391 = vld [vmem:[%s267 + $0x1b0] sm:$0xff]
      %v392 = vld [vmem:[%s267 + $0x1b8] sm:$0xff]
      %v393 = vld [vmem:[%s267 + $0x1c0] sm:$0xff]
      %v394 = vld [vmem:[%s267 + $0x1c8] sm:$0xff]
      %v395 = vld [vmem:[%s267 + $0x1d0] sm:$0xff]
      %v396 = vld [vmem:[%s267 + $0x1d8] sm:$0xff]
      %v397 = vld [vmem:[%s267 + $0x1e0] sm:$0xff]
      %v398 = vld [vmem:[%s267 + $0x1e8] sm:$0xff]
      %v399 = vld [vmem:[%s267 + $0x1f0] sm:$0xff]
      %v400 = vld [vmem:[%s267 + $0x1f8] sm:$0xff]
      %v401 = vld [vmem:[%s2] sm:$0xf]
      %v402 = vld [vmem:[%s2 + $0x4] sm:$0xf]
      %v403 = vld [vmem:[%s2 + $0x8] sm:$0xf]
      %v404 = vld [vmem:[%s2 + $0xc] sm:$0xf]
      %v405 = vld [vmem:[%s2 + $0x10] sm:$0xf]
      %v406 = vld [vmem:[%s2 + $0x14] sm:$0xf]
      %v407 = vld [vmem:[%s2 + $0x18] sm:$0xf]
      %v408 = vld [vmem:[%s2 + $0x1c] sm:$0xf]
      %v409 = vld [vmem:[%s2 + $0x20] sm:$0xf]
      %v410 = vld [vmem:[%s2 + $0x24] sm:$0xf]
      %v411 = vld [vmem:[%s2 + $0x28] sm:$0xf]
      %v412 = vld [vmem:[%s2 + $0x2c] sm:$0xf]
      %v413 = vld [vmem:[%s2 + $0x30] sm:$0xf]
      %v414 = vld [vmem:[%s2 + $0x34] sm:$0xf]
      %v415 = vld [vmem:[%s2 + $0x38] sm:$0xf]
      %v416 = vld [vmem:[%s2 + $0x3c] sm:$0xf]
      %v417 = vld [vmem:[%s3] sm:$0x1]
      %v419 = vlaneseq
      %v420 = vshrl.u32 %v419, 7
      %v421 = vsub.s32 0, %v420
      %v422 = vrot.slane %v417, %v421
      %v488 = vunpack.c.l.b16 %v273
      %v489 = vunpack.c.l.b16 %v274
      %v490 = vunpack.c.l.b16 %v275
      %v491 = vunpack.c.l.b16 %v276
      %v492 = vunpack.c.l.b16 %v277
      %v493 = vunpack.c.l.b16 %v278
      %v494 = vunpack.c.l.b16 %v279
      %v495 = vunpack.c.l.b16 %v280
      %v496 = vunpack.c.l.b16 %v281
      %v497 = vunpack.c.l.b16 %v282
      %v498 = vunpack.c.l.b16 %v283
      %v499 = vunpack.c.l.b16 %v284
      %v500 = vunpack.c.l.b16 %v285
      %v501 = vunpack.c.l.b16 %v286
      %v502 = vunpack.c.l.b16 %v287
      %v503 = vunpack.c.l.b16 %v288
      %v504 = vunpack.c.l.b16 %v289
      %v505 = vunpack.c.l.b16 %v290
      %v506 = vunpack.c.l.b16 %v291
      %v507 = vunpack.c.l.b16 %v292
      %v508 = vunpack.c.l.b16 %v293
      %v509 = vunpack.c.l.b16 %v294
      %v510 = vunpack.c.l.b16 %v295
      %v511 = vunpack.c.l.b16 %v296
      %v512 = vunpack.c.l.b16 %v297
      %v513 = vunpack.c.l.b16 %v298
      %v514 = vunpack.c.l.b16 %v299
      %v515 = vunpack.c.l.b16 %v300
      %v516 = vunpack.c.l.b16 %v301
      %v517 = vunpack.c.l.b16 %v302
      %v518 = vunpack.c.l.b16 %v303
      %v519 = vunpack.c.l.b16 %v304
      %v520 = vunpack.c.l.b16 %v305
      %v521 = vunpack.c.l.b16 %v306
      %v522 = vunpack.c.l.b16 %v307
      %v523 = vunpack.c.l.b16 %v308
      %v524 = vunpack.c.l.b16 %v309
      %v525 = vunpack.c.l.b16 %v310
      %v526 = vunpack.c.l.b16 %v311
      %v527 = vunpack.c.l.b16 %v312
      %v528 = vunpack.c.l.b16 %v313
      %v529 = vunpack.c.l.b16 %v314
      %v530 = vunpack.c.l.b16 %v315
      %v531 = vunpack.c.l.b16 %v316
      %v532 = vunpack.c.l.b16 %v317
      %v533 = vunpack.c.l.b16 %v318
      %v534 = vunpack.c.l.b16 %v319
      %v535 = vunpack.c.l.b16 %v320
      %v536 = vunpack.c.l.b16 %v321
      %v537 = vunpack.c.l.b16 %v322
      %v538 = vunpack.c.l.b16 %v323
      %v539 = vunpack.c.l.b16 %v324
      %v540 = vunpack.c.l.b16 %v325
      %v541 = vunpack.c.l.b16 %v326
      %v542 = vunpack.c.l.b16 %v327
      %v543 = vunpack.c.l.b16 %v328
      %v544 = vunpack.c.l.b16 %v329
      %v545 = vunpack.c.l.b16 %v330
      %v546 = vunpack.c.l.b16 %v331
      %v547 = vunpack.c.l.b16 %v332
      %v548 = vunpack.c.l.b16 %v333
      %v549 = vunpack.c.l.b16 %v334
      %v550 = vunpack.c.l.b16 %v335
      %v551 = vunpack.c.l.b16 %v336
      %v552 = vpack.c.b16 %v489, %v488
      %v553 = vpack.c.b16 %v491, %v490
      %v554 = vpack.c.b16 %v493, %v492
      %v555 = vpack.c.b16 %v495, %v494
      %v556 = vpack.c.b16 %v497, %v496
      %v557 = vpack.c.b16 %v499, %v498
      %v558 = vpack.c.b16 %v501, %v500
      %v559 = vpack.c.b16 %v503, %v502
      %v560 = vpack.c.b16 %v505, %v504
      %v561 = vpack.c.b16 %v507, %v506
      %v562 = vpack.c.b16 %v509, %v508
      %v563 = vpack.c.b16 %v511, %v510
      %v564 = vpack.c.b16 %v513, %v512
      %v565 = vpack.c.b16 %v515, %v514
      %v566 = vpack.c.b16 %v517, %v516
      %v567 = vpack.c.b16 %v519, %v518
      %v568 = vpack.c.b16 %v521, %v520
      %v569 = vpack.c.b16 %v523, %v522
      %v570 = vpack.c.b16 %v525, %v524
      %v571 = vpack.c.b16 %v527, %v526
      %v572 = vpack.c.b16 %v529, %v528
      %v573 = vpack.c.b16 %v531, %v530
      %v574 = vpack.c.b16 %v533, %v532
      %v575 = vpack.c.b16 %v535, %v534
      %v576 = vpack.c.b16 %v537, %v536
      %v577 = vpack.c.b16 %v539, %v538
      %v578 = vpack.c.b16 %v541, %v540
      %v579 = vpack.c.b16 %v543, %v542
      %v580 = vpack.c.b16 %v545, %v544
      %v581 = vpack.c.b16 %v547, %v546
      %v582 = vpack.c.b16 %v549, %v548
      %v583 = vpack.c.b16 %v551, %v550
      %v632 = vunpack.c.l.b16 %v401
      %v633 = vunpack.c.l.b16 %v402
      %v634 = vunpack.c.l.b16 %v403
      %v635 = vunpack.c.l.b16 %v404
      %v636 = vunpack.c.l.b16 %v405
      %v637 = vunpack.c.l.b16 %v406
      %v638 = vunpack.c.l.b16 %v407
      %v639 = vunpack.c.l.b16 %v408
      %v640 = vunpack.c.l.b16 %v409
      %v641 = vunpack.c.l.b16 %v410
      %v642 = vunpack.c.l.b16 %v411
      %v643 = vunpack.c.l.b16 %v412
      %v644 = vunpack.c.l.b16 %v413
      %v645 = vunpack.c.l.b16 %v414
      %v646 = vunpack.c.l.b16 %v415
      %v647 = vunpack.c.l.b16 %v416
      %v648 = vpack.c.b16 %v633, %v632
      %v649 = vpack.c.b16 %v635, %v634
      %v650 = vpack.c.b16 %v637, %v636
      %v651 = vpack.c.b16 %v639, %v638
      %v652 = vpack.c.b16 %v641, %v640
      %v653 = vpack.c.b16 %v643, %v642
      %v654 = vpack.c.b16 %v645, %v644
      %v655 = vpack.c.b16 %v647, %v646
      %664 = vmatprep.subr.bf16.mxu0 0
      %665 = vmatpush1.bf16.msra.mxu0 %v648
      %666 = vmatprep.subr.bf16.mxu0 0
      %667 = vmatpush1.bf16.msra.mxu0 %v649
      %668 = vmatprep.subr.bf16.mxu0 0
      %669 = vmatpush1.bf16.msra.mxu0 %v650
      %670 = vmatprep.subr.bf16.mxu0 0
      %671 = vmatpush1.bf16.msra.mxu0 %v651
      %672 = vmatprep.subr.bf16.mxu0 0
      %673 = vmatpush1.bf16.msra.mxu0 %v652
      %674 = vmatprep.subr.bf16.mxu0 0
      %675 = vmatpush1.bf16.msra.mxu0 %v653
      %676 = vmatprep.subr.bf16.mxu0 0
      %677 = vmatpush1.bf16.msra.mxu0 %v654
      %678 = vmatprep.subr.bf16.mxu0 0
      %679 = vmatpush1.bf16.msra.mxu0 %v655
      %680 = vmatprep.subr.bf16.mxu0 0
      %681 = vmatpush1.bf16.msra.mxu0 0
      %682 = vmatprep.subr.bf16.mxu0 0
      %683 = vmatpush1.bf16.msra.mxu0 0
      %684 = vmatprep.subr.bf16.mxu0 0
      %685 = vmatpush1.bf16.msra.mxu0 0
      %686 = vmatprep.subr.bf16.mxu0 0
      %687 = vmatpush1.bf16.msra.mxu0 0
      %688 = vmatprep.subr.bf16.mxu0 0
      %689 = vmatpush1.bf16.msra.mxu0 0
      %690 = vmatprep.subr.bf16.mxu0 0
      %691 = vmatpush1.bf16.msra.mxu0 0
      %692 = vmatprep.subr.bf16.mxu0 0
      %693 = vmatpush1.bf16.msra.mxu0 0
      %694 = vmatprep.subr.bf16.mxu0 0
      %695 = vmatpush1.bf16.msra.mxu0 0
      %696 = vmatprep.mubr.bf16.mxu0 0
      %697 = vmatmul.mubr.bf16.gmra.mrb[0].mxu0 %v552
      %v698 = vpop.f32.mrb[0].mxu0
      %v699 = vadd.f32 %v422, %v698
      %v700 = vpop.f32.mrb[0].mxu0
      %v701 = vpop.f32.mrb[0].mxu0
      %v702 = vadd.f32 %v422, %v701
      %v703 = vpop.f32.mrb[0].mxu0
      %704 = vmatprep.mubr.bf16.mxu0 0
      %705 = vmatmul.mubr.bf16.gmra.mrb[0].mxu0 %v553
      %v706 = vpop.f32.mrb[0].mxu0
      %v707 = vadd.f32 %v422, %v706
      %v708 = vpop.f32.mrb[0].mxu0
      %v709 = vpop.f32.mrb[0].mxu0
      %v710 = vadd.f32 %v422, %v709
      %v711 = vpop.f32.mrb[0].mxu0
      %712 = vmatprep.mubr.bf16.mxu0 0
      %713 = vmatmul.mubr.bf16.gmra.mrb[0].mxu0 %v554
      %v714 = vpop.f32.mrb[0].mxu0
      %v715 = vadd.f32 %v422, %v714
      %v716 = vpop.f32.mrb[0].mxu0
      %v717 = vpop.f32.mrb[0].mxu0
      %v718 = vadd.f32 %v422, %v717
      %v719 = vpop.f32.mrb[0].mxu0
      %720 = vmatprep.mubr.bf16.mxu0 0
      %721 = vmatmul.mubr.bf16.gmra.mrb[0].mxu0 %v555
      %v722 = vpop.f32.mrb[0].mxu0
      %v723 = vadd.f32 %v422, %v722
      %v724 = vpop.f32.mrb[0].mxu0
      %v725 = vpop.f32.mrb[0].mxu0
      %v726 = vadd.f32 %v422, %v725
      %v727 = vpop.f32.mrb[0].mxu0
      %728 = vmatprep.mubr.bf16.mxu0 0
      %729 = vmatmul.mubr.bf16.gmra.mrb[0].mxu0 %v556
      %v730 = vpop.f32.mrb[0].mxu0
      %v731 = vadd.f32 %v422, %v730
      %v732 = vpop.f32.mrb[0].mxu0
      %v733 = vpop.f32.mrb[0].mxu0
      %v734 = vadd.f32 %v422, %v733
      %v735 = vpop.f32.mrb[0].mxu0
      %736 = vmatprep.mubr.bf16.mxu0 0
      %737 = vmatmul.mubr.bf16.gmra.mrb[0].mxu0 %v557
      %v738 = vpop.f32.mrb[0].mxu0
      %v739 = vadd.f32 %v422, %v738
      %v740 = vpop.f32.mrb[0].mxu0
      %v741 = vpop.f32.mrb[0].mxu0
      %v742 = vadd.f32 %v422, %v741
      %v743 = vpop.f32.mrb[0].mxu0
      %744 = vmatprep.mubr.bf16.mxu0 0
      %745 = vmatmul.mubr.bf16.gmra.mrb[0].mxu0 %v558
      %v746 = vpop.f32.mrb[0].mxu0
      %v747 = vadd.f32 %v422, %v746
      %v748 = vpop.f32.mrb[0].mxu0
      %v749 = vpop.f32.mrb[0].mxu0
      %v750 = vadd.f32 %v422, %v749
      %v751 = vpop.f32.mrb[0].mxu0
      %752 = vmatprep.mubr.bf16.mxu0 0
      %753 = vmatmul.mubr.bf16.gmra.mrb[0].mxu0 %v559
      %v754 = vpop.f32.mrb[0].mxu0
      %v755 = vadd.f32 %v422, %v754
      %v756 = vpop.f32.mrb[0].mxu0
      %v757 = vpop.f32.mrb[0].mxu0
      %v758 = vadd.f32 %v422, %v757
      %v759 = vpop.f32.mrb[0].mxu0
      %760 = vmatprep.mubr.bf16.mxu0 0
      %761 = vmatmul.mubr.bf16.gmra.mrb[0].mxu0 %v560
      %v762 = vpop.f32.mrb[0].mxu0
      %v763 = vadd.f32 %v422, %v762
      %v764 = vpop.f32.mrb[0].mxu0
      %v765 = vpop.f32.mrb[0].mxu0
      %v766 = vadd.f32 %v422, %v765
      %v767 = vpop.f32.mrb[0].mxu0
      %768 = vmatprep.mubr.bf16.mxu0 0
      %769 = vmatmul.mubr.bf16.gmra.mrb[0].mxu0 %v561
      %v770 = vpop.f32.mrb[0].mxu0
      %v771 = vadd.f32 %v422, %v770
      %v772 = vpop.f32.mrb[0].mxu0
      %v773 = vpop.f32.mrb[0].mxu0
      %v774 = vadd.f32 %v422, %v773
      %v775 = vpop.f32.mrb[0].mxu0
      %776 = vmatprep.mubr.bf16.mxu0 0
      %777 = vmatmul.mubr.bf16.gmra.mrb[0].mxu0 %v562
      %v778 = vpop.f32.mrb[0].mxu0
      %v779 = vadd.f32 %v422, %v778
      %v780 = vpop.f32.mrb[0].mxu0
      %v781 = vpop.f32.mrb[0].mxu0
      %v782 = vadd.f32 %v422, %v781
      %v783 = vpop.f32.mrb[0].mxu0
      %784 = vmatprep.mubr.bf16.mxu0 0
      %785 = vmatmul.mubr.bf16.gmra.mrb[0].mxu0 %v563
      %v786 = vpop.f32.mrb[0].mxu0
      %v787 = vadd.f32 %v422, %v786
      %v788 = vpop.f32.mrb[0].mxu0
      %v789 = vpop.f32.mrb[0].mxu0
      %v790 = vadd.f32 %v422, %v789
      %v791 = vpop.f32.mrb[0].mxu0
      %792 = vmatprep.mubr.bf16.mxu0 0
      %793 = vmatmul.mubr.bf16.gmra.mrb[0].mxu0 %v564
      %v794 = vpop.f32.mrb[0].mxu0
      %v795 = vadd.f32 %v422, %v794
      %v796 = vpop.f32.mrb[0].mxu0
      %v797 = vpop.f32.mrb[0].mxu0
      %v798 = vadd.f32 %v422, %v797
      %v799 = vpop.f32.mrb[0].mxu0
      %800 = vmatprep.mubr.bf16.mxu0 0
      %801 = vmatmul.mubr.bf16.gmra.mrb[0].mxu0 %v565
      %v802 = vpop.f32.mrb[0].mxu0
      %v803 = vadd.f32 %v422, %v802
      %v804 = vpop.f32.mrb[0].mxu0
      %v805 = vpop.f32.mrb[0].mxu0
      %v806 = vadd.f32 %v422, %v805
      %v807 = vpop.f32.mrb[0].mxu0
      %808 = vmatprep.mubr.bf16.mxu0 0
      %809 = vmatmul.mubr.bf16.gmra.mrb[0].mxu0 %v566
      %v810 = vpop.f32.mrb[0].mxu0
      %v811 = vadd.f32 %v422, %v810
      %v812 = vpop.f32.mrb[0].mxu0
      %v813 = vpop.f32.mrb[0].mxu0
      %v814 = vadd.f32 %v422, %v813
      %v815 = vpop.f32.mrb[0].mxu0
      %816 = vmatprep.mubr.bf16.mxu0 0
      %817 = vmatmul.mubr.bf16.gmra.mrb[0].mxu0 %v567
      %v818 = vpop.f32.mrb[0].mxu0
      %v819 = vadd.f32 %v422, %v818
      %v820 = vpop.f32.mrb[0].mxu0
      %v821 = vpop.f32.mrb[0].mxu0
      %v822 = vadd.f32 %v422, %v821
      %v823 = vpop.f32.mrb[0].mxu0
      %824 = vmatprep.mubr.bf16.mxu0 0
      %825 = vmatmul.mubr.bf16.gmra.mrb[0].mxu0 %v568
      %v826 = vpop.f32.mrb[0].mxu0
      %v827 = vadd.f32 %v422, %v826
      %v828 = vpop.f32.mrb[0].mxu0
      %v829 = vpop.f32.mrb[0].mxu0
      %v830 = vadd.f32 %v422, %v829
      %v831 = vpop.f32.mrb[0].mxu0
      %832 = vmatprep.mubr.bf16.mxu0 0
      %833 = vmatmul.mubr.bf16.gmra.mrb[0].mxu0 %v569
      %v834 = vpop.f32.mrb[0].mxu0
      %v835 = vadd.f32 %v422, %v834
      %v836 = vpop.f32.mrb[0].mxu0
      %v837 = vpop.f32.mrb[0].mxu0
      %v838 = vadd.f32 %v422, %v837
      %v839 = vpop.f32.mrb[0].mxu0
      %840 = vmatprep.mubr.bf16.mxu0 0
      %841 = vmatmul.mubr.bf16.gmra.mrb[0].mxu0 %v570
      %v842 = vpop.f32.mrb[0].mxu0
      %v843 = vadd.f32 %v422, %v842
      %v844 = vpop.f32.mrb[0].mxu0
      %v845 = vpop.f32.mrb[0].mxu0
      %v846 = vadd.f32 %v422, %v845
      %v847 = vpop.f32.mrb[0].mxu0
      %848 = vmatprep.mubr.bf16.mxu0 0
      %849 = vmatmul.mubr.bf16.gmra.mrb[0].mxu0 %v571
      %v850 = vpop.f32.mrb[0].mxu0
      %v851 = vadd.f32 %v422, %v850
      %v852 = vpop.f32.mrb[0].mxu0
      %v853 = vpop.f32.mrb[0].mxu0
      %v854 = vadd.f32 %v422, %v853
      %v855 = vpop.f32.mrb[0].mxu0
      %856 = vmatprep.mubr.bf16.mxu0 0
      %857 = vmatmul.mubr.bf16.gmra.mrb[0].mxu0 %v572
      %v858 = vpop.f32.mrb[0].mxu0
      %v859 = vadd.f32 %v422, %v858
      %v860 = vpop.f32.mrb[0].mxu0
      %v861 = vpop.f32.mrb[0].mxu0
      %v862 = vadd.f32 %v422, %v861
      %v863 = vpop.f32.mrb[0].mxu0
      %864 = vmatprep.mubr.bf16.mxu0 0
      %865 = vmatmul.mubr.bf16.gmra.mrb[0].mxu0 %v573
      %v866 = vpop.f32.mrb[0].mxu0
      %v867 = vadd.f32 %v422, %v866
      %v868 = vpop.f32.mrb[0].mxu0
      %v869 = vpop.f32.mrb[0].mxu0
      %v870 = vadd.f32 %v422, %v869
      %v871 = vpop.f32.mrb[0].mxu0
      %872 = vmatprep.mubr.bf16.mxu0 0
      %873 = vmatmul.mubr.bf16.gmra.mrb[0].mxu0 %v574
      %v874 = vpop.f32.mrb[0].mxu0
      %v875 = vadd.f32 %v422, %v874
      %v876 = vpop.f32.mrb[0].mxu0
      %v877 = vpop.f32.mrb[0].mxu0
      %v878 = vadd.f32 %v422, %v877
      %v879 = vpop.f32.mrb[0].mxu0
      %880 = vmatprep.mubr.bf16.mxu0 0
      %881 = vmatmul.mubr.bf16.gmra.mrb[0].mxu0 %v575
      %v882 = vpop.f32.mrb[0].mxu0
      %v883 = vadd.f32 %v422, %v882
      %v884 = vpop.f32.mrb[0].mxu0
      %v885 = vpop.f32.mrb[0].mxu0
      %v886 = vadd.f32 %v422, %v885
      %v887 = vpop.f32.mrb[0].mxu0
      %888 = vmatprep.mubr.bf16.mxu0 0
      %889 = vmatmul.mubr.bf16.gmra.mrb[0].mxu0 %v576
      %v890 = vpop.f32.mrb[0].mxu0
      %v891 = vadd.f32 %v422, %v890
      %v892 = vpop.f32.mrb[0].mxu0
      %v893 = vpop.f32.mrb[0].mxu0
      %v894 = vadd.f32 %v422, %v893
      %v895 = vpop.f32.mrb[0].mxu0
      %896 = vmatprep.mubr.bf16.mxu0 0
      %897 = vmatmul.mubr.bf16.gmra.mrb[0].mxu0 %v577
      %v898 = vpop.f32.mrb[0].mxu0
      %v899 = vadd.f32 %v422, %v898
      %v900 = vpop.f32.mrb[0].mxu0
      %v901 = vpop.f32.mrb[0].mxu0
      %v902 = vadd.f32 %v422, %v901
      %v903 = vpop.f32.mrb[0].mxu0
      %904 = vmatprep.mubr.bf16.mxu0 0
      %905 = vmatmul.mubr.bf16.gmra.mrb[0].mxu0 %v578
      %v906 = vpop.f32.mrb[0].mxu0
      %v907 = vadd.f32 %v422, %v906
      %v908 = vpop.f32.mrb[0].mxu0
      %v909 = vpop.f32.mrb[0].mxu0
      %v910 = vadd.f32 %v422, %v909
      %v911 = vpop.f32.mrb[0].mxu0
      %912 = vmatprep.mubr.bf16.mxu0 0
      %913 = vmatmul.mubr.bf16.gmra.mrb[0].mxu0 %v579
      %v914 = vpop.f32.mrb[0].mxu0
      %v915 = vadd.f32 %v422, %v914
      %v916 = vpop.f32.mrb[0].mxu0
      %v917 = vpop.f32.mrb[0].mxu0
      %v918 = vadd.f32 %v422, %v917
      %v919 = vpop.f32.mrb[0].mxu0
      %920 = vmatprep.mubr.bf16.mxu0 0
      %921 = vmatmul.mubr.bf16.gmra.mrb[0].mxu0 %v580
      %v922 = vpop.f32.mrb[0].mxu0
      %v923 = vadd.f32 %v422, %v922
      %v924 = vpop.f32.mrb[0].mxu0
      %v925 = vpop.f32.mrb[0].mxu0
      %v926 = vadd.f32 %v422, %v925
      %v927 = vpop.f32.mrb[0].mxu0
      %928 = vmatprep.mubr.bf16.mxu0 0
      %929 = vmatmul.mubr.bf16.gmra.mrb[0].mxu0 %v581
      %v930 = vpop.f32.mrb[0].mxu0
      %v931 = vadd.f32 %v422, %v930
      %v932 = vpop.f32.mrb[0].mxu0
      %v933 = vpop.f32.mrb[0].mxu0
      %v934 = vadd.f32 %v422, %v933
      %v935 = vpop.f32.mrb[0].mxu0
      %936 = vmatprep.mubr.bf16.mxu0 0
      %937 = vmatmul.mubr.bf16.gmra.mrb[0].mxu0 %v582
      %v938 = vpop.f32.mrb[0].mxu0
      %v939 = vadd.f32 %v422, %v938
      %v940 = vpop.f32.mrb[0].mxu0
      %v941 = vpop.f32.mrb[0].mxu0
      %v942 = vadd.f32 %v422, %v941
      %v943 = vpop.f32.mrb[0].mxu0
      %944 = vmatprep.mubr.bf16.mxu0 0
      %945 = vmatmul.mubr.bf16.gmra.mrb[0].mxu0 %v583
      %v946 = vpop.f32.mrb[0].mxu0
      %v947 = vadd.f32 %v422, %v946
      %v948 = vpop.f32.mrb[0].mxu0
      %v949 = vpop.f32.mrb[0].mxu0
      %v950 = vadd.f32 %v422, %v949
      %v951 = vpop.f32.mrb[0].mxu0
      %952 = vdwg.mxu0
      %v953 = vmul.f32 %v699, 1.442695
      %v954 = vpow.pop %v953
      %v955 = vmul.f32 %v702, 1.442695
      %v956 = vpow.pop %v955
      %v957 = vmul.f32 %v707, 1.442695
      %v958 = vpow.pop %v957
      %v959 = vmul.f32 %v710, 1.442695
      %v960 = vpow.pop %v959
      %v961 = vmul.f32 %v715, 1.442695
      %v962 = vpow.pop %v961
      %v963 = vmul.f32 %v718, 1.442695
      %v964 = vpow.pop %v963
      %v965 = vmul.f32 %v723, 1.442695
      %v966 = vpow.pop %v965
      %v967 = vmul.f32 %v726, 1.442695
      %v968 = vpow.pop %v967
      %v969 = vmul.f32 %v731, 1.442695
      %v970 = vpow.pop %v969
      %v971 = vmul.f32 %v734, 1.442695
      %v972 = vpow.pop %v971
      %v973 = vmul.f32 %v739, 1.442695
      %v974 = vpow.pop %v973
      %v975 = vmul.f32 %v742, 1.442695
      %v976 = vpow.pop %v975
      %v977 = vmul.f32 %v747, 1.442695
      %v978 = vpow.pop %v977
      %v979 = vmul.f32 %v750, 1.442695
      %v980 = vpow.pop %v979
      %v981 = vmul.f32 %v755, 1.442695
      %v982 = vpow.pop %v981
      %v983 = vmul.f32 %v758, 1.442695
      %v984 = vpow.pop %v983
      %v985 = vmul.f32 %v763, 1.442695
      %v986 = vpow.pop %v985
      %v987 = vmul.f32 %v766, 1.442695
      %v988 = vpow.pop %v987
      %v989 = vmul.f32 %v771, 1.442695
      %v990 = vpow.pop %v989
      %v991 = vmul.f32 %v774, 1.442695
      %v992 = vpow.pop %v991
      %v993 = vmul.f32 %v779, 1.442695
      %v994 = vpow.pop %v993
      %v995 = vmul.f32 %v782, 1.442695
      %v996 = vpow.pop %v995
      %v997 = vmul.f32 %v787, 1.442695
      %v998 = vpow.pop %v997
      %v999 = vmul.f32 %v790, 1.442695
      %v1000 = vpow.pop %v999
      %v1001 = vmul.f32 %v795, 1.442695
      %v1002 = vpow.pop %v1001
      %v1003 = vmul.f32 %v798, 1.442695
      %v1004 = vpow.pop %v1003
      %v1005 = vmul.f32 %v803, 1.442695
      %v1006 = vpow.pop %v1005
      %v1007 = vmul.f32 %v806, 1.442695
      %v1008 = vpow.pop %v1007
      %v1009 = vmul.f32 %v811, 1.442695
      %v1010 = vpow.pop %v1009
      %v1011 = vmul.f32 %v814, 1.442695
      %v1012 = vpow.pop %v1011
      %v1013 = vmul.f32 %v819, 1.442695
      %v1014 = vpow.pop %v1013
      %v1015 = vmul.f32 %v822, 1.442695
      %v1016 = vpow.pop %v1015
      %v1017 = vmul.f32 %v827, 1.442695
      %v1018 = vpow.pop %v1017
      %v1019 = vmul.f32 %v830, 1.442695
      %v1020 = vpow.pop %v1019
      %v1021 = vmul.f32 %v835, 1.442695
      %v1022 = vpow.pop %v1021
      %v1023 = vmul.f32 %v838, 1.442695
      %v1024 = vpow.pop %v1023
      %v1025 = vmul.f32 %v843, 1.442695
      %v1026 = vpow.pop %v1025
      %v1027 = vmul.f32 %v846, 1.442695
      %v1028 = vpow.pop %v1027
      %v1029 = vmul.f32 %v851, 1.442695
      %v1030 = vpow.pop %v1029
      %v1031 = vmul.f32 %v854, 1.442695
      %v1032 = vpow.pop %v1031
      %v1033 = vmul.f32 %v859, 1.442695
      %v1034 = vpow.pop %v1033
      %v1035 = vmul.f32 %v862, 1.442695
      %v1036 = vpow.pop %v1035
      %v1037 = vmul.f32 %v867, 1.442695
      %v1038 = vpow.pop %v1037
      %v1039 = vmul.f32 %v870, 1.442695
      %v1040 = vpow.pop %v1039
      %v1041 = vmul.f32 %v875, 1.442695
      %v1042 = vpow.pop %v1041
      %v1043 = vmul.f32 %v878, 1.442695
      %v1044 = vpow.pop %v1043
      %v1045 = vmul.f32 %v883, 1.442695
      %v1046 = vpow.pop %v1045
      %v1047 = vmul.f32 %v886, 1.442695
      %v1048 = vpow.pop %v1047
      %v1049 = vmul.f32 %v891, 1.442695
      %v1050 = vpow.pop %v1049
      %v1051 = vmul.f32 %v894, 1.442695
      %v1052 = vpow.pop %v1051
      %v1053 = vmul.f32 %v899, 1.442695
      %v1054 = vpow.pop %v1053
      %v1055 = vmul.f32 %v902, 1.442695
      %v1056 = vpow.pop %v1055
      %v1057 = vmul.f32 %v907, 1.442695
      %v1058 = vpow.pop %v1057
      %v1059 = vmul.f32 %v910, 1.442695
      %v1060 = vpow.pop %v1059
      %v1061 = vmul.f32 %v915, 1.442695
      %v1062 = vpow.pop %v1061
      %v1063 = vmul.f32 %v918, 1.442695
      %v1064 = vpow.pop %v1063
      %v1065 = vmul.f32 %v923, 1.442695
      %v1066 = vpow.pop %v1065
      %v1067 = vmul.f32 %v926, 1.442695
      %v1068 = vpow.pop %v1067
      %v1069 = vmul.f32 %v931, 1.442695
      %v1070 = vpow.pop %v1069
      %v1071 = vmul.f32 %v934, 1.442695
      %v1072 = vpow.pop %v1071
      %v1073 = vmul.f32 %v939, 1.442695
      %v1074 = vpow.pop %v1073
      %v1075 = vmul.f32 %v942, 1.442695
      %v1076 = vpow.pop %v1075
      %v1077 = vmul.f32 %v947, 1.442695
      %v1078 = vpow.pop %v1077
      %v1079 = vmul.f32 %v950, 1.442695
      %v1080 = vpow.pop %v1079
      %1145 = vrot.lane.b32.xlu0 %v337, 32
      %v1146 = vpop.permute.xlu0 %1145
      %1147 = vrot.lane.b32.xlu0 %v338, 32
      %v1148 = vpop.permute.xlu0 %1147
      %1149 = vrot.lane.b32.xlu0 %v339, 32
      %v1150 = vpop.permute.xlu0 %1149
      %1151 = vrot.lane.b32.xlu0 %v340, 32
      %v1152 = vpop.permute.xlu0 %1151
      %1153 = vrot.lane.b32.xlu0 %v341, 32
      %v1154 = vpop.permute.xlu0 %1153
      %1155 = vrot.lane.b32.xlu0 %v342, 32
      %v1156 = vpop.permute.xlu0 %1155
      %1157 = vrot.lane.b32.xlu0 %v343, 32
      %v1158 = vpop.permute.xlu0 %1157
      %1159 = vrot.lane.b32.xlu0 %v344, 32
      %v1160 = vpop.permute.xlu0 %1159
      %1161 = vrot.lane.b32.xlu0 %v345, 32
      %v1162 = vpop.permute.xlu0 %1161
      %1163 = vrot.lane.b32.xlu0 %v346, 32
      %v1164 = vpop.permute.xlu0 %1163
      %1165 = vrot.lane.b32.xlu0 %v347, 32
      %v1166 = vpop.permute.xlu0 %1165
      %1167 = vrot.lane.b32.xlu0 %v348, 32
      %v1168 = vpop.permute.xlu0 %1167
      %1169 = vrot.lane.b32.xlu0 %v349, 32
      %v1170 = vpop.permute.xlu0 %1169
      %1171 = vrot.lane.b32.xlu0 %v350, 32
      %v1172 = vpop.permute.xlu0 %1171
      %1173 = vrot.lane.b32.xlu0 %v351, 32
      %v1174 = vpop.permute.xlu0 %1173
      %1175 = vrot.lane.b32.xlu0 %v352, 32
      %v1176 = vpop.permute.xlu0 %1175
      %1177 = vrot.lane.b32.xlu0 %v353, 32
      %v1178 = vpop.permute.xlu0 %1177
      %1179 = vrot.lane.b32.xlu0 %v354, 32
      %v1180 = vpop.permute.xlu0 %1179
      %1181 = vrot.lane.b32.xlu0 %v355, 32
      %v1182 = vpop.permute.xlu0 %1181
      %1183 = vrot.lane.b32.xlu0 %v356, 32
      %v1184 = vpop.permute.xlu0 %1183
      %1185 = vrot.lane.b32.xlu0 %v357, 32
      %v1186 = vpop.permute.xlu0 %1185
      %1187 = vrot.lane.b32.xlu0 %v358, 32
      %v1188 = vpop.permute.xlu0 %1187
      %1189 = vrot.lane.b32.xlu0 %v359, 32
      %v1190 = vpop.permute.xlu0 %1189
      %1191 = vrot.lane.b32.xlu0 %v360, 32
      %v1192 = vpop.permute.xlu0 %1191
      %1193 = vrot.lane.b32.xlu0 %v361, 32
      %v1194 = vpop.permute.xlu0 %1193
      %1195 = vrot.lane.b32.xlu0 %v362, 32
      %v1196 = vpop.permute.xlu0 %1195
      %1197 = vrot.lane.b32.xlu0 %v363, 32
      %v1198 = vpop.permute.xlu0 %1197
      %1199 = vrot.lane.b32.xlu0 %v364, 32
      %v1200 = vpop.permute.xlu0 %1199
      %1201 = vrot.lane.b32.xlu0 %v365, 32
      %v1202 = vpop.permute.xlu0 %1201
      %1203 = vrot.lane.b32.xlu0 %v366, 32
      %v1204 = vpop.permute.xlu0 %1203
      %1205 = vrot.lane.b32.xlu0 %v367, 32
      %v1206 = vpop.permute.xlu0 %1205
      %1207 = vrot.lane.b32.xlu0 %v368, 32
      %v1208 = vpop.permute.xlu0 %1207
      %1209 = vrot.lane.b32.xlu0 %v369, 32
      %v1210 = vpop.permute.xlu0 %1209
      %1211 = vrot.lane.b32.xlu0 %v370, 32
      %v1212 = vpop.permute.xlu0 %1211
      %1213 = vrot.lane.b32.xlu0 %v371, 32
      %v1214 = vpop.permute.xlu0 %1213
      %1215 = vrot.lane.b32.xlu0 %v372, 32
      %v1216 = vpop.permute.xlu0 %1215
      %1217 = vrot.lane.b32.xlu0 %v373, 32
      %v1218 = vpop.permute.xlu0 %1217
      %1219 = vrot.lane.b32.xlu0 %v374, 32
      %v1220 = vpop.permute.xlu0 %1219
      %1221 = vrot.lane.b32.xlu0 %v375, 32
      %v1222 = vpop.permute.xlu0 %1221
      %1223 = vrot.lane.b32.xlu0 %v376, 32
      %v1224 = vpop.permute.xlu0 %1223
      %1225 = vrot.lane.b32.xlu0 %v377, 32
      %v1226 = vpop.permute.xlu0 %1225
      %1227 = vrot.lane.b32.xlu0 %v378, 32
      %v1228 = vpop.permute.xlu0 %1227
      %1229 = vrot.lane.b32.xlu0 %v379, 32
      %v1230 = vpop.permute.xlu0 %1229
      %1231 = vrot.lane.b32.xlu0 %v380, 32
      %v1232 = vpop.permute.xlu0 %1231
      %1233 = vrot.lane.b32.xlu0 %v381, 32
      %v1234 = vpop.permute.xlu0 %1233
      %1235 = vrot.lane.b32.xlu0 %v382, 32
      %v1236 = vpop.permute.xlu0 %1235
      %1237 = vrot.lane.b32.xlu0 %v383, 32
      %v1238 = vpop.permute.xlu0 %1237
      %1239 = vrot.lane.b32.xlu0 %v384, 32
      %v1240 = vpop.permute.xlu0 %1239
      %1241 = vrot.lane.b32.xlu0 %v385, 32
      %v1242 = vpop.permute.xlu0 %1241
      %1243 = vrot.lane.b32.xlu0 %v386, 32
      %v1244 = vpop.permute.xlu0 %1243
      %1245 = vrot.lane.b32.xlu0 %v387, 32
      %v1246 = vpop.permute.xlu0 %1245
      %1247 = vrot.lane.b32.xlu0 %v388, 32
      %v1248 = vpop.permute.xlu0 %1247
      %1249 = vrot.lane.b32.xlu0 %v389, 32
      %v1250 = vpop.permute.xlu0 %1249
      %1251 = vrot.lane.b32.xlu0 %v390, 32
      %v1252 = vpop.permute.xlu0 %1251
      %1253 = vrot.lane.b32.xlu0 %v391, 32
      %v1254 = vpop.permute.xlu0 %1253
      %1255 = vrot.lane.b32.xlu0 %v392, 32
      %v1256 = vpop.permute.xlu0 %1255
      %1257 = vrot.lane.b32.xlu0 %v393, 32
      %v1258 = vpop.permute.xlu0 %1257
      %1259 = vrot.lane.b32.xlu0 %v394, 32
      %v1260 = vpop.permute.xlu0 %1259
      %1261 = vrot.lane.b32.xlu0 %v395, 32
      %v1262 = vpop.permute.xlu0 %1261
      %1263 = vrot.lane.b32.xlu0 %v396, 32
      %v1264 = vpop.permute.xlu0 %1263
      %1265 = vrot.lane.b32.xlu0 %v397, 32
      %v1266 = vpop.permute.xlu0 %1265
      %1267 = vrot.lane.b32.xlu0 %v398, 32
      %v1268 = vpop.permute.xlu0 %1267
      %1269 = vrot.lane.b32.xlu0 %v399, 32
      %v1270 = vpop.permute.xlu0 %1269
      %1271 = vrot.lane.b32.xlu0 %v400, 32
      %v1272 = vpop.permute.xlu0 %1271
      %v1337 = vmul.f32 %v954, %v1146
      %v1338 = vmul.f32 %v956, %v1148
      %v1339 = vmul.f32 %v958, %v1150
      %v1340 = vmul.f32 %v960, %v1152
      %v1341 = vmul.f32 %v962, %v1154
      %v1342 = vmul.f32 %v964, %v1156
      %v1343 = vmul.f32 %v966, %v1158
      %v1344 = vmul.f32 %v968, %v1160
      %v1345 = vmul.f32 %v970, %v1162
      %v1346 = vmul.f32 %v972, %v1164
      %v1347 = vmul.f32 %v974, %v1166
      %v1348 = vmul.f32 %v976, %v1168
      %v1349 = vmul.f32 %v978, %v1170
      %v1350 = vmul.f32 %v980, %v1172
      %v1351 = vmul.f32 %v982, %v1174
      %v1352 = vmul.f32 %v984, %v1176
      %v1353 = vmul.f32 %v986, %v1178
      %v1354 = vmul.f32 %v988, %v1180
      %v1355 = vmul.f32 %v990, %v1182
      %v1356 = vmul.f32 %v992, %v1184
      %v1357 = vmul.f32 %v994, %v1186
      %v1358 = vmul.f32 %v996, %v1188
      %v1359 = vmul.f32 %v998, %v1190
      %v1360 = vmul.f32 %v1000, %v1192
      %v1361 = vmul.f32 %v1002, %v1194
      %v1362 = vmul.f32 %v1004, %v1196
      %v1363 = vmul.f32 %v1006, %v1198
      %v1364 = vmul.f32 %v1008, %v1200
      %v1365 = vmul.f32 %v1010, %v1202
      %v1366 = vmul.f32 %v1012, %v1204
      %v1367 = vmul.f32 %v1014, %v1206
      %v1368 = vmul.f32 %v1016, %v1208
      %v1369 = vmul.f32 %v1018, %v1210
      %v1370 = vmul.f32 %v1020, %v1212
      %v1371 = vmul.f32 %v1022, %v1214
      %v1372 = vmul.f32 %v1024, %v1216
      %v1373 = vmul.f32 %v1026, %v1218
      %v1374 = vmul.f32 %v1028, %v1220
      %v1375 = vmul.f32 %v1030, %v1222
      %v1376 = vmul.f32 %v1032, %v1224
      %v1377 = vmul.f32 %v1034, %v1226
      %v1378 = vmul.f32 %v1036, %v1228
      %v1379 = vmul.f32 %v1038, %v1230
      %v1380 = vmul.f32 %v1040, %v1232
      %v1381 = vmul.f32 %v1042, %v1234
      %v1382 = vmul.f32 %v1044, %v1236
      %v1383 = vmul.f32 %v1046, %v1238
      %v1384 = vmul.f32 %v1048, %v1240
      %v1385 = vmul.f32 %v1050, %v1242
      %v1386 = vmul.f32 %v1052, %v1244
      %v1387 = vmul.f32 %v1054, %v1246
      %v1388 = vmul.f32 %v1056, %v1248
      %v1389 = vmul.f32 %v1058, %v1250
      %v1390 = vmul.f32 %v1060, %v1252
      %v1391 = vmul.f32 %v1062, %v1254
      %v1392 = vmul.f32 %v1064, %v1256
      %v1393 = vmul.f32 %v1066, %v1258
      %v1394 = vmul.f32 %v1068, %v1260
      %v1395 = vmul.f32 %v1070, %v1262
      %v1396 = vmul.f32 %v1072, %v1264
      %v1397 = vmul.f32 %v1074, %v1266
      %v1398 = vmul.f32 %v1076, %v1268
      %v1399 = vmul.f32 %v1078, %v1270
      %v1400 = vmul.f32 %v1080, %v1272
      %1465 = vrot.lane.b32.xlu0 %v1337, 96
      %v1466 = vpop.permute.xlu0 %1465
      %1467 = vrot.lane.b32.xlu0 %v1338, 96
      %v1468 = vpop.permute.xlu0 %1467
      %1469 = vrot.lane.b32.xlu0 %v1339, 96
      %v1470 = vpop.permute.xlu0 %1469
      %1471 = vrot.lane.b32.xlu0 %v1340, 96
      %v1472 = vpop.permute.xlu0 %1471
      %1473 = vrot.lane.b32.xlu0 %v1341, 96
      %v1474 = vpop.permute.xlu0 %1473
      %1475 = vrot.lane.b32.xlu0 %v1342, 96
      %v1476 = vpop.permute.xlu0 %1475
      %1477 = vrot.lane.b32.xlu0 %v1343, 96
      %v1478 = vpop.permute.xlu0 %1477
      %1479 = vrot.lane.b32.xlu0 %v1344, 96
      %v1480 = vpop.permute.xlu0 %1479
      %1481 = vrot.lane.b32.xlu0 %v1345, 96
      %v1482 = vpop.permute.xlu0 %1481
      %1483 = vrot.lane.b32.xlu0 %v1346, 96
      %v1484 = vpop.permute.xlu0 %1483
      %1485 = vrot.lane.b32.xlu0 %v1347, 96
      %v1486 = vpop.permute.xlu0 %1485
      %1487 = vrot.lane.b32.xlu0 %v1348, 96
      %v1488 = vpop.permute.xlu0 %1487
      %1489 = vrot.lane.b32.xlu0 %v1349, 96
      %v1490 = vpop.permute.xlu0 %1489
      %1491 = vrot.lane.b32.xlu0 %v1350, 96
      %v1492 = vpop.permute.xlu0 %1491
      %1493 = vrot.lane.b32.xlu0 %v1351, 96
      %v1494 = vpop.permute.xlu0 %1493
      %1495 = vrot.lane.b32.xlu0 %v1352, 96
      %v1496 = vpop.permute.xlu0 %1495
      %1497 = vrot.lane.b32.xlu0 %v1353, 96
      %v1498 = vpop.permute.xlu0 %1497
      %1499 = vrot.lane.b32.xlu0 %v1354, 96
      %v1500 = vpop.permute.xlu0 %1499
      %1501 = vrot.lane.b32.xlu0 %v1355, 96
      %v1502 = vpop.permute.xlu0 %1501
      %1503 = vrot.lane.b32.xlu0 %v1356, 96
      %v1504 = vpop.permute.xlu0 %1503
      %1505 = vrot.lane.b32.xlu0 %v1357, 96
      %v1506 = vpop.permute.xlu0 %1505
      %1507 = vrot.lane.b32.xlu0 %v1358, 96
      %v1508 = vpop.permute.xlu0 %1507
      %1509 = vrot.lane.b32.xlu0 %v1359, 96
      %v1510 = vpop.permute.xlu0 %1509
      %1511 = vrot.lane.b32.xlu0 %v1360, 96
      %v1512 = vpop.permute.xlu0 %1511
      %1513 = vrot.lane.b32.xlu0 %v1361, 96
      %v1514 = vpop.permute.xlu0 %1513
      %1515 = vrot.lane.b32.xlu0 %v1362, 96
      %v1516 = vpop.permute.xlu0 %1515
      %1517 = vrot.lane.b32.xlu0 %v1363, 96
      %v1518 = vpop.permute.xlu0 %1517
      %1519 = vrot.lane.b32.xlu0 %v1364, 96
      %v1520 = vpop.permute.xlu0 %1519
      %1521 = vrot.lane.b32.xlu0 %v1365, 96
      %v1522 = vpop.permute.xlu0 %1521
      %1523 = vrot.lane.b32.xlu0 %v1366, 96
      %v1524 = vpop.permute.xlu0 %1523
      %1525 = vrot.lane.b32.xlu0 %v1367, 96
      %v1526 = vpop.permute.xlu0 %1525
      %1527 = vrot.lane.b32.xlu0 %v1368, 96
      %v1528 = vpop.permute.xlu0 %1527
      %1529 = vrot.lane.b32.xlu0 %v1369, 96
      %v1530 = vpop.permute.xlu0 %1529
      %1531 = vrot.lane.b32.xlu0 %v1370, 96
      %v1532 = vpop.permute.xlu0 %1531
      %1533 = vrot.lane.b32.xlu0 %v1371, 96
      %v1534 = vpop.permute.xlu0 %1533
      %1535 = vrot.lane.b32.xlu0 %v1372, 96
      %v1536 = vpop.permute.xlu0 %1535
      %1537 = vrot.lane.b32.xlu0 %v1373, 96
      %v1538 = vpop.permute.xlu0 %1537
      %1539 = vrot.lane.b32.xlu0 %v1374, 96
      %v1540 = vpop.permute.xlu0 %1539
      %1541 = vrot.lane.b32.xlu0 %v1375, 96
      %v1542 = vpop.permute.xlu0 %1541
      %1543 = vrot.lane.b32.xlu0 %v1376, 96
      %v1544 = vpop.permute.xlu0 %1543
      %1545 = vrot.lane.b32.xlu0 %v1377, 96
      %v1546 = vpop.permute.xlu0 %1545
      %1547 = vrot.lane.b32.xlu0 %v1378, 96
      %v1548 = vpop.permute.xlu0 %1547
      %1549 = vrot.lane.b32.xlu0 %v1379, 96
      %v1550 = vpop.permute.xlu0 %1549
      %1551 = vrot.lane.b32.xlu0 %v1380, 96
      %v1552 = vpop.permute.xlu0 %1551
      %1553 = vrot.lane.b32.xlu0 %v1381, 96
      %v1554 = vpop.permute.xlu0 %1553
      %1555 = vrot.lane.b32.xlu0 %v1382, 96
      %v1556 = vpop.permute.xlu0 %1555
      %1557 = vrot.lane.b32.xlu0 %v1383, 96
      %v1558 = vpop.permute.xlu0 %1557
      %1559 = vrot.lane.b32.xlu0 %v1384, 96
      %v1560 = vpop.permute.xlu0 %1559
      %1561 = vrot.lane.b32.xlu0 %v1385, 96
      %v1562 = vpop.permute.xlu0 %1561
      %1563 = vrot.lane.b32.xlu0 %v1386, 96
      %v1564 = vpop.permute.xlu0 %1563
      %1565 = vrot.lane.b32.xlu0 %v1387, 96
      %v1566 = vpop.permute.xlu0 %1565
      %1567 = vrot.lane.b32.xlu0 %v1388, 96
      %v1568 = vpop.permute.xlu0 %1567
      %1569 = vrot.lane.b32.xlu0 %v1389, 96
      %v1570 = vpop.permute.xlu0 %1569
      %1571 = vrot.lane.b32.xlu0 %v1390, 96
      %v1572 = vpop.permute.xlu0 %1571
      %1573 = vrot.lane.b32.xlu0 %v1391, 96
      %v1574 = vpop.permute.xlu0 %1573
      %1575 = vrot.lane.b32.xlu0 %v1392, 96
      %v1576 = vpop.permute.xlu0 %1575
      %1577 = vrot.lane.b32.xlu0 %v1393, 96
      %v1578 = vpop.permute.xlu0 %1577
      %1579 = vrot.lane.b32.xlu0 %v1394, 96
      %v1580 = vpop.permute.xlu0 %1579
      %1581 = vrot.lane.b32.xlu0 %v1395, 96
      %v1582 = vpop.permute.xlu0 %1581
      %1583 = vrot.lane.b32.xlu0 %v1396, 96
      %v1584 = vpop.permute.xlu0 %1583
      %1585 = vrot.lane.b32.xlu0 %v1397, 96
      %v1586 = vpop.permute.xlu0 %1585
      %1587 = vrot.lane.b32.xlu0 %v1398, 96
      %v1588 = vpop.permute.xlu0 %1587
      %1589 = vrot.lane.b32.xlu0 %v1399, 96
      %v1590 = vpop.permute.xlu0 %1589
      %1591 = vrot.lane.b32.xlu0 %v1400, 96
      %v1592 = vpop.permute.xlu0 %1591
      %v1657 = vadd.f32 %v699, %v1466
      %v1658 = vadd.f32 %v702, %v1468
      %v1659 = vadd.f32 %v707, %v1470
      %v1660 = vadd.f32 %v710, %v1472
      %v1661 = vadd.f32 %v715, %v1474
      %v1662 = vadd.f32 %v718, %v1476
      %v1663 = vadd.f32 %v723, %v1478
      %v1664 = vadd.f32 %v726, %v1480
      %v1665 = vadd.f32 %v731, %v1482
      %v1666 = vadd.f32 %v734, %v1484
      %v1667 = vadd.f32 %v739, %v1486
      %v1668 = vadd.f32 %v742, %v1488
      %v1669 = vadd.f32 %v747, %v1490
      %v1670 = vadd.f32 %v750, %v1492
      %v1671 = vadd.f32 %v755, %v1494
      %v1672 = vadd.f32 %v758, %v1496
      %v1673 = vadd.f32 %v763, %v1498
      %v1674 = vadd.f32 %v766, %v1500
      %v1675 = vadd.f32 %v771, %v1502
      %v1676 = vadd.f32 %v774, %v1504
      %v1677 = vadd.f32 %v779, %v1506
      %v1678 = vadd.f32 %v782, %v1508
      %v1679 = vadd.f32 %v787, %v1510
      %v1680 = vadd.f32 %v790, %v1512
      %v1681 = vadd.f32 %v795, %v1514
      %v1682 = vadd.f32 %v798, %v1516
      %v1683 = vadd.f32 %v803, %v1518
      %v1684 = vadd.f32 %v806, %v1520
      %v1685 = vadd.f32 %v811, %v1522
      %v1686 = vadd.f32 %v814, %v1524
      %v1687 = vadd.f32 %v819, %v1526
      %v1688 = vadd.f32 %v822, %v1528
      %v1689 = vadd.f32 %v827, %v1530
      %v1690 = vadd.f32 %v830, %v1532
      %v1691 = vadd.f32 %v835, %v1534
      %v1692 = vadd.f32 %v838, %v1536
      %v1693 = vadd.f32 %v843, %v1538
      %v1694 = vadd.f32 %v846, %v1540
      %v1695 = vadd.f32 %v851, %v1542
      %v1696 = vadd.f32 %v854, %v1544
      %v1697 = vadd.f32 %v859, %v1546
      %v1698 = vadd.f32 %v862, %v1548
      %v1699 = vadd.f32 %v867, %v1550
      %v1700 = vadd.f32 %v870, %v1552
      %v1701 = vadd.f32 %v875, %v1554
      %v1702 = vadd.f32 %v878, %v1556
      %v1703 = vadd.f32 %v883, %v1558
      %v1704 = vadd.f32 %v886, %v1560
      %v1705 = vadd.f32 %v891, %v1562
      %v1706 = vadd.f32 %v894, %v1564
      %v1707 = vadd.f32 %v899, %v1566
      %v1708 = vadd.f32 %v902, %v1568
      %v1709 = vadd.f32 %v907, %v1570
      %v1710 = vadd.f32 %v910, %v1572
      %v1711 = vadd.f32 %v915, %v1574
      %v1712 = vadd.f32 %v918, %v1576
      %v1713 = vadd.f32 %v923, %v1578
      %v1714 = vadd.f32 %v926, %v1580
      %v1715 = vadd.f32 %v931, %v1582
      %v1716 = vadd.f32 %v934, %v1584
      %v1717 = vadd.f32 %v939, %v1586
      %v1718 = vadd.f32 %v942, %v1588
      %v1719 = vadd.f32 %v947, %v1590
      %v1720 = vadd.f32 %v950, %v1592
      %v1721 = vmul.f32 %v337, %v337
      %v1722 = vmul.f32 %v338, %v338
      %v1723 = vmul.f32 %v339, %v339
      %v1724 = vmul.f32 %v340, %v340
      %v1725 = vmul.f32 %v341, %v341
      %v1726 = vmul.f32 %v342, %v342
      %v1727 = vmul.f32 %v343, %v343
      %v1728 = vmul.f32 %v344, %v344
      %v1729 = vmul.f32 %v345, %v345
      %v1730 = vmul.f32 %v346, %v346
      %v1731 = vmul.f32 %v347, %v347
      %v1732 = vmul.f32 %v348, %v348
      %v1733 = vmul.f32 %v349, %v349
      %v1734 = vmul.f32 %v350, %v350
      %v1735 = vmul.f32 %v351, %v351
      %v1736 = vmul.f32 %v352, %v352
      %v1737 = vmul.f32 %v353, %v353
      %v1738 = vmul.f32 %v354, %v354
      %v1739 = vmul.f32 %v355, %v355
      %v1740 = vmul.f32 %v356, %v356
      %v1741 = vmul.f32 %v357, %v357
      %v1742 = vmul.f32 %v358, %v358
      %v1743 = vmul.f32 %v359, %v359
      %v1744 = vmul.f32 %v360, %v360
      %v1745 = vmul.f32 %v361, %v361
      %v1746 = vmul.f32 %v362, %v362
      %v1747 = vmul.f32 %v363, %v363
      %v1748 = vmul.f32 %v364, %v364
      %v1749 = vmul.f32 %v365, %v365
      %v1750 = vmul.f32 %v366, %v366
      %v1751 = vmul.f32 %v367, %v367
      %v1752 = vmul.f32 %v368, %v368
      %v1753 = vmul.f32 %v369, %v369
      %v1754 = vmul.f32 %v370, %v370
      %v1755 = vmul.f32 %v371, %v371
      %v1756 = vmul.f32 %v372, %v372
      %v1757 = vmul.f32 %v373, %v373
      %v1758 = vmul.f32 %v374, %v374
      %v1759 = vmul.f32 %v375, %v375
      %v1760 = vmul.f32 %v376, %v376
      %v1761 = vmul.f32 %v377, %v377
      %v1762 = vmul.f32 %v378, %v378
      %v1763 = vmul.f32 %v379, %v379
      %v1764 = vmul.f32 %v380, %v380
      %v1765 = vmul.f32 %v381, %v381
      %v1766 = vmul.f32 %v382, %v382
      %v1767 = vmul.f32 %v383, %v383
      %v1768 = vmul.f32 %v384, %v384
      %v1769 = vmul.f32 %v385, %v385
      %v1770 = vmul.f32 %v386, %v386
      %v1771 = vmul.f32 %v387, %v387
      %v1772 = vmul.f32 %v388, %v388
      %v1773 = vmul.f32 %v389, %v389
      %v1774 = vmul.f32 %v390, %v390
      %v1775 = vmul.f32 %v391, %v391
      %v1776 = vmul.f32 %v392, %v392
      %v1777 = vmul.f32 %v393, %v393
      %v1778 = vmul.f32 %v394, %v394
      %v1779 = vmul.f32 %v395, %v395
      %v1780 = vmul.f32 %v396, %v396
      %v1781 = vmul.f32 %v397, %v397
      %v1782 = vmul.f32 %v398, %v398
      %v1783 = vmul.f32 %v399, %v399
      %v1784 = vmul.f32 %v400, %v400
      %v1785 = vmul.f32 %v1721, 0.5
      %v1786 = vmul.f32 %v1722, 0.5
      %v1787 = vmul.f32 %v1723, 0.5
      %v1788 = vmul.f32 %v1724, 0.5
      %v1789 = vmul.f32 %v1725, 0.5
      %v1790 = vmul.f32 %v1726, 0.5
      %v1791 = vmul.f32 %v1727, 0.5
      %v1792 = vmul.f32 %v1728, 0.5
      %v1793 = vmul.f32 %v1729, 0.5
      %v1794 = vmul.f32 %v1730, 0.5
      %v1795 = vmul.f32 %v1731, 0.5
      %v1796 = vmul.f32 %v1732, 0.5
      %v1797 = vmul.f32 %v1733, 0.5
      %v1798 = vmul.f32 %v1734, 0.5
      %v1799 = vmul.f32 %v1735, 0.5
      %v1800 = vmul.f32 %v1736, 0.5
      %v1801 = vmul.f32 %v1737, 0.5
      %v1802 = vmul.f32 %v1738, 0.5
      %v1803 = vmul.f32 %v1739, 0.5
      %v1804 = vmul.f32 %v1740, 0.5
      %v1805 = vmul.f32 %v1741, 0.5
      %v1806 = vmul.f32 %v1742, 0.5
      %v1807 = vmul.f32 %v1743, 0.5
      %v1808 = vmul.f32 %v1744, 0.5
      %v1809 = vmul.f32 %v1745, 0.5
      %v1810 = vmul.f32 %v1746, 0.5
      %v1811 = vmul.f32 %v1747, 0.5
      %v1812 = vmul.f32 %v1748, 0.5
      %v1813 = vmul.f32 %v1749, 0.5
      %v1814 = vmul.f32 %v1750, 0.5
      %v1815 = vmul.f32 %v1751, 0.5
      %v1816 = vmul.f32 %v1752, 0.5
      %v1817 = vmul.f32 %v1753, 0.5
      %v1818 = vmul.f32 %v1754, 0.5
      %v1819 = vmul.f32 %v1755, 0.5
      %v1820 = vmul.f32 %v1756, 0.5
      %v1821 = vmul.f32 %v1757, 0.5
      %v1822 = vmul.f32 %v1758, 0.5
      %v1823 = vmul.f32 %v1759, 0.5
      %v1824 = vmul.f32 %v1760, 0.5
      %v1825 = vmul.f32 %v1761, 0.5
      %v1826 = vmul.f32 %v1762, 0.5
      %v1827 = vmul.f32 %v1763, 0.5
      %v1828 = vmul.f32 %v1764, 0.5
      %v1829 = vmul.f32 %v1765, 0.5
      %v1830 = vmul.f32 %v1766, 0.5
      %v1831 = vmul.f32 %v1767, 0.5
      %v1832 = vmul.f32 %v1768, 0.5
      %v1833 = vmul.f32 %v1769, 0.5
      %v1834 = vmul.f32 %v1770, 0.5
      %v1835 = vmul.f32 %v1771, 0.5
      %v1836 = vmul.f32 %v1772, 0.5
      %v1837 = vmul.f32 %v1773, 0.5
      %v1838 = vmul.f32 %v1774, 0.5
      %v1839 = vmul.f32 %v1775, 0.5
      %v1840 = vmul.f32 %v1776, 0.5
      %v1841 = vmul.f32 %v1777, 0.5
      %v1842 = vmul.f32 %v1778, 0.5
      %v1843 = vmul.f32 %v1779, 0.5
      %v1844 = vmul.f32 %v1780, 0.5
      %v1845 = vmul.f32 %v1781, 0.5
      %v1846 = vmul.f32 %v1782, 0.5
      %v1847 = vmul.f32 %v1783, 0.5
      %v1848 = vmul.f32 %v1784, 0.5
      %1913 = vrot.lane.b32.xlu0 %v1785, 32
      %v1914 = vpop.permute.xlu0 %1913
      %1915 = vrot.lane.b32.xlu0 %v1786, 32
      %v1916 = vpop.permute.xlu0 %1915
      %1917 = vrot.lane.b32.xlu0 %v1787, 32
      %v1918 = vpop.permute.xlu0 %1917
      %1919 = vrot.lane.b32.xlu0 %v1788, 32
      %v1920 = vpop.permute.xlu0 %1919
      %1921 = vrot.lane.b32.xlu0 %v1789, 32
      %v1922 = vpop.permute.xlu0 %1921
      %1923 = vrot.lane.b32.xlu0 %v1790, 32
      %v1924 = vpop.permute.xlu0 %1923
      %1925 = vrot.lane.b32.xlu0 %v1791, 32
      %v1926 = vpop.permute.xlu0 %1925
      %1927 = vrot.lane.b32.xlu0 %v1792, 32
      %v1928 = vpop.permute.xlu0 %1927
      %1929 = vrot.lane.b32.xlu0 %v1793, 32
      %v1930 = vpop.permute.xlu0 %1929
      %1931 = vrot.lane.b32.xlu0 %v1794, 32
      %v1932 = vpop.permute.xlu0 %1931
      %1933 = vrot.lane.b32.xlu0 %v1795, 32
      %v1934 = vpop.permute.xlu0 %1933
      %1935 = vrot.lane.b32.xlu0 %v1796, 32
      %v1936 = vpop.permute.xlu0 %1935
      %1937 = vrot.lane.b32.xlu0 %v1797, 32
      %v1938 = vpop.permute.xlu0 %1937
      %1939 = vrot.lane.b32.xlu0 %v1798, 32
      %v1940 = vpop.permute.xlu0 %1939
      %1941 = vrot.lane.b32.xlu0 %v1799, 32
      %v1942 = vpop.permute.xlu0 %1941
      %1943 = vrot.lane.b32.xlu0 %v1800, 32
      %v1944 = vpop.permute.xlu0 %1943
      %1945 = vrot.lane.b32.xlu0 %v1801, 32
      %v1946 = vpop.permute.xlu0 %1945
      %1947 = vrot.lane.b32.xlu0 %v1802, 32
      %v1948 = vpop.permute.xlu0 %1947
      %1949 = vrot.lane.b32.xlu0 %v1803, 32
      %v1950 = vpop.permute.xlu0 %1949
      %1951 = vrot.lane.b32.xlu0 %v1804, 32
      %v1952 = vpop.permute.xlu0 %1951
      %1953 = vrot.lane.b32.xlu0 %v1805, 32
      %v1954 = vpop.permute.xlu0 %1953
      %1955 = vrot.lane.b32.xlu0 %v1806, 32
      %v1956 = vpop.permute.xlu0 %1955
      %1957 = vrot.lane.b32.xlu0 %v1807, 32
      %v1958 = vpop.permute.xlu0 %1957
      %1959 = vrot.lane.b32.xlu0 %v1808, 32
      %v1960 = vpop.permute.xlu0 %1959
      %1961 = vrot.lane.b32.xlu0 %v1809, 32
      %v1962 = vpop.permute.xlu0 %1961
      %1963 = vrot.lane.b32.xlu0 %v1810, 32
      %v1964 = vpop.permute.xlu0 %1963
      %1965 = vrot.lane.b32.xlu0 %v1811, 32
      %v1966 = vpop.permute.xlu0 %1965
      %1967 = vrot.lane.b32.xlu0 %v1812, 32
      %v1968 = vpop.permute.xlu0 %1967
      %1969 = vrot.lane.b32.xlu0 %v1813, 32
      %v1970 = vpop.permute.xlu0 %1969
      %1971 = vrot.lane.b32.xlu0 %v1814, 32
      %v1972 = vpop.permute.xlu0 %1971
      %1973 = vrot.lane.b32.xlu0 %v1815, 32
      %v1974 = vpop.permute.xlu0 %1973
      %1975 = vrot.lane.b32.xlu0 %v1816, 32
      %v1976 = vpop.permute.xlu0 %1975
      %1977 = vrot.lane.b32.xlu0 %v1817, 32
      %v1978 = vpop.permute.xlu0 %1977
      %1979 = vrot.lane.b32.xlu0 %v1818, 32
      %v1980 = vpop.permute.xlu0 %1979
      %1981 = vrot.lane.b32.xlu0 %v1819, 32
      %v1982 = vpop.permute.xlu0 %1981
      %1983 = vrot.lane.b32.xlu0 %v1820, 32
      %v1984 = vpop.permute.xlu0 %1983
      %1985 = vrot.lane.b32.xlu0 %v1821, 32
      %v1986 = vpop.permute.xlu0 %1985
      %1987 = vrot.lane.b32.xlu0 %v1822, 32
      %v1988 = vpop.permute.xlu0 %1987
      %1989 = vrot.lane.b32.xlu0 %v1823, 32
      %v1990 = vpop.permute.xlu0 %1989
      %1991 = vrot.lane.b32.xlu0 %v1824, 32
      %v1992 = vpop.permute.xlu0 %1991
      %1993 = vrot.lane.b32.xlu0 %v1825, 32
      %v1994 = vpop.permute.xlu0 %1993
      %1995 = vrot.lane.b32.xlu0 %v1826, 32
      %v1996 = vpop.permute.xlu0 %1995
      %1997 = vrot.lane.b32.xlu0 %v1827, 32
      %v1998 = vpop.permute.xlu0 %1997
      %1999 = vrot.lane.b32.xlu0 %v1828, 32
      %v2000 = vpop.permute.xlu0 %1999
      %2001 = vrot.lane.b32.xlu0 %v1829, 32
      %v2002 = vpop.permute.xlu0 %2001
      %2003 = vrot.lane.b32.xlu0 %v1830, 32
      %v2004 = vpop.permute.xlu0 %2003
      %2005 = vrot.lane.b32.xlu0 %v1831, 32
      %v2006 = vpop.permute.xlu0 %2005
      %2007 = vrot.lane.b32.xlu0 %v1832, 32
      %v2008 = vpop.permute.xlu0 %2007
      %2009 = vrot.lane.b32.xlu0 %v1833, 32
      %v2010 = vpop.permute.xlu0 %2009
      %2011 = vrot.lane.b32.xlu0 %v1834, 32
      %v2012 = vpop.permute.xlu0 %2011
      %2013 = vrot.lane.b32.xlu0 %v1835, 32
      %v2014 = vpop.permute.xlu0 %2013
      %2015 = vrot.lane.b32.xlu0 %v1836, 32
      %v2016 = vpop.permute.xlu0 %2015
      %2017 = vrot.lane.b32.xlu0 %v1837, 32
      %v2018 = vpop.permute.xlu0 %2017
      %2019 = vrot.lane.b32.xlu0 %v1838, 32
      %v2020 = vpop.permute.xlu0 %2019
      %2021 = vrot.lane.b32.xlu0 %v1839, 32
      %v2022 = vpop.permute.xlu0 %2021
      %2023 = vrot.lane.b32.xlu0 %v1840, 32
      %v2024 = vpop.permute.xlu0 %2023
      %2025 = vrot.lane.b32.xlu0 %v1841, 32
      %v2026 = vpop.permute.xlu0 %2025
      %2027 = vrot.lane.b32.xlu0 %v1842, 32
      %v2028 = vpop.permute.xlu0 %2027
      %2029 = vrot.lane.b32.xlu0 %v1843, 32
      %v2030 = vpop.permute.xlu0 %2029
      %2031 = vrot.lane.b32.xlu0 %v1844, 32
      %v2032 = vpop.permute.xlu0 %2031
      %2033 = vrot.lane.b32.xlu0 %v1845, 32
      %v2034 = vpop.permute.xlu0 %2033
      %2035 = vrot.lane.b32.xlu0 %v1846, 32
      %v2036 = vpop.permute.xlu0 %2035
      %2037 = vrot.lane.b32.xlu0 %v1847, 32
      %v2038 = vpop.permute.xlu0 %2037
      %2039 = vrot.lane.b32.xlu0 %v1848, 32
      %v2040 = vpop.permute.xlu0 %2039
      %v2105 = vadd.f32 %v699, %v1914
      %v2106 = vadd.f32 %v702, %v1916
      %v2107 = vadd.f32 %v707, %v1918
      %v2108 = vadd.f32 %v710, %v1920
      %v2109 = vadd.f32 %v715, %v1922
      %v2110 = vadd.f32 %v718, %v1924
      %v2111 = vadd.f32 %v723, %v1926
      %v2112 = vadd.f32 %v726, %v1928
      %v2113 = vadd.f32 %v731, %v1930
      %v2114 = vadd.f32 %v734, %v1932
      %v2115 = vadd.f32 %v739, %v1934
      %v2116 = vadd.f32 %v742, %v1936
      %v2117 = vadd.f32 %v747, %v1938
      %v2118 = vadd.f32 %v750, %v1940
      %v2119 = vadd.f32 %v755, %v1942
      %v2120 = vadd.f32 %v758, %v1944
      %v2121 = vadd.f32 %v763, %v1946
      %v2122 = vadd.f32 %v766, %v1948
      %v2123 = vadd.f32 %v771, %v1950
      %v2124 = vadd.f32 %v774, %v1952
      %v2125 = vadd.f32 %v779, %v1954
      %v2126 = vadd.f32 %v782, %v1956
      %v2127 = vadd.f32 %v787, %v1958
      %v2128 = vadd.f32 %v790, %v1960
      %v2129 = vadd.f32 %v795, %v1962
      %v2130 = vadd.f32 %v798, %v1964
      %v2131 = vadd.f32 %v803, %v1966
      %v2132 = vadd.f32 %v806, %v1968
      %v2133 = vadd.f32 %v811, %v1970
      %v2134 = vadd.f32 %v814, %v1972
      %v2135 = vadd.f32 %v819, %v1974
      %v2136 = vadd.f32 %v822, %v1976
      %v2137 = vadd.f32 %v827, %v1978
      %v2138 = vadd.f32 %v830, %v1980
      %v2139 = vadd.f32 %v835, %v1982
      %v2140 = vadd.f32 %v838, %v1984
      %v2141 = vadd.f32 %v843, %v1986
      %v2142 = vadd.f32 %v846, %v1988
      %v2143 = vadd.f32 %v851, %v1990
      %v2144 = vadd.f32 %v854, %v1992
      %v2145 = vadd.f32 %v859, %v1994
      %v2146 = vadd.f32 %v862, %v1996
      %v2147 = vadd.f32 %v867, %v1998
      %v2148 = vadd.f32 %v870, %v2000
      %v2149 = vadd.f32 %v875, %v2002
      %v2150 = vadd.f32 %v878, %v2004
      %v2151 = vadd.f32 %v883, %v2006
      %v2152 = vadd.f32 %v886, %v2008
      %v2153 = vadd.f32 %v891, %v2010
      %v2154 = vadd.f32 %v894, %v2012
      %v2155 = vadd.f32 %v899, %v2014
      %v2156 = vadd.f32 %v902, %v2016
      %v2157 = vadd.f32 %v907, %v2018
      %v2158 = vadd.f32 %v910, %v2020
      %v2159 = vadd.f32 %v915, %v2022
      %v2160 = vadd.f32 %v918, %v2024
      %v2161 = vadd.f32 %v923, %v2026
      %v2162 = vadd.f32 %v926, %v2028
      %v2163 = vadd.f32 %v931, %v2030
      %v2164 = vadd.f32 %v934, %v2032
      %v2165 = vadd.f32 %v939, %v2034
      %v2166 = vadd.f32 %v942, %v2036
      %v2167 = vadd.f32 %v947, %v2038
      %v2168 = vadd.f32 %v950, %v2040
      %v2169 = vmul.f32 %v1657, %v1657
      %v2170 = vmul.f32 %v1658, %v1658
      %v2171 = vmul.f32 %v1659, %v1659
      %v2172 = vmul.f32 %v1660, %v1660
      %v2173 = vmul.f32 %v1661, %v1661
      %v2174 = vmul.f32 %v1662, %v1662
      %v2175 = vmul.f32 %v1663, %v1663
      %v2176 = vmul.f32 %v1664, %v1664
      %v2177 = vmul.f32 %v1665, %v1665
      %v2178 = vmul.f32 %v1666, %v1666
      %v2179 = vmul.f32 %v1667, %v1667
      %v2180 = vmul.f32 %v1668, %v1668
      %v2181 = vmul.f32 %v1669, %v1669
      %v2182 = vmul.f32 %v1670, %v1670
      %v2183 = vmul.f32 %v1671, %v1671
      %v2184 = vmul.f32 %v1672, %v1672
      %v2185 = vmul.f32 %v1673, %v1673
      %v2186 = vmul.f32 %v1674, %v1674
      %v2187 = vmul.f32 %v1675, %v1675
      %v2188 = vmul.f32 %v1676, %v1676
      %v2189 = vmul.f32 %v1677, %v1677
      %v2190 = vmul.f32 %v1678, %v1678
      %v2191 = vmul.f32 %v1679, %v1679
      %v2192 = vmul.f32 %v1680, %v1680
      %v2193 = vmul.f32 %v1681, %v1681
      %v2194 = vmul.f32 %v1682, %v1682
      %v2195 = vmul.f32 %v1683, %v1683
      %v2196 = vmul.f32 %v1684, %v1684
      %v2197 = vmul.f32 %v1685, %v1685
      %v2198 = vmul.f32 %v1686, %v1686
      %v2199 = vmul.f32 %v1687, %v1687
      %v2200 = vmul.f32 %v1688, %v1688
      %v2201 = vmul.f32 %v1689, %v1689
      %v2202 = vmul.f32 %v1690, %v1690
      %v2203 = vmul.f32 %v1691, %v1691
      %v2204 = vmul.f32 %v1692, %v1692
      %v2205 = vmul.f32 %v1693, %v1693
      %v2206 = vmul.f32 %v1694, %v1694
      %v2207 = vmul.f32 %v1695, %v1695
      %v2208 = vmul.f32 %v1696, %v1696
      %v2209 = vmul.f32 %v1697, %v1697
      %v2210 = vmul.f32 %v1698, %v1698
      %v2211 = vmul.f32 %v1699, %v1699
      %v2212 = vmul.f32 %v1700, %v1700
      %v2213 = vmul.f32 %v1701, %v1701
      %v2214 = vmul.f32 %v1702, %v1702
      %v2215 = vmul.f32 %v1703, %v1703
      %v2216 = vmul.f32 %v1704, %v1704
      %v2217 = vmul.f32 %v1705, %v1705
      %v2218 = vmul.f32 %v1706, %v1706
      %v2219 = vmul.f32 %v1707, %v1707
      %v2220 = vmul.f32 %v1708, %v1708
      %v2221 = vmul.f32 %v1709, %v1709
      %v2222 = vmul.f32 %v1710, %v1710
      %v2223 = vmul.f32 %v1711, %v1711
      %v2224 = vmul.f32 %v1712, %v1712
      %v2225 = vmul.f32 %v1713, %v1713
      %v2226 = vmul.f32 %v1714, %v1714
      %v2227 = vmul.f32 %v1715, %v1715
      %v2228 = vmul.f32 %v1716, %v1716
      %v2229 = vmul.f32 %v1717, %v1717
      %v2230 = vmul.f32 %v1718, %v1718
      %v2231 = vmul.f32 %v1719, %v1719
      %v2232 = vmul.f32 %v1720, %v1720
      %v2233 = vmul.f32 %v2169, 0.5
      %v2234 = vmul.f32 %v2170, 0.5
      %v2235 = vmul.f32 %v2171, 0.5
      %v2236 = vmul.f32 %v2172, 0.5
      %v2237 = vmul.f32 %v2173, 0.5
      %v2238 = vmul.f32 %v2174, 0.5
      %v2239 = vmul.f32 %v2175, 0.5
      %v2240 = vmul.f32 %v2176, 0.5
      %v2241 = vmul.f32 %v2177, 0.5
      %v2242 = vmul.f32 %v2178, 0.5
      %v2243 = vmul.f32 %v2179, 0.5
      %v2244 = vmul.f32 %v2180, 0.5
      %v2245 = vmul.f32 %v2181, 0.5
      %v2246 = vmul.f32 %v2182, 0.5
      %v2247 = vmul.f32 %v2183, 0.5
      %v2248 = vmul.f32 %v2184, 0.5
      %v2249 = vmul.f32 %v2185, 0.5
      %v2250 = vmul.f32 %v2186, 0.5
      %v2251 = vmul.f32 %v2187, 0.5
      %v2252 = vmul.f32 %v2188, 0.5
      %v2253 = vmul.f32 %v2189, 0.5
      %v2254 = vmul.f32 %v2190, 0.5
      %v2255 = vmul.f32 %v2191, 0.5
      %v2256 = vmul.f32 %v2192, 0.5
      %v2257 = vmul.f32 %v2193, 0.5
      %v2258 = vmul.f32 %v2194, 0.5
      %v2259 = vmul.f32 %v2195, 0.5
      %v2260 = vmul.f32 %v2196, 0.5
      %v2261 = vmul.f32 %v2197, 0.5
      %v2262 = vmul.f32 %v2198, 0.5
      %v2263 = vmul.f32 %v2199, 0.5
      %v2264 = vmul.f32 %v2200, 0.5
      %v2265 = vmul.f32 %v2201, 0.5
      %v2266 = vmul.f32 %v2202, 0.5
      %v2267 = vmul.f32 %v2203, 0.5
      %v2268 = vmul.f32 %v2204, 0.5
      %v2269 = vmul.f32 %v2205, 0.5
      %v2270 = vmul.f32 %v2206, 0.5
      %v2271 = vmul.f32 %v2207, 0.5
      %v2272 = vmul.f32 %v2208, 0.5
      %v2273 = vmul.f32 %v2209, 0.5
      %v2274 = vmul.f32 %v2210, 0.5
      %v2275 = vmul.f32 %v2211, 0.5
      %v2276 = vmul.f32 %v2212, 0.5
      %v2277 = vmul.f32 %v2213, 0.5
      %v2278 = vmul.f32 %v2214, 0.5
      %v2279 = vmul.f32 %v2215, 0.5
      %v2280 = vmul.f32 %v2216, 0.5
      %v2281 = vmul.f32 %v2217, 0.5
      %v2282 = vmul.f32 %v2218, 0.5
      %v2283 = vmul.f32 %v2219, 0.5
      %v2284 = vmul.f32 %v2220, 0.5
      %v2285 = vmul.f32 %v2221, 0.5
      %v2286 = vmul.f32 %v2222, 0.5
      %v2287 = vmul.f32 %v2223, 0.5
      %v2288 = vmul.f32 %v2224, 0.5
      %v2289 = vmul.f32 %v2225, 0.5
      %v2290 = vmul.f32 %v2226, 0.5
      %v2291 = vmul.f32 %v2227, 0.5
      %v2292 = vmul.f32 %v2228, 0.5
      %v2293 = vmul.f32 %v2229, 0.5
      %v2294 = vmul.f32 %v2230, 0.5
      %v2295 = vmul.f32 %v2231, 0.5
      %v2296 = vmul.f32 %v2232, 0.5
      %2361 = vrot.lane.b32.xlu0 %v2233, 32
      %v2362 = vpop.permute.xlu0 %2361
      %2363 = vrot.lane.b32.xlu0 %v2234, 32
      %v2364 = vpop.permute.xlu0 %2363
      %2365 = vrot.lane.b32.xlu0 %v2235, 32
      %v2366 = vpop.permute.xlu0 %2365
      %2367 = vrot.lane.b32.xlu0 %v2236, 32
      %v2368 = vpop.permute.xlu0 %2367
      %2369 = vrot.lane.b32.xlu0 %v2237, 32
      %v2370 = vpop.permute.xlu0 %2369
      %2371 = vrot.lane.b32.xlu0 %v2238, 32
      %v2372 = vpop.permute.xlu0 %2371
      %2373 = vrot.lane.b32.xlu0 %v2239, 32
      %v2374 = vpop.permute.xlu0 %2373
      %2375 = vrot.lane.b32.xlu0 %v2240, 32
      %v2376 = vpop.permute.xlu0 %2375
      %2377 = vrot.lane.b32.xlu0 %v2241, 32
      %v2378 = vpop.permute.xlu0 %2377
      %2379 = vrot.lane.b32.xlu0 %v2242, 32
      %v2380 = vpop.permute.xlu0 %2379
      %2381 = vrot.lane.b32.xlu0 %v2243, 32
      %v2382 = vpop.permute.xlu0 %2381
      %2383 = vrot.lane.b32.xlu0 %v2244, 32
      %v2384 = vpop.permute.xlu0 %2383
      %2385 = vrot.lane.b32.xlu0 %v2245, 32
      %v2386 = vpop.permute.xlu0 %2385
      %2387 = vrot.lane.b32.xlu0 %v2246, 32
      %v2388 = vpop.permute.xlu0 %2387
      %2389 = vrot.lane.b32.xlu0 %v2247, 32
      %v2390 = vpop.permute.xlu0 %2389
      %2391 = vrot.lane.b32.xlu0 %v2248, 32
      %v2392 = vpop.permute.xlu0 %2391
      %2393 = vrot.lane.b32.xlu0 %v2249, 32
      %v2394 = vpop.permute.xlu0 %2393
      %2395 = vrot.lane.b32.xlu0 %v2250, 32
      %v2396 = vpop.permute.xlu0 %2395
      %2397 = vrot.lane.b32.xlu0 %v2251, 32
      %v2398 = vpop.permute.xlu0 %2397
      %2399 = vrot.lane.b32.xlu0 %v2252, 32
      %v2400 = vpop.permute.xlu0 %2399
      %2401 = vrot.lane.b32.xlu0 %v2253, 32
      %v2402 = vpop.permute.xlu0 %2401
      %2403 = vrot.lane.b32.xlu0 %v2254, 32
      %v2404 = vpop.permute.xlu0 %2403
      %2405 = vrot.lane.b32.xlu0 %v2255, 32
      %v2406 = vpop.permute.xlu0 %2405
      %2407 = vrot.lane.b32.xlu0 %v2256, 32
      %v2408 = vpop.permute.xlu0 %2407
      %2409 = vrot.lane.b32.xlu0 %v2257, 32
      %v2410 = vpop.permute.xlu0 %2409
      %2411 = vrot.lane.b32.xlu0 %v2258, 32
      %v2412 = vpop.permute.xlu0 %2411
      %2413 = vrot.lane.b32.xlu0 %v2259, 32
      %v2414 = vpop.permute.xlu0 %2413
      %2415 = vrot.lane.b32.xlu0 %v2260, 32
      %v2416 = vpop.permute.xlu0 %2415
      %2417 = vrot.lane.b32.xlu0 %v2261, 32
      %v2418 = vpop.permute.xlu0 %2417
      %2419 = vrot.lane.b32.xlu0 %v2262, 32
      %v2420 = vpop.permute.xlu0 %2419
      %2421 = vrot.lane.b32.xlu0 %v2263, 32
      %v2422 = vpop.permute.xlu0 %2421
      %2423 = vrot.lane.b32.xlu0 %v2264, 32
      %v2424 = vpop.permute.xlu0 %2423
      %2425 = vrot.lane.b32.xlu0 %v2265, 32
      %v2426 = vpop.permute.xlu0 %2425
      %2427 = vrot.lane.b32.xlu0 %v2266, 32
      %v2428 = vpop.permute.xlu0 %2427
      %2429 = vrot.lane.b32.xlu0 %v2267, 32
      %v2430 = vpop.permute.xlu0 %2429
      %2431 = vrot.lane.b32.xlu0 %v2268, 32
      %v2432 = vpop.permute.xlu0 %2431
      %2433 = vrot.lane.b32.xlu0 %v2269, 32
      %v2434 = vpop.permute.xlu0 %2433
      %2435 = vrot.lane.b32.xlu0 %v2270, 32
      %v2436 = vpop.permute.xlu0 %2435
      %2437 = vrot.lane.b32.xlu0 %v2271, 32
      %v2438 = vpop.permute.xlu0 %2437
      %2439 = vrot.lane.b32.xlu0 %v2272, 32
      %v2440 = vpop.permute.xlu0 %2439
      %2441 = vrot.lane.b32.xlu0 %v2273, 32
      %v2442 = vpop.permute.xlu0 %2441
      %2443 = vrot.lane.b32.xlu0 %v2274, 32
      %v2444 = vpop.permute.xlu0 %2443
      %2445 = vrot.lane.b32.xlu0 %v2275, 32
      %v2446 = vpop.permute.xlu0 %2445
      %2447 = vrot.lane.b32.xlu0 %v2276, 32
      %v2448 = vpop.permute.xlu0 %2447
      %2449 = vrot.lane.b32.xlu0 %v2277, 32
      %v2450 = vpop.permute.xlu0 %2449
      %2451 = vrot.lane.b32.xlu0 %v2278, 32
      %v2452 = vpop.permute.xlu0 %2451
      %2453 = vrot.lane.b32.xlu0 %v2279, 32
      %v2454 = vpop.permute.xlu0 %2453
      %2455 = vrot.lane.b32.xlu0 %v2280, 32
      %v2456 = vpop.permute.xlu0 %2455
      %2457 = vrot.lane.b32.xlu0 %v2281, 32
      %v2458 = vpop.permute.xlu0 %2457
      %2459 = vrot.lane.b32.xlu0 %v2282, 32
      %v2460 = vpop.permute.xlu0 %2459
      %2461 = vrot.lane.b32.xlu0 %v2283, 32
      %v2462 = vpop.permute.xlu0 %2461
      %2463 = vrot.lane.b32.xlu0 %v2284, 32
      %v2464 = vpop.permute.xlu0 %2463
      %2465 = vrot.lane.b32.xlu0 %v2285, 32
      %v2466 = vpop.permute.xlu0 %2465
      %2467 = vrot.lane.b32.xlu0 %v2286, 32
      %v2468 = vpop.permute.xlu0 %2467
      %2469 = vrot.lane.b32.xlu0 %v2287, 32
      %v2470 = vpop.permute.xlu0 %2469
      %2471 = vrot.lane.b32.xlu0 %v2288, 32
      %v2472 = vpop.permute.xlu0 %2471
      %2473 = vrot.lane.b32.xlu0 %v2289, 32
      %v2474 = vpop.permute.xlu0 %2473
      %2475 = vrot.lane.b32.xlu0 %v2290, 32
      %v2476 = vpop.permute.xlu0 %2475
      %2477 = vrot.lane.b32.xlu0 %v2291, 32
      %v2478 = vpop.permute.xlu0 %2477
      %2479 = vrot.lane.b32.xlu0 %v2292, 32
      %v2480 = vpop.permute.xlu0 %2479
      %2481 = vrot.lane.b32.xlu0 %v2293, 32
      %v2482 = vpop.permute.xlu0 %2481
      %2483 = vrot.lane.b32.xlu0 %v2294, 32
      %v2484 = vpop.permute.xlu0 %2483
      %2485 = vrot.lane.b32.xlu0 %v2295, 32
      %v2486 = vpop.permute.xlu0 %2485
      %2487 = vrot.lane.b32.xlu0 %v2296, 32
      %v2488 = vpop.permute.xlu0 %2487
      %v2553 = vsub.f32 %v2105, %v2362
      %v2554 = vsub.f32 %v2106, %v2364
      %v2555 = vsub.f32 %v2107, %v2366
      %v2556 = vsub.f32 %v2108, %v2368
      %v2557 = vsub.f32 %v2109, %v2370
      %v2558 = vsub.f32 %v2110, %v2372
      %v2559 = vsub.f32 %v2111, %v2374
      %v2560 = vsub.f32 %v2112, %v2376
      %v2561 = vsub.f32 %v2113, %v2378
      %v2562 = vsub.f32 %v2114, %v2380
      %v2563 = vsub.f32 %v2115, %v2382
      %v2564 = vsub.f32 %v2116, %v2384
      %v2565 = vsub.f32 %v2117, %v2386
      %v2566 = vsub.f32 %v2118, %v2388
      %v2567 = vsub.f32 %v2119, %v2390
      %v2568 = vsub.f32 %v2120, %v2392
      %v2569 = vsub.f32 %v2121, %v2394
      %v2570 = vsub.f32 %v2122, %v2396
      %v2571 = vsub.f32 %v2123, %v2398
      %v2572 = vsub.f32 %v2124, %v2400
      %v2573 = vsub.f32 %v2125, %v2402
      %v2574 = vsub.f32 %v2126, %v2404
      %v2575 = vsub.f32 %v2127, %v2406
      %v2576 = vsub.f32 %v2128, %v2408
      %v2577 = vsub.f32 %v2129, %v2410
      %v2578 = vsub.f32 %v2130, %v2412
      %v2579 = vsub.f32 %v2131, %v2414
      %v2580 = vsub.f32 %v2132, %v2416
      %v2581 = vsub.f32 %v2133, %v2418
      %v2582 = vsub.f32 %v2134, %v2420
      %v2583 = vsub.f32 %v2135, %v2422
      %v2584 = vsub.f32 %v2136, %v2424
      %v2585 = vsub.f32 %v2137, %v2426
      %v2586 = vsub.f32 %v2138, %v2428
      %v2587 = vsub.f32 %v2139, %v2430
      %v2588 = vsub.f32 %v2140, %v2432
      %v2589 = vsub.f32 %v2141, %v2434
      %v2590 = vsub.f32 %v2142, %v2436
      %v2591 = vsub.f32 %v2143, %v2438
      %v2592 = vsub.f32 %v2144, %v2440
      %v2593 = vsub.f32 %v2145, %v2442
      %v2594 = vsub.f32 %v2146, %v2444
      %v2595 = vsub.f32 %v2147, %v2446
      %v2596 = vsub.f32 %v2148, %v2448
      %v2597 = vsub.f32 %v2149, %v2450
      %v2598 = vsub.f32 %v2150, %v2452
      %v2599 = vsub.f32 %v2151, %v2454
      %v2600 = vsub.f32 %v2152, %v2456
      %v2601 = vsub.f32 %v2153, %v2458
      %v2602 = vsub.f32 %v2154, %v2460
      %v2603 = vsub.f32 %v2155, %v2462
      %v2604 = vsub.f32 %v2156, %v2464
      %v2605 = vsub.f32 %v2157, %v2466
      %v2606 = vsub.f32 %v2158, %v2468
      %v2607 = vsub.f32 %v2159, %v2470
      %v2608 = vsub.f32 %v2160, %v2472
      %v2609 = vsub.f32 %v2161, %v2474
      %v2610 = vsub.f32 %v2162, %v2476
      %v2611 = vsub.f32 %v2163, %v2478
      %v2612 = vsub.f32 %v2164, %v2480
      %v2613 = vsub.f32 %v2165, %v2482
      %v2614 = vsub.f32 %v2166, %v2484
      %v2615 = vsub.f32 %v2167, %v2486
      %v2616 = vsub.f32 %v2168, %v2488
      %2681 = vrot.lane.b32.xlu0 %v2553, 96
      %v2682 = vpop.permute.xlu0 %2681
      %2683 = vrot.lane.b32.xlu0 %v2554, 96
      %v2684 = vpop.permute.xlu0 %2683
      %2685 = vrot.lane.b32.xlu0 %v2555, 96
      %v2686 = vpop.permute.xlu0 %2685
      %2687 = vrot.lane.b32.xlu0 %v2556, 96
      %v2688 = vpop.permute.xlu0 %2687
      %2689 = vrot.lane.b32.xlu0 %v2557, 96
      %v2690 = vpop.permute.xlu0 %2689
      %2691 = vrot.lane.b32.xlu0 %v2558, 96
      %v2692 = vpop.permute.xlu0 %2691
      %2693 = vrot.lane.b32.xlu0 %v2559, 96
      %v2694 = vpop.permute.xlu0 %2693
      %2695 = vrot.lane.b32.xlu0 %v2560, 96
      %v2696 = vpop.permute.xlu0 %2695
      %2697 = vrot.lane.b32.xlu0 %v2561, 96
      %v2698 = vpop.permute.xlu0 %2697
      %2699 = vrot.lane.b32.xlu0 %v2562, 96
      %v2700 = vpop.permute.xlu0 %2699
      %2701 = vrot.lane.b32.xlu0 %v2563, 96
      %v2702 = vpop.permute.xlu0 %2701
      %2703 = vrot.lane.b32.xlu0 %v2564, 96
      %v2704 = vpop.permute.xlu0 %2703
      %2705 = vrot.lane.b32.xlu0 %v2565, 96
      %v2706 = vpop.permute.xlu0 %2705
      %2707 = vrot.lane.b32.xlu0 %v2566, 96
      %v2708 = vpop.permute.xlu0 %2707
      %2709 = vrot.lane.b32.xlu0 %v2567, 96
      %v2710 = vpop.permute.xlu0 %2709
      %2711 = vrot.lane.b32.xlu0 %v2568, 96
      %v2712 = vpop.permute.xlu0 %2711
      %2713 = vrot.lane.b32.xlu0 %v2569, 96
      %v2714 = vpop.permute.xlu0 %2713
      %2715 = vrot.lane.b32.xlu0 %v2570, 96
      %v2716 = vpop.permute.xlu0 %2715
      %2717 = vrot.lane.b32.xlu0 %v2571, 96
      %v2718 = vpop.permute.xlu0 %2717
      %2719 = vrot.lane.b32.xlu0 %v2572, 96
      %v2720 = vpop.permute.xlu0 %2719
      %2721 = vrot.lane.b32.xlu0 %v2573, 96
      %v2722 = vpop.permute.xlu0 %2721
      %2723 = vrot.lane.b32.xlu0 %v2574, 96
      %v2724 = vpop.permute.xlu0 %2723
      %2725 = vrot.lane.b32.xlu0 %v2575, 96
      %v2726 = vpop.permute.xlu0 %2725
      %2727 = vrot.lane.b32.xlu0 %v2576, 96
      %v2728 = vpop.permute.xlu0 %2727
      %2729 = vrot.lane.b32.xlu0 %v2577, 96
      %v2730 = vpop.permute.xlu0 %2729
      %2731 = vrot.lane.b32.xlu0 %v2578, 96
      %v2732 = vpop.permute.xlu0 %2731
      %2733 = vrot.lane.b32.xlu0 %v2579, 96
      %v2734 = vpop.permute.xlu0 %2733
      %2735 = vrot.lane.b32.xlu0 %v2580, 96
      %v2736 = vpop.permute.xlu0 %2735
      %2737 = vrot.lane.b32.xlu0 %v2581, 96
      %v2738 = vpop.permute.xlu0 %2737
      %2739 = vrot.lane.b32.xlu0 %v2582, 96
      %v2740 = vpop.permute.xlu0 %2739
      %2741 = vrot.lane.b32.xlu0 %v2583, 96
      %v2742 = vpop.permute.xlu0 %2741
      %2743 = vrot.lane.b32.xlu0 %v2584, 96
      %v2744 = vpop.permute.xlu0 %2743
      %2745 = vrot.lane.b32.xlu0 %v2585, 96
      %v2746 = vpop.permute.xlu0 %2745
      %2747 = vrot.lane.b32.xlu0 %v2586, 96
      %v2748 = vpop.permute.xlu0 %2747
      %2749 = vrot.lane.b32.xlu0 %v2587, 96
      %v2750 = vpop.permute.xlu0 %2749
      %2751 = vrot.lane.b32.xlu0 %v2588, 96
      %v2752 = vpop.permute.xlu0 %2751
      %2753 = vrot.lane.b32.xlu0 %v2589, 96
      %v2754 = vpop.permute.xlu0 %2753
      %2755 = vrot.lane.b32.xlu0 %v2590, 96
      %v2756 = vpop.permute.xlu0 %2755
      %2757 = vrot.lane.b32.xlu0 %v2591, 96
      %v2758 = vpop.permute.xlu0 %2757
      %2759 = vrot.lane.b32.xlu0 %v2592, 96
      %v2760 = vpop.permute.xlu0 %2759
      %2761 = vrot.lane.b32.xlu0 %v2593, 96
      %v2762 = vpop.permute.xlu0 %2761
      %2763 = vrot.lane.b32.xlu0 %v2594, 96
      %v2764 = vpop.permute.xlu0 %2763
      %2765 = vrot.lane.b32.xlu0 %v2595, 96
      %v2766 = vpop.permute.xlu0 %2765
      %2767 = vrot.lane.b32.xlu0 %v2596, 96
      %v2768 = vpop.permute.xlu0 %2767
      %2769 = vrot.lane.b32.xlu0 %v2597, 96
      %v2770 = vpop.permute.xlu0 %2769
      %2771 = vrot.lane.b32.xlu0 %v2598, 96
      %v2772 = vpop.permute.xlu0 %2771
      %2773 = vrot.lane.b32.xlu0 %v2599, 96
      %v2774 = vpop.permute.xlu0 %2773
      %2775 = vrot.lane.b32.xlu0 %v2600, 96
      %v2776 = vpop.permute.xlu0 %2775
      %2777 = vrot.lane.b32.xlu0 %v2601, 96
      %v2778 = vpop.permute.xlu0 %2777
      %2779 = vrot.lane.b32.xlu0 %v2602, 96
      %v2780 = vpop.permute.xlu0 %2779
      %2781 = vrot.lane.b32.xlu0 %v2603, 96
      %v2782 = vpop.permute.xlu0 %2781
      %2783 = vrot.lane.b32.xlu0 %v2604, 96
      %v2784 = vpop.permute.xlu0 %2783
      %2785 = vrot.lane.b32.xlu0 %v2605, 96
      %v2786 = vpop.permute.xlu0 %2785
      %2787 = vrot.lane.b32.xlu0 %v2606, 96
      %v2788 = vpop.permute.xlu0 %2787
      %2789 = vrot.lane.b32.xlu0 %v2607, 96
      %v2790 = vpop.permute.xlu0 %2789
      %2791 = vrot.lane.b32.xlu0 %v2608, 96
      %v2792 = vpop.permute.xlu0 %2791
      %2793 = vrot.lane.b32.xlu0 %v2609, 96
      %v2794 = vpop.permute.xlu0 %2793
      %2795 = vrot.lane.b32.xlu0 %v2610, 96
      %v2796 = vpop.permute.xlu0 %2795
      %2797 = vrot.lane.b32.xlu0 %v2611, 96
      %v2798 = vpop.permute.xlu0 %2797
      %2799 = vrot.lane.b32.xlu0 %v2612, 96
      %v2800 = vpop.permute.xlu0 %2799
      %2801 = vrot.lane.b32.xlu0 %v2613, 96
      %v2802 = vpop.permute.xlu0 %2801
      %2803 = vrot.lane.b32.xlu0 %v2614, 96
      %v2804 = vpop.permute.xlu0 %2803
      %2805 = vrot.lane.b32.xlu0 %v2615, 96
      %v2806 = vpop.permute.xlu0 %2805
      %2807 = vrot.lane.b32.xlu0 %v2616, 96
      %v2808 = vpop.permute.xlu0 %2807
      %vm2873 = vcmask 261120
      %v2874 = vsel %vm2873, %v2682, 0.0
      %v2875 = vsel %vm2873, %v2684, 0.0
      %v2876 = vadd.f32 %v2874, %v2875
      %v2877 = vsel %vm2873, %v2686, 0.0
      %v2878 = vadd.f32 %v2876, %v2877
      %v2879 = vsel %vm2873, %v2688, 0.0
      %v2880 = vadd.f32 %v2878, %v2879
      %v2881 = vsel %vm2873, %v2690, 0.0
      %v2882 = vadd.f32 %v2880, %v2881
      %v2883 = vsel %vm2873, %v2692, 0.0
      %v2884 = vadd.f32 %v2882, %v2883
      %v2885 = vsel %vm2873, %v2694, 0.0
      %v2886 = vadd.f32 %v2884, %v2885
      %v2887 = vsel %vm2873, %v2696, 0.0
      %v2888 = vadd.f32 %v2886, %v2887
      %v2889 = vsel %vm2873, %v2698, 0.0
      %v2890 = vadd.f32 %v2888, %v2889
      %v2891 = vsel %vm2873, %v2700, 0.0
      %v2892 = vadd.f32 %v2890, %v2891
      %v2893 = vsel %vm2873, %v2702, 0.0
      %v2894 = vadd.f32 %v2892, %v2893
      %v2895 = vsel %vm2873, %v2704, 0.0
      %v2896 = vadd.f32 %v2894, %v2895
      %v2897 = vsel %vm2873, %v2706, 0.0
      %v2898 = vadd.f32 %v2896, %v2897
      %v2899 = vsel %vm2873, %v2708, 0.0
      %v2900 = vadd.f32 %v2898, %v2899
      %v2901 = vsel %vm2873, %v2710, 0.0
      %v2902 = vadd.f32 %v2900, %v2901
      %v2903 = vsel %vm2873, %v2712, 0.0
      %v2904 = vadd.f32 %v2902, %v2903
      %v2905 = vsel %vm2873, %v2714, 0.0
      %v2906 = vadd.f32 %v2904, %v2905
      %v2907 = vsel %vm2873, %v2716, 0.0
      %v2908 = vadd.f32 %v2906, %v2907
      %v2909 = vsel %vm2873, %v2718, 0.0
      %v2910 = vadd.f32 %v2908, %v2909
      %v2911 = vsel %vm2873, %v2720, 0.0
      %v2912 = vadd.f32 %v2910, %v2911
      %v2913 = vsel %vm2873, %v2722, 0.0
      %v2914 = vadd.f32 %v2912, %v2913
      %v2915 = vsel %vm2873, %v2724, 0.0
      %v2916 = vadd.f32 %v2914, %v2915
      %v2917 = vsel %vm2873, %v2726, 0.0
      %v2918 = vadd.f32 %v2916, %v2917
      %v2919 = vsel %vm2873, %v2728, 0.0
      %v2920 = vadd.f32 %v2918, %v2919
      %v2921 = vsel %vm2873, %v2730, 0.0
      %v2922 = vadd.f32 %v2920, %v2921
      %v2923 = vsel %vm2873, %v2732, 0.0
      %v2924 = vadd.f32 %v2922, %v2923
      %v2925 = vsel %vm2873, %v2734, 0.0
      %v2926 = vadd.f32 %v2924, %v2925
      %v2927 = vsel %vm2873, %v2736, 0.0
      %v2928 = vadd.f32 %v2926, %v2927
      %v2929 = vsel %vm2873, %v2738, 0.0
      %v2930 = vadd.f32 %v2928, %v2929
      %v2931 = vsel %vm2873, %v2740, 0.0
      %v2932 = vadd.f32 %v2930, %v2931
      %v2933 = vsel %vm2873, %v2742, 0.0
      %v2934 = vadd.f32 %v2932, %v2933
      %v2935 = vsel %vm2873, %v2744, 0.0
      %v2936 = vadd.f32 %v2934, %v2935
      %v2937 = vsel %vm2873, %v2746, 0.0
      %v2938 = vadd.f32 %v2936, %v2937
      %v2939 = vsel %vm2873, %v2748, 0.0
      %v2940 = vadd.f32 %v2938, %v2939
      %v2941 = vsel %vm2873, %v2750, 0.0
      %v2942 = vadd.f32 %v2940, %v2941
      %v2943 = vsel %vm2873, %v2752, 0.0
      %v2944 = vadd.f32 %v2942, %v2943
      %v2945 = vsel %vm2873, %v2754, 0.0
      %v2946 = vadd.f32 %v2944, %v2945
      %v2947 = vsel %vm2873, %v2756, 0.0
      %v2948 = vadd.f32 %v2946, %v2947
      %v2949 = vsel %vm2873, %v2758, 0.0
      %v2950 = vadd.f32 %v2948, %v2949
      %v2951 = vsel %vm2873, %v2760, 0.0
      %v2952 = vadd.f32 %v2950, %v2951
      %v2953 = vsel %vm2873, %v2762, 0.0
      %v2954 = vadd.f32 %v2952, %v2953
      %v2955 = vsel %vm2873, %v2764, 0.0
      %v2956 = vadd.f32 %v2954, %v2955
      %v2957 = vsel %vm2873, %v2766, 0.0
      %v2958 = vadd.f32 %v2956, %v2957
      %v2959 = vsel %vm2873, %v2768, 0.0
      %v2960 = vadd.f32 %v2958, %v2959
      %v2961 = vsel %vm2873, %v2770, 0.0
      %v2962 = vadd.f32 %v2960, %v2961
      %v2963 = vsel %vm2873, %v2772, 0.0
      %v2964 = vadd.f32 %v2962, %v2963
      %v2965 = vsel %vm2873, %v2774, 0.0
      %v2966 = vadd.f32 %v2964, %v2965
      %v2967 = vsel %vm2873, %v2776, 0.0
      %v2968 = vadd.f32 %v2966, %v2967
      %v2969 = vsel %vm2873, %v2778, 0.0
      %v2970 = vadd.f32 %v2968, %v2969
      %v2971 = vsel %vm2873, %v2780, 0.0
      %v2972 = vadd.f32 %v2970, %v2971
      %v2973 = vsel %vm2873, %v2782, 0.0
      %v2974 = vadd.f32 %v2972, %v2973
      %v2975 = vsel %vm2873, %v2784, 0.0
      %v2976 = vadd.f32 %v2974, %v2975
      %v2977 = vsel %vm2873, %v2786, 0.0
      %v2978 = vadd.f32 %v2976, %v2977
      %v2979 = vsel %vm2873, %v2788, 0.0
      %v2980 = vadd.f32 %v2978, %v2979
      %v2981 = vsel %vm2873, %v2790, 0.0
      %v2982 = vadd.f32 %v2980, %v2981
      %v2983 = vsel %vm2873, %v2792, 0.0
      %v2984 = vadd.f32 %v2982, %v2983
      %v2985 = vsel %vm2873, %v2794, 0.0
      %v2986 = vadd.f32 %v2984, %v2985
      %v2987 = vsel %vm2873, %v2796, 0.0
      %v2988 = vadd.f32 %v2986, %v2987
      %v2989 = vsel %vm2873, %v2798, 0.0
      %v2990 = vadd.f32 %v2988, %v2989
      %v2991 = vsel %vm2873, %v2800, 0.0
      %v2992 = vadd.f32 %v2990, %v2991
      %v2993 = vsel %vm2873, %v2802, 0.0
      %v2994 = vadd.f32 %v2992, %v2993
      %v2995 = vsel %vm2873, %v2804, 0.0
      %v2996 = vadd.f32 %v2994, %v2995
      %v2997 = vsel %vm2873, %v2806, 0.0
      %v2998 = vadd.f32 %v2996, %v2997
      %v2999 = vsel %vm2873, %v2808, 0.0
      %v3000 = vadd.f32 %v2998, %v2999
      %3001 = vadd.xlane.f32.xlu0 %v3000
      %v3002 = vpop.xlane.xlu0 %3001
      %v3003 = vrot.slane %v3002, 4
      %v3004 = vadd.f32 %v3002, %v3003
      %v3005 = vrot.slane %v3004, 2
      %v3006 = vadd.f32 %v3004, %v3005
      %v3007 = vrot.slane %v3006, 1
      %v3008 = vadd.f32 %v3006, %v3007
      %s3009 = vtos %v3008
      %v3010 = vstv %s3009
      %v3011 = vpack.c.bf16 %v1658, %v1657
      %v3012 = vpack.c.bf16 %v1660, %v1659
      %v3013 = vpack.c.bf16 %v1662, %v1661
      %v3014 = vpack.c.bf16 %v1664, %v1663
      %v3015 = vpack.c.bf16 %v1666, %v1665
      %v3016 = vpack.c.bf16 %v1668, %v1667
      %v3017 = vpack.c.bf16 %v1670, %v1669
      %v3018 = vpack.c.bf16 %v1672, %v1671
      %v3019 = vpack.c.bf16 %v1674, %v1673
      %v3020 = vpack.c.bf16 %v1676, %v1675
      %v3021 = vpack.c.bf16 %v1678, %v1677
      %v3022 = vpack.c.bf16 %v1680, %v1679
      %v3023 = vpack.c.bf16 %v1682, %v1681
      %v3024 = vpack.c.bf16 %v1684, %v1683
      %v3025 = vpack.c.bf16 %v1686, %v1685
      %v3026 = vpack.c.bf16 %v1688, %v1687
      %v3027 = vpack.c.bf16 %v1690, %v1689
      %v3028 = vpack.c.bf16 %v1692, %v1691
      %v3029 = vpack.c.bf16 %v1694, %v1693
      %v3030 = vpack.c.bf16 %v1696, %v1695
      %v3031 = vpack.c.bf16 %v1698, %v1697
      %v3032 = vpack.c.bf16 %v1700, %v1699
      %v3033 = vpack.c.bf16 %v1702, %v1701
      %v3034 = vpack.c.bf16 %v1704, %v1703
      %v3035 = vpack.c.bf16 %v1706, %v1705
      %v3036 = vpack.c.bf16 %v1708, %v1707
      %v3037 = vpack.c.bf16 %v1710, %v1709
      %v3038 = vpack.c.bf16 %v1712, %v1711
      %v3039 = vpack.c.bf16 %v1714, %v1713
      %v3040 = vpack.c.bf16 %v1716, %v1715
      %v3041 = vpack.c.bf16 %v1718, %v1717
      %v3042 = vpack.c.bf16 %v1720, %v1719
      %v3043 = vld [vmem:[%s4] sm:$0xf]
      %v3044 = vld [vmem:[%s4 + $0x4] sm:$0xf]
      %v3045 = vld [vmem:[%s4 + $0x8] sm:$0xf]
      %v3046 = vld [vmem:[%s4 + $0xc] sm:$0xf]
      %v3047 = vld [vmem:[%s5] sm:$0x1]
      %v3049 = vlaneseq
      %v3050 = vshrl.u32 %v3049, 7
      %v3051 = vsub.s32 0, %v3050
      %v3052 = vrot.slane %v3047, %v3051
      %v3058 = vunpack.c.l.b16 %v3043
      %v3059 = vunpack.c.l.b16 %v3044
      %v3060 = vunpack.c.l.b16 %v3045
      %v3061 = vunpack.c.l.b16 %v3046
      %v3062 = vpack.c.b16 %v3059, %v3058
      %v3063 = vpack.c.b16 %v3061, %v3060
      %v3067 = vsel %vm2873, %v3011, 0
      %v3070 = vsel %vm2873, %v3012, 0
      %v3073 = vsel %vm2873, %v3013, 0
      %v3076 = vsel %vm2873, %v3014, 0
      %v3079 = vsel %vm2873, %v3015, 0
      %v3082 = vsel %vm2873, %v3016, 0
      %v3085 = vsel %vm2873, %v3017, 0
      %v3088 = vsel %vm2873, %v3018, 0
      %v3091 = vsel %vm2873, %v3019, 0
      %v3094 = vsel %vm2873, %v3020, 0
      %v3097 = vsel %vm2873, %v3021, 0
      %v3100 = vsel %vm2873, %v3022, 0
      %v3103 = vsel %vm2873, %v3023, 0
      %v3106 = vsel %vm2873, %v3024, 0
      %v3109 = vsel %vm2873, %v3025, 0
      %v3112 = vsel %vm2873, %v3026, 0
      %v3115 = vsel %vm2873, %v3027, 0
      %v3118 = vsel %vm2873, %v3028, 0
      %v3121 = vsel %vm2873, %v3029, 0
      %v3124 = vsel %vm2873, %v3030, 0
      %v3127 = vsel %vm2873, %v3031, 0
      %v3130 = vsel %vm2873, %v3032, 0
      %v3133 = vsel %vm2873, %v3033, 0
      %v3136 = vsel %vm2873, %v3034, 0
      %v3139 = vsel %vm2873, %v3035, 0
      %v3142 = vsel %vm2873, %v3036, 0
      %v3145 = vsel %vm2873, %v3037, 0
      %v3148 = vsel %vm2873, %v3038, 0
      %v3151 = vsel %vm2873, %v3039, 0
      %v3154 = vsel %vm2873, %v3040, 0
      %v3157 = vsel %vm2873, %v3041, 0
      %v3160 = vsel %vm2873, %v3042, 0
      %3162 = vmatprep.subr.bf16.mxu0 0
      %3163 = vmatpush1.bf16.msra.mxu0 %v3062
      %3164 = vmatprep.subr.bf16.mxu0 0
      %3165 = vmatpush1.bf16.msra.mxu0 %v3063
      %3166 = vmatprep.subr.bf16.mxu0 0
      %3167 = vmatpush1.bf16.msra.mxu0 0
      %3168 = vmatprep.subr.bf16.mxu0 0
      %3169 = vmatpush1.bf16.msra.mxu0 0
      %3170 = vmatprep.subr.bf16.mxu0 0
      %3171 = vmatpush1.bf16.msra.mxu0 0
      %3172 = vmatprep.subr.bf16.mxu0 0
      %3173 = vmatpush1.bf16.msra.mxu0 0
      %3174 = vmatprep.subr.bf16.mxu0 0
      %3175 = vmatpush1.bf16.msra.mxu0 0
      %3176 = vmatprep.subr.bf16.mxu0 0
      %3177 = vmatpush1.bf16.msra.mxu0 0
      %3178 = vmatprep.subr.bf16.mxu0 0
      %3179 = vmatpush1.bf16.msra.mxu0 0
      %3180 = vmatprep.subr.bf16.mxu0 0
      %3181 = vmatpush1.bf16.msra.mxu0 0
      %3182 = vmatprep.subr.bf16.mxu0 0
      %3183 = vmatpush1.bf16.msra.mxu0 0
      %3184 = vmatprep.subr.bf16.mxu0 0
      %3185 = vmatpush1.bf16.msra.mxu0 0
      %3186 = vmatprep.subr.bf16.mxu0 0
      %3187 = vmatpush1.bf16.msra.mxu0 0
      %3188 = vmatprep.subr.bf16.mxu0 0
      %3189 = vmatpush1.bf16.msra.mxu0 0
      %3190 = vmatprep.subr.bf16.mxu0 0
      %3191 = vmatpush1.bf16.msra.mxu0 0
      %3192 = vmatprep.subr.bf16.mxu0 0
      %3193 = vmatpush1.bf16.msra.mxu0 0
      %3194 = vmatprep.mubr.bf16.mxu0 0
      %3195 = vmatmul.mubr.bf16.gmra.mrb[0].mxu0 %v3067
      %v3196 = vpop.f32.mrb[0].mxu0
      %v3197 = vadd.f32 %v3052, %v3196
      %v3198 = vpop.f32.mrb[0].mxu0
      %v3199 = vpop.f32.mrb[0].mxu0
      %v3200 = vadd.f32 %v3052, %v3199
      %v3201 = vpop.f32.mrb[0].mxu0
      %3202 = vmatprep.mubr.bf16.mxu0 0
      %3203 = vmatmul.mubr.bf16.gmra.mrb[0].mxu0 %v3070
      %v3204 = vpop.f32.mrb[0].mxu0
      %v3205 = vadd.f32 %v3052, %v3204
      %v3206 = vpop.f32.mrb[0].mxu0
      %v3207 = vpop.f32.mrb[0].mxu0
      %v3208 = vadd.f32 %v3052, %v3207
      %v3209 = vpop.f32.mrb[0].mxu0
      %3210 = vmatprep.mubr.bf16.mxu0 0
      %3211 = vmatmul.mubr.bf16.gmra.mrb[0].mxu0 %v3073
      %v3212 = vpop.f32.mrb[0].mxu0
      %v3213 = vadd.f32 %v3052, %v3212
      %v3214 = vpop.f32.mrb[0].mxu0
      %v3215 = vpop.f32.mrb[0].mxu0
      %v3216 = vadd.f32 %v3052, %v3215
      %v3217 = vpop.f32.mrb[0].mxu0
      %3218 = vmatprep.mubr.bf16.mxu0 0
      %3219 = vmatmul.mubr.bf16.gmra.mrb[0].mxu0 %v3076
      %v3220 = vpop.f32.mrb[0].mxu0
      %v3221 = vadd.f32 %v3052, %v3220
      %v3222 = vpop.f32.mrb[0].mxu0
      %v3223 = vpop.f32.mrb[0].mxu0
      %v3224 = vadd.f32 %v3052, %v3223
      %v3225 = vpop.f32.mrb[0].mxu0
      %3226 = vmatprep.mubr.bf16.mxu0 0
      %3227 = vmatmul.mubr.bf16.gmra.mrb[0].mxu0 %v3079
      %v3228 = vpop.f32.mrb[0].mxu0
      %v3229 = vadd.f32 %v3052, %v3228
      %v3230 = vpop.f32.mrb[0].mxu0
      %v3231 = vpop.f32.mrb[0].mxu0
      %v3232 = vadd.f32 %v3052, %v3231
      %v3233 = vpop.f32.mrb[0].mxu0
      %3234 = vmatprep.mubr.bf16.mxu0 0
      %3235 = vmatmul.mubr.bf16.gmra.mrb[0].mxu0 %v3082
      %v3236 = vpop.f32.mrb[0].mxu0
      %v3237 = vadd.f32 %v3052, %v3236
      %v3238 = vpop.f32.mrb[0].mxu0
      %v3239 = vpop.f32.mrb[0].mxu0
      %v3240 = vadd.f32 %v3052, %v3239
      %v3241 = vpop.f32.mrb[0].mxu0
      %3242 = vmatprep.mubr.bf16.mxu0 0
      %3243 = vmatmul.mubr.bf16.gmra.mrb[0].mxu0 %v3085
      %v3244 = vpop.f32.mrb[0].mxu0
      %v3245 = vadd.f32 %v3052, %v3244
      %v3246 = vpop.f32.mrb[0].mxu0
      %v3247 = vpop.f32.mrb[0].mxu0
      %v3248 = vadd.f32 %v3052, %v3247
      %v3249 = vpop.f32.mrb[0].mxu0
      %3250 = vmatprep.mubr.bf16.mxu0 0
      %3251 = vmatmul.mubr.bf16.gmra.mrb[0].mxu0 %v3088
      %v3252 = vpop.f32.mrb[0].mxu0
      %v3253 = vadd.f32 %v3052, %v3252
      %v3254 = vpop.f32.mrb[0].mxu0
      %v3255 = vpop.f32.mrb[0].mxu0
      %v3256 = vadd.f32 %v3052, %v3255
      %v3257 = vpop.f32.mrb[0].mxu0
      %3258 = vmatprep.mubr.bf16.mxu0 0
      %3259 = vmatmul.mubr.bf16.gmra.mrb[0].mxu0 %v3091
      %v3260 = vpop.f32.mrb[0].mxu0
      %v3261 = vadd.f32 %v3052, %v3260
      %v3262 = vpop.f32.mrb[0].mxu0
      %v3263 = vpop.f32.mrb[0].mxu0
      %v3264 = vadd.f32 %v3052, %v3263
      %v3265 = vpop.f32.mrb[0].mxu0
      %3266 = vmatprep.mubr.bf16.mxu0 0
      %3267 = vmatmul.mubr.bf16.gmra.mrb[0].mxu0 %v3094
      %v3268 = vpop.f32.mrb[0].mxu0
      %v3269 = vadd.f32 %v3052, %v3268
      %v3270 = vpop.f32.mrb[0].mxu0
      %v3271 = vpop.f32.mrb[0].mxu0
      %v3272 = vadd.f32 %v3052, %v3271
      %v3273 = vpop.f32.mrb[0].mxu0
      %3274 = vmatprep.mubr.bf16.mxu0 0
      %3275 = vmatmul.mubr.bf16.gmra.mrb[0].mxu0 %v3097
      %v3276 = vpop.f32.mrb[0].mxu0
      %v3277 = vadd.f32 %v3052, %v3276
      %v3278 = vpop.f32.mrb[0].mxu0
      %v3279 = vpop.f32.mrb[0].mxu0
      %v3280 = vadd.f32 %v3052, %v3279
      %v3281 = vpop.f32.mrb[0].mxu0
      %3282 = vmatprep.mubr.bf16.mxu0 0
      %3283 = vmatmul.mubr.bf16.gmra.mrb[0].mxu0 %v3100
      %v3284 = vpop.f32.mrb[0].mxu0
      %v3285 = vadd.f32 %v3052, %v3284
      %v3286 = vpop.f32.mrb[0].mxu0
      %v3287 = vpop.f32.mrb[0].mxu0
      %v3288 = vadd.f32 %v3052, %v3287
      %v3289 = vpop.f32.mrb[0].mxu0
      %3290 = vmatprep.mubr.bf16.mxu0 0
      %3291 = vmatmul.mubr.bf16.gmra.mrb[0].mxu0 %v3103
      %v3292 = vpop.f32.mrb[0].mxu0
      %v3293 = vadd.f32 %v3052, %v3292
      %v3294 = vpop.f32.mrb[0].mxu0
      %v3295 = vpop.f32.mrb[0].mxu0
      %v3296 = vadd.f32 %v3052, %v3295
      %v3297 = vpop.f32.mrb[0].mxu0
      %3298 = vmatprep.mubr.bf16.mxu0 0
      %3299 = vmatmul.mubr.bf16.gmra.mrb[0].mxu0 %v3106
      %v3300 = vpop.f32.mrb[0].mxu0
      %v3301 = vadd.f32 %v3052, %v3300
      %v3302 = vpop.f32.mrb[0].mxu0
      %v3303 = vpop.f32.mrb[0].mxu0
      %v3304 = vadd.f32 %v3052, %v3303
      %v3305 = vpop.f32.mrb[0].mxu0
      %3306 = vmatprep.mubr.bf16.mxu0 0
      %3307 = vmatmul.mubr.bf16.gmra.mrb[0].mxu0 %v3109
      %v3308 = vpop.f32.mrb[0].mxu0
      %v3309 = vadd.f32 %v3052, %v3308
      %v3310 = vpop.f32.mrb[0].mxu0
      %v3311 = vpop.f32.mrb[0].mxu0
      %v3312 = vadd.f32 %v3052, %v3311
      %v3313 = vpop.f32.mrb[0].mxu0
      %3314 = vmatprep.mubr.bf16.mxu0 0
      %3315 = vmatmul.mubr.bf16.gmra.mrb[0].mxu0 %v3112
      %v3316 = vpop.f32.mrb[0].mxu0
      %v3317 = vadd.f32 %v3052, %v3316
      %v3318 = vpop.f32.mrb[0].mxu0
      %v3319 = vpop.f32.mrb[0].mxu0
      %v3320 = vadd.f32 %v3052, %v3319
      %v3321 = vpop.f32.mrb[0].mxu0
      %3322 = vmatprep.mubr.bf16.mxu0 0
      %3323 = vmatmul.mubr.bf16.gmra.mrb[0].mxu0 %v3115
      %v3324 = vpop.f32.mrb[0].mxu0
      %v3325 = vadd.f32 %v3052, %v3324
      %v3326 = vpop.f32.mrb[0].mxu0
      %v3327 = vpop.f32.mrb[0].mxu0
      %v3328 = vadd.f32 %v3052, %v3327
      %v3329 = vpop.f32.mrb[0].mxu0
      %3330 = vmatprep.mubr.bf16.mxu0 0
      %3331 = vmatmul.mubr.bf16.gmra.mrb[0].mxu0 %v3118
      %v3332 = vpop.f32.mrb[0].mxu0
      %v3333 = vadd.f32 %v3052, %v3332
      %v3334 = vpop.f32.mrb[0].mxu0
      %v3335 = vpop.f32.mrb[0].mxu0
      %v3336 = vadd.f32 %v3052, %v3335
      %v3337 = vpop.f32.mrb[0].mxu0
      %3338 = vmatprep.mubr.bf16.mxu0 0
      %3339 = vmatmul.mubr.bf16.gmra.mrb[0].mxu0 %v3121
      %v3340 = vpop.f32.mrb[0].mxu0
      %v3341 = vadd.f32 %v3052, %v3340
      %v3342 = vpop.f32.mrb[0].mxu0
      %v3343 = vpop.f32.mrb[0].mxu0
      %v3344 = vadd.f32 %v3052, %v3343
      %v3345 = vpop.f32.mrb[0].mxu0
      %3346 = vmatprep.mubr.bf16.mxu0 0
      %3347 = vmatmul.mubr.bf16.gmra.mrb[0].mxu0 %v3124
      %v3348 = vpop.f32.mrb[0].mxu0
      %v3349 = vadd.f32 %v3052, %v3348
      %v3350 = vpop.f32.mrb[0].mxu0
      %v3351 = vpop.f32.mrb[0].mxu0
      %v3352 = vadd.f32 %v3052, %v3351
      %v3353 = vpop.f32.mrb[0].mxu0
      %3354 = vmatprep.mubr.bf16.mxu0 0
      %3355 = vmatmul.mubr.bf16.gmra.mrb[0].mxu0 %v3127
      %v3356 = vpop.f32.mrb[0].mxu0
      %v3357 = vadd.f32 %v3052, %v3356
      %v3358 = vpop.f32.mrb[0].mxu0
      %v3359 = vpop.f32.mrb[0].mxu0
      %v3360 = vadd.f32 %v3052, %v3359
      %v3361 = vpop.f32.mrb[0].mxu0
      %3362 = vmatprep.mubr.bf16.mxu0 0
      %3363 = vmatmul.mubr.bf16.gmra.mrb[0].mxu0 %v3130
      %v3364 = vpop.f32.mrb[0].mxu0
      %v3365 = vadd.f32 %v3052, %v3364
      %v3366 = vpop.f32.mrb[0].mxu0
      %v3367 = vpop.f32.mrb[0].mxu0
      %v3368 = vadd.f32 %v3052, %v3367
      %v3369 = vpop.f32.mrb[0].mxu0
      %3370 = vmatprep.mubr.bf16.mxu0 0
      %3371 = vmatmul.mubr.bf16.gmra.mrb[0].mxu0 %v3133
      %v3372 = vpop.f32.mrb[0].mxu0
      %v3373 = vadd.f32 %v3052, %v3372
      %v3374 = vpop.f32.mrb[0].mxu0
      %v3375 = vpop.f32.mrb[0].mxu0
      %v3376 = vadd.f32 %v3052, %v3375
      %v3377 = vpop.f32.mrb[0].mxu0
      %3378 = vmatprep.mubr.bf16.mxu0 0
      %3379 = vmatmul.mubr.bf16.gmra.mrb[0].mxu0 %v3136
      %v3380 = vpop.f32.mrb[0].mxu0
      %v3381 = vadd.f32 %v3052, %v3380
      %v3382 = vpop.f32.mrb[0].mxu0
      %v3383 = vpop.f32.mrb[0].mxu0
      %v3384 = vadd.f32 %v3052, %v3383
      %v3385 = vpop.f32.mrb[0].mxu0
      %3386 = vmatprep.mubr.bf16.mxu0 0
      %3387 = vmatmul.mubr.bf16.gmra.mrb[0].mxu0 %v3139
      %v3388 = vpop.f32.mrb[0].mxu0
      %v3389 = vadd.f32 %v3052, %v3388
      %v3390 = vpop.f32.mrb[0].mxu0
      %v3391 = vpop.f32.mrb[0].mxu0
      %v3392 = vadd.f32 %v3052, %v3391
      %v3393 = vpop.f32.mrb[0].mxu0
      %3394 = vmatprep.mubr.bf16.mxu0 0
      %3395 = vmatmul.mubr.bf16.gmra.mrb[0].mxu0 %v3142
      %v3396 = vpop.f32.mrb[0].mxu0
      %v3397 = vadd.f32 %v3052, %v3396
      %v3398 = vpop.f32.mrb[0].mxu0
      %v3399 = vpop.f32.mrb[0].mxu0
      %v3400 = vadd.f32 %v3052, %v3399
      %v3401 = vpop.f32.mrb[0].mxu0
      %3402 = vmatprep.mubr.bf16.mxu0 0
      %3403 = vmatmul.mubr.bf16.gmra.mrb[0].mxu0 %v3145
      %v3404 = vpop.f32.mrb[0].mxu0
      %v3405 = vadd.f32 %v3052, %v3404
      %v3406 = vpop.f32.mrb[0].mxu0
      %v3407 = vpop.f32.mrb[0].mxu0
      %v3408 = vadd.f32 %v3052, %v3407
      %v3409 = vpop.f32.mrb[0].mxu0
      %3410 = vmatprep.mubr.bf16.mxu0 0
      %3411 = vmatmul.mubr.bf16.gmra.mrb[0].mxu0 %v3148
      %v3412 = vpop.f32.mrb[0].mxu0
      %v3413 = vadd.f32 %v3052, %v3412
      %v3414 = vpop.f32.mrb[0].mxu0
      %v3415 = vpop.f32.mrb[0].mxu0
      %v3416 = vadd.f32 %v3052, %v3415
      %v3417 = vpop.f32.mrb[0].mxu0
      %3418 = vmatprep.mubr.bf16.mxu0 0
      %3419 = vmatmul.mubr.bf16.gmra.mrb[0].mxu0 %v3151
      %v3420 = vpop.f32.mrb[0].mxu0
      %v3421 = vadd.f32 %v3052, %v3420
      %v3422 = vpop.f32.mrb[0].mxu0
      %v3423 = vpop.f32.mrb[0].mxu0
      %v3424 = vadd.f32 %v3052, %v3423
      %v3425 = vpop.f32.mrb[0].mxu0
      %3426 = vmatprep.mubr.bf16.mxu0 0
      %3427 = vmatmul.mubr.bf16.gmra.mrb[0].mxu0 %v3154
      %v3428 = vpop.f32.mrb[0].mxu0
      %v3429 = vadd.f32 %v3052, %v3428
      %v3430 = vpop.f32.mrb[0].mxu0
      %v3431 = vpop.f32.mrb[0].mxu0
      %v3432 = vadd.f32 %v3052, %v3431
      %v3433 = vpop.f32.mrb[0].mxu0
      %3434 = vmatprep.mubr.bf16.mxu0 0
      %3435 = vmatmul.mubr.bf16.gmra.mrb[0].mxu0 %v3157
      %v3436 = vpop.f32.mrb[0].mxu0
      %v3437 = vadd.f32 %v3052, %v3436
      %v3438 = vpop.f32.mrb[0].mxu0
      %v3439 = vpop.f32.mrb[0].mxu0
      %v3440 = vadd.f32 %v3052, %v3439
      %v3441 = vpop.f32.mrb[0].mxu0
      %3442 = vmatprep.mubr.bf16.mxu0 0
      %3443 = vmatmul.mubr.bf16.gmra.mrb[0].mxu0 %v3160
      %v3444 = vpop.f32.mrb[0].mxu0
      %v3445 = vadd.f32 %v3052, %v3444
      %v3446 = vpop.f32.mrb[0].mxu0
      %v3447 = vpop.f32.mrb[0].mxu0
      %v3448 = vadd.f32 %v3052, %v3447
      %v3449 = vpop.f32.mrb[0].mxu0
      %3450 = vdwg.mxu0
      %v3451 = vunpack.c.l.bf16 %v273
      %v3452 = vunpack.c.l.bf16 %v274
      %v3453 = vunpack.c.l.bf16 %v275
      %v3454 = vunpack.c.l.bf16 %v276
      %v3455 = vunpack.c.l.bf16 %v277
      %v3456 = vunpack.c.l.bf16 %v278
      %v3457 = vunpack.c.l.bf16 %v279
      %v3458 = vunpack.c.l.bf16 %v280
      %v3459 = vunpack.c.l.bf16 %v281
      %v3460 = vunpack.c.l.bf16 %v282
      %v3461 = vunpack.c.l.bf16 %v283
      %v3462 = vunpack.c.l.bf16 %v284
      %v3463 = vunpack.c.l.bf16 %v285
      %v3464 = vunpack.c.l.bf16 %v286
      %v3465 = vunpack.c.l.bf16 %v287
      %v3466 = vunpack.c.l.bf16 %v288
      %v3467 = vunpack.c.l.bf16 %v289
      %v3468 = vunpack.c.l.bf16 %v290
      %v3469 = vunpack.c.l.bf16 %v291
      %v3470 = vunpack.c.l.bf16 %v292
      %v3471 = vunpack.c.l.bf16 %v293
      %v3472 = vunpack.c.l.bf16 %v294
      %v3473 = vunpack.c.l.bf16 %v295
      %v3474 = vunpack.c.l.bf16 %v296
      %v3475 = vunpack.c.l.bf16 %v297
      %v3476 = vunpack.c.l.bf16 %v298
      %v3477 = vunpack.c.l.bf16 %v299
      %v3478 = vunpack.c.l.bf16 %v300
      %v3479 = vunpack.c.l.bf16 %v301
      %v3480 = vunpack.c.l.bf16 %v302
      %v3481 = vunpack.c.l.bf16 %v303
      %v3482 = vunpack.c.l.bf16 %v304
      %v3483 = vunpack.c.l.bf16 %v305
      %v3484 = vunpack.c.l.bf16 %v306
      %v3485 = vunpack.c.l.bf16 %v307
      %v3486 = vunpack.c.l.bf16 %v308
      %v3487 = vunpack.c.l.bf16 %v309
      %v3488 = vunpack.c.l.bf16 %v310
      %v3489 = vunpack.c.l.bf16 %v311
      %v3490 = vunpack.c.l.bf16 %v312
      %v3491 = vunpack.c.l.bf16 %v313
      %v3492 = vunpack.c.l.bf16 %v314
      %v3493 = vunpack.c.l.bf16 %v315
      %v3494 = vunpack.c.l.bf16 %v316
      %v3495 = vunpack.c.l.bf16 %v317
      %v3496 = vunpack.c.l.bf16 %v318
      %v3497 = vunpack.c.l.bf16 %v319
      %v3498 = vunpack.c.l.bf16 %v320
      %v3499 = vunpack.c.l.bf16 %v321
      %v3500 = vunpack.c.l.bf16 %v322
      %v3501 = vunpack.c.l.bf16 %v323
      %v3502 = vunpack.c.l.bf16 %v324
      %v3503 = vunpack.c.l.bf16 %v325
      %v3504 = vunpack.c.l.bf16 %v326
      %v3505 = vunpack.c.l.bf16 %v327
      %v3506 = vunpack.c.l.bf16 %v328
      %v3507 = vunpack.c.l.bf16 %v329
      %v3508 = vunpack.c.l.bf16 %v330
      %v3509 = vunpack.c.l.bf16 %v331
      %v3510 = vunpack.c.l.bf16 %v332
      %v3511 = vunpack.c.l.bf16 %v333
      %v3512 = vunpack.c.l.bf16 %v334
      %v3513 = vunpack.c.l.bf16 %v335
      %v3514 = vunpack.c.l.bf16 %v336
      %v3515 = vmul.f32 %v3451, %v3197
      %v3516 = vmul.f32 %v3452, %v3200
      %v3517 = vmul.f32 %v3453, %v3205
      %v3518 = vmul.f32 %v3454, %v3208
      %v3519 = vmul.f32 %v3455, %v3213
      %v3520 = vmul.f32 %v3456, %v3216
      %v3521 = vmul.f32 %v3457, %v3221
      %v3522 = vmul.f32 %v3458, %v3224
      %v3523 = vmul.f32 %v3459, %v3229
      %v3524 = vmul.f32 %v3460, %v3232
      %v3525 = vmul.f32 %v3461, %v3237
      %v3526 = vmul.f32 %v3462, %v3240
      %v3527 = vmul.f32 %v3463, %v3245
      %v3528 = vmul.f32 %v3464, %v3248
      %v3529 = vmul.f32 %v3465, %v3253
      %v3530 = vmul.f32 %v3466, %v3256
      %v3531 = vmul.f32 %v3467, %v3261
      %v3532 = vmul.f32 %v3468, %v3264
      %v3533 = vmul.f32 %v3469, %v3269
      %v3534 = vmul.f32 %v3470, %v3272
      %v3535 = vmul.f32 %v3471, %v3277
      %v3536 = vmul.f32 %v3472, %v3280
      %v3537 = vmul.f32 %v3473, %v3285
      %v3538 = vmul.f32 %v3474, %v3288
      %v3539 = vmul.f32 %v3475, %v3293
      %v3540 = vmul.f32 %v3476, %v3296
      %v3541 = vmul.f32 %v3477, %v3301
      %v3542 = vmul.f32 %v3478, %v3304
      %v3543 = vmul.f32 %v3479, %v3309
      %v3544 = vmul.f32 %v3480, %v3312
      %v3545 = vmul.f32 %v3481, %v3317
      %v3546 = vmul.f32 %v3482, %v3320
      %v3547 = vmul.f32 %v3483, %v3325
      %v3548 = vmul.f32 %v3484, %v3328
      %v3549 = vmul.f32 %v3485, %v3333
      %v3550 = vmul.f32 %v3486, %v3336
      %v3551 = vmul.f32 %v3487, %v3341
      %v3552 = vmul.f32 %v3488, %v3344
      %v3553 = vmul.f32 %v3489, %v3349
      %v3554 = vmul.f32 %v3490, %v3352
      %v3555 = vmul.f32 %v3491, %v3357
      %v3556 = vmul.f32 %v3492, %v3360
      %v3557 = vmul.f32 %v3493, %v3365
      %v3558 = vmul.f32 %v3494, %v3368
      %v3559 = vmul.f32 %v3495, %v3373
      %v3560 = vmul.f32 %v3496, %v3376
      %v3561 = vmul.f32 %v3497, %v3381
      %v3562 = vmul.f32 %v3498, %v3384
      %v3563 = vmul.f32 %v3499, %v3389
      %v3564 = vmul.f32 %v3500, %v3392
      %v3565 = vmul.f32 %v3501, %v3397
      %v3566 = vmul.f32 %v3502, %v3400
      %v3567 = vmul.f32 %v3503, %v3405
      %v3568 = vmul.f32 %v3504, %v3408
      %v3569 = vmul.f32 %v3505, %v3413
      %v3570 = vmul.f32 %v3506, %v3416
      %v3571 = vmul.f32 %v3507, %v3421
      %v3572 = vmul.f32 %v3508, %v3424
      %v3573 = vmul.f32 %v3509, %v3429
      %v3574 = vmul.f32 %v3510, %v3432
      %v3575 = vmul.f32 %v3511, %v3437
      %v3576 = vmul.f32 %v3512, %v3440
      %v3577 = vmul.f32 %v3513, %v3445
      %v3578 = vmul.f32 %v3514, %v3448
      %v3579 = vmax.f32 %v3197, 0.0
      %v3580 = vmax.f32 %v3200, 0.0
      %v3581 = vmax.f32 %v3205, 0.0
      %v3582 = vmax.f32 %v3208, 0.0
      %v3583 = vmax.f32 %v3213, 0.0
      %v3584 = vmax.f32 %v3216, 0.0
      %v3585 = vmax.f32 %v3221, 0.0
      %v3586 = vmax.f32 %v3224, 0.0
      %v3587 = vmax.f32 %v3229, 0.0
      %v3588 = vmax.f32 %v3232, 0.0
      %v3589 = vmax.f32 %v3237, 0.0
      %v3590 = vmax.f32 %v3240, 0.0
      %v3591 = vmax.f32 %v3245, 0.0
      %v3592 = vmax.f32 %v3248, 0.0
      %v3593 = vmax.f32 %v3253, 0.0
      %v3594 = vmax.f32 %v3256, 0.0
      %v3595 = vmax.f32 %v3261, 0.0
      %v3596 = vmax.f32 %v3264, 0.0
      %v3597 = vmax.f32 %v3269, 0.0
      %v3598 = vmax.f32 %v3272, 0.0
      %v3599 = vmax.f32 %v3277, 0.0
      %v3600 = vmax.f32 %v3280, 0.0
      %v3601 = vmax.f32 %v3285, 0.0
      %v3602 = vmax.f32 %v3288, 0.0
      %v3603 = vmax.f32 %v3293, 0.0
      %v3604 = vmax.f32 %v3296, 0.0
      %v3605 = vmax.f32 %v3301, 0.0
      %v3606 = vmax.f32 %v3304, 0.0
      %v3607 = vmax.f32 %v3309, 0.0
      %v3608 = vmax.f32 %v3312, 0.0
      %v3609 = vmax.f32 %v3317, 0.0
      %v3610 = vmax.f32 %v3320, 0.0
      %v3611 = vmax.f32 %v3325, 0.0
      %v3612 = vmax.f32 %v3328, 0.0
      %v3613 = vmax.f32 %v3333, 0.0
      %v3614 = vmax.f32 %v3336, 0.0
      %v3615 = vmax.f32 %v3341, 0.0
      %v3616 = vmax.f32 %v3344, 0.0
      %v3617 = vmax.f32 %v3349, 0.0
      %v3618 = vmax.f32 %v3352, 0.0
      %v3619 = vmax.f32 %v3357, 0.0
      %v3620 = vmax.f32 %v3360, 0.0
      %v3621 = vmax.f32 %v3365, 0.0
      %v3622 = vmax.f32 %v3368, 0.0
      %v3623 = vmax.f32 %v3373, 0.0
      %v3624 = vmax.f32 %v3376, 0.0
      %v3625 = vmax.f32 %v3381, 0.0
      %v3626 = vmax.f32 %v3384, 0.0
      %v3627 = vmax.f32 %v3389, 0.0
      %v3628 = vmax.f32 %v3392, 0.0
      %v3629 = vmax.f32 %v3397, 0.0
      %v3630 = vmax.f32 %v3400, 0.0
      %v3631 = vmax.f32 %v3405, 0.0
      %v3632 = vmax.f32 %v3408, 0.0
      %v3633 = vmax.f32 %v3413, 0.0
      %v3634 = vmax.f32 %v3416, 0.0
      %v3635 = vmax.f32 %v3421, 0.0
      %v3636 = vmax.f32 %v3424, 0.0
      %v3637 = vmax.f32 %v3429, 0.0
      %v3638 = vmax.f32 %v3432, 0.0
      %v3639 = vmax.f32 %v3437, 0.0
      %v3640 = vmax.f32 %v3440, 0.0
      %v3641 = vmax.f32 %v3445, 0.0
      %v3642 = vmax.f32 %v3448, 0.0
      %vm3643 = vcmp.ne.f32.partialorder %v3197, %v3197
      %vm3644 = vcmp.ne.f32.partialorder %v3200, %v3200
      %vm3645 = vcmp.ne.f32.partialorder %v3205, %v3205
      %vm3646 = vcmp.ne.f32.partialorder %v3208, %v3208
      %vm3647 = vcmp.ne.f32.partialorder %v3213, %v3213
      %vm3648 = vcmp.ne.f32.partialorder %v3216, %v3216
      %vm3649 = vcmp.ne.f32.partialorder %v3221, %v3221
      %vm3650 = vcmp.ne.f32.partialorder %v3224, %v3224
      %vm3651 = vcmp.ne.f32.partialorder %v3229, %v3229
      %vm3652 = vcmp.ne.f32.partialorder %v3232, %v3232
      %vm3653 = vcmp.ne.f32.partialorder %v3237, %v3237
      %vm3654 = vcmp.ne.f32.partialorder %v3240, %v3240
      %vm3655 = vcmp.ne.f32.partialorder %v3245, %v3245
      %vm3656 = vcmp.ne.f32.partialorder %v3248, %v3248
      %vm3657 = vcmp.ne.f32.partialorder %v3253, %v3253
      %vm3658 = vcmp.ne.f32.partialorder %v3256, %v3256
      %vm3659 = vcmp.ne.f32.partialorder %v3261, %v3261
      %vm3660 = vcmp.ne.f32.partialorder %v3264, %v3264
      %vm3661 = vcmp.ne.f32.partialorder %v3269, %v3269
      %vm3662 = vcmp.ne.f32.partialorder %v3272, %v3272
      %vm3663 = vcmp.ne.f32.partialorder %v3277, %v3277
      %vm3664 = vcmp.ne.f32.partialorder %v3280, %v3280
      %vm3665 = vcmp.ne.f32.partialorder %v3285, %v3285
      %vm3666 = vcmp.ne.f32.partialorder %v3288, %v3288
      %vm3667 = vcmp.ne.f32.partialorder %v3293, %v3293
      %vm3668 = vcmp.ne.f32.partialorder %v3296, %v3296
      %vm3669 = vcmp.ne.f32.partialorder %v3301, %v3301
      %vm3670 = vcmp.ne.f32.partialorder %v3304, %v3304
      %vm3671 = vcmp.ne.f32.partialorder %v3309, %v3309
      %vm3672 = vcmp.ne.f32.partialorder %v3312, %v3312
      %vm3673 = vcmp.ne.f32.partialorder %v3317, %v3317
      %vm3674 = vcmp.ne.f32.partialorder %v3320, %v3320
      %vm3675 = vcmp.ne.f32.partialorder %v3325, %v3325
      %vm3676 = vcmp.ne.f32.partialorder %v3328, %v3328
      %vm3677 = vcmp.ne.f32.partialorder %v3333, %v3333
      %vm3678 = vcmp.ne.f32.partialorder %v3336, %v3336
      %vm3679 = vcmp.ne.f32.partialorder %v3341, %v3341
      %vm3680 = vcmp.ne.f32.partialorder %v3344, %v3344
      %vm3681 = vcmp.ne.f32.partialorder %v3349, %v3349
      %vm3682 = vcmp.ne.f32.partialorder %v3352, %v3352
      %vm3683 = vcmp.ne.f32.partialorder %v3357, %v3357
      %vm3684 = vcmp.ne.f32.partialorder %v3360, %v3360
      %vm3685 = vcmp.ne.f32.partialorder %v3365, %v3365
      %vm3686 = vcmp.ne.f32.partialorder %v3368, %v3368
      %vm3687 = vcmp.ne.f32.partialorder %v3373, %v3373
      %vm3688 = vcmp.ne.f32.partialorder %v3376, %v3376
      %vm3689 = vcmp.ne.f32.partialorder %v3381, %v3381
      %vm3690 = vcmp.ne.f32.partialorder %v3384, %v3384
      %vm3691 = vcmp.ne.f32.partialorder %v3389, %v3389
      %vm3692 = vcmp.ne.f32.partialorder %v3392, %v3392
      %vm3693 = vcmp.ne.f32.partialorder %v3397, %v3397
      %vm3694 = vcmp.ne.f32.partialorder %v3400, %v3400
      %vm3695 = vcmp.ne.f32.partialorder %v3405, %v3405
      %vm3696 = vcmp.ne.f32.partialorder %v3408, %v3408
      %vm3697 = vcmp.ne.f32.partialorder %v3413, %v3413
      %vm3698 = vcmp.ne.f32.partialorder %v3416, %v3416
      %vm3699 = vcmp.ne.f32.partialorder %v3421, %v3421
      %vm3700 = vcmp.ne.f32.partialorder %v3424, %v3424
      %vm3701 = vcmp.ne.f32.partialorder %v3429, %v3429
      %vm3702 = vcmp.ne.f32.partialorder %v3432, %v3432
      %vm3703 = vcmp.ne.f32.partialorder %v3437, %v3437
      %vm3704 = vcmp.ne.f32.partialorder %v3440, %v3440
      %vm3705 = vcmp.ne.f32.partialorder %v3445, %v3445
      %vm3706 = vcmp.ne.f32.partialorder %v3448, %v3448
      %v3707 = vadd.f32 %v3197, 0.0
      %v3708 = vadd.f32 %v3200, 0.0
      %v3709 = vadd.f32 %v3205, 0.0
      %v3710 = vadd.f32 %v3208, 0.0
      %v3711 = vadd.f32 %v3213, 0.0
      %v3712 = vadd.f32 %v3216, 0.0
      %v3713 = vadd.f32 %v3221, 0.0
      %v3714 = vadd.f32 %v3224, 0.0
      %v3715 = vadd.f32 %v3229, 0.0
      %v3716 = vadd.f32 %v3232, 0.0
      %v3717 = vadd.f32 %v3237, 0.0
      %v3718 = vadd.f32 %v3240, 0.0
      %v3719 = vadd.f32 %v3245, 0.0
      %v3720 = vadd.f32 %v3248, 0.0
      %v3721 = vadd.f32 %v3253, 0.0
      %v3722 = vadd.f32 %v3256, 0.0
      %v3723 = vadd.f32 %v3261, 0.0
      %v3724 = vadd.f32 %v3264, 0.0
      %v3725 = vadd.f32 %v3269, 0.0
      %v3726 = vadd.f32 %v3272, 0.0
      %v3727 = vadd.f32 %v3277, 0.0
      %v3728 = vadd.f32 %v3280, 0.0
      %v3729 = vadd.f32 %v3285, 0.0
      %v3730 = vadd.f32 %v3288, 0.0
      %v3731 = vadd.f32 %v3293, 0.0
      %v3732 = vadd.f32 %v3296, 0.0
      %v3733 = vadd.f32 %v3301, 0.0
      %v3734 = vadd.f32 %v3304, 0.0
      %v3735 = vadd.f32 %v3309, 0.0
      %v3736 = vadd.f32 %v3312, 0.0
      %v3737 = vadd.f32 %v3317, 0.0
      %v3738 = vadd.f32 %v3320, 0.0
      %v3739 = vadd.f32 %v3325, 0.0
      %v3740 = vadd.f32 %v3328, 0.0
      %v3741 = vadd.f32 %v3333, 0.0
      %v3742 = vadd.f32 %v3336, 0.0
      %v3743 = vadd.f32 %v3341, 0.0
      %v3744 = vadd.f32 %v3344, 0.0
      %v3745 = vadd.f32 %v3349, 0.0
      %v3746 = vadd.f32 %v3352, 0.0
      %v3747 = vadd.f32 %v3357, 0.0
      %v3748 = vadd.f32 %v3360, 0.0
      %v3749 = vadd.f32 %v3365, 0.0
      %v3750 = vadd.f32 %v3368, 0.0
      %v3751 = vadd.f32 %v3373, 0.0
      %v3752 = vadd.f32 %v3376, 0.0
      %v3753 = vadd.f32 %v3381, 0.0
      %v3754 = vadd.f32 %v3384, 0.0
      %v3755 = vadd.f32 %v3389, 0.0
      %v3756 = vadd.f32 %v3392, 0.0
      %v3757 = vadd.f32 %v3397, 0.0
      %v3758 = vadd.f32 %v3400, 0.0
      %v3759 = vadd.f32 %v3405, 0.0
      %v3760 = vadd.f32 %v3408, 0.0
      %v3761 = vadd.f32 %v3413, 0.0
      %v3762 = vadd.f32 %v3416, 0.0
      %v3763 = vadd.f32 %v3421, 0.0
      %v3764 = vadd.f32 %v3424, 0.0
      %v3765 = vadd.f32 %v3429, 0.0
      %v3766 = vadd.f32 %v3432, 0.0
      %v3767 = vadd.f32 %v3437, 0.0
      %v3768 = vadd.f32 %v3440, 0.0
      %v3769 = vadd.f32 %v3445, 0.0
      %v3770 = vadd.f32 %v3448, 0.0
      %v3771 = vand.u32 2147483647, %v3197
      %v3772 = vand.u32 2147483647, %v3200
      %v3773 = vand.u32 2147483647, %v3205
      %v3774 = vand.u32 2147483647, %v3208
      %v3775 = vand.u32 2147483647, %v3213
      %v3776 = vand.u32 2147483647, %v3216
      %v3777 = vand.u32 2147483647, %v3221
      %v3778 = vand.u32 2147483647, %v3224
      %v3779 = vand.u32 2147483647, %v3229
      %v3780 = vand.u32 2147483647, %v3232
      %v3781 = vand.u32 2147483647, %v3237
      %v3782 = vand.u32 2147483647, %v3240
      %v3783 = vand.u32 2147483647, %v3245
      %v3784 = vand.u32 2147483647, %v3248
      %v3785 = vand.u32 2147483647, %v3253
      %v3786 = vand.u32 2147483647, %v3256
      %v3787 = vand.u32 2147483647, %v3261
      %v3788 = vand.u32 2147483647, %v3264
      %v3789 = vand.u32 2147483647, %v3269
      %v3790 = vand.u32 2147483647, %v3272
      %v3791 = vand.u32 2147483647, %v3277
      %v3792 = vand.u32 2147483647, %v3280
      %v3793 = vand.u32 2147483647, %v3285
      %v3794 = vand.u32 2147483647, %v3288
      %v3795 = vand.u32 2147483647, %v3293
      %v3796 = vand.u32 2147483647, %v3296
      %v3797 = vand.u32 2147483647, %v3301
      %v3798 = vand.u32 2147483647, %v3304
      %v3799 = vand.u32 2147483647, %v3309
      %v3800 = vand.u32 2147483647, %v3312
      %v3801 = vand.u32 2147483647, %v3317
      %v3802 = vand.u32 2147483647, %v3320
      %v3803 = vand.u32 2147483647, %v3325
      %v3804 = vand.u32 2147483647, %v3328
      %v3805 = vand.u32 2147483647, %v3333
      %v3806 = vand.u32 2147483647, %v3336
      %v3807 = vand.u32 2147483647, %v3341
      %v3808 = vand.u32 2147483647, %v3344
      %v3809 = vand.u32 2147483647, %v3349
      %v3810 = vand.u32 2147483647, %v3352
      %v3811 = vand.u32 2147483647, %v3357
      %v3812 = vand.u32 2147483647, %v3360
      %v3813 = vand.u32 2147483647, %v3365
      %v3814 = vand.u32 2147483647, %v3368
      %v3815 = vand.u32 2147483647, %v3373
      %v3816 = vand.u32 2147483647, %v3376
      %v3817 = vand.u32 2147483647, %v3381
      %v3818 = vand.u32 2147483647, %v3384
      %v3819 = vand.u32 2147483647, %v3389
      %v3820 = vand.u32 2147483647, %v3392
      %v3821 = vand.u32 2147483647, %v3397
      %v3822 = vand.u32 2147483647, %v3400
      %v3823 = vand.u32 2147483647, %v3405
      %v3824 = vand.u32 2147483647, %v3408
      %v3825 = vand.u32 2147483647, %v3413
      %v3826 = vand.u32 2147483647, %v3416
      %v3827 = vand.u32 2147483647, %v3421
      %v3828 = vand.u32 2147483647, %v3424
      %v3829 = vand.u32 2147483647, %v3429
      %v3830 = vand.u32 2147483647, %v3432
      %v3831 = vand.u32 2147483647, %v3437
      %v3832 = vand.u32 2147483647, %v3440
      %v3833 = vand.u32 2147483647, %v3445
      %v3834 = vand.u32 2147483647, %v3448
      %v3835 = vsub.f32 0.0, %v3771
      %v3836 = vsub.f32 0.0, %v3772
      %v3837 = vsub.f32 0.0, %v3773
      %v3838 = vsub.f32 0.0, %v3774
      %v3839 = vsub.f32 0.0, %v3775
      %v3840 = vsub.f32 0.0, %v3776
      %v3841 = vsub.f32 0.0, %v3777
      %v3842 = vsub.f32 0.0, %v3778
      %v3843 = vsub.f32 0.0, %v3779
      %v3844 = vsub.f32 0.0, %v3780
      %v3845 = vsub.f32 0.0, %v3781
      %v3846 = vsub.f32 0.0, %v3782
      %v3847 = vsub.f32 0.0, %v3783
      %v3848 = vsub.f32 0.0, %v3784
      %v3849 = vsub.f32 0.0, %v3785
      %v3850 = vsub.f32 0.0, %v3786
      %v3851 = vsub.f32 0.0, %v3787
      %v3852 = vsub.f32 0.0, %v3788
      %v3853 = vsub.f32 0.0, %v3789
      %v3854 = vsub.f32 0.0, %v3790
      %v3855 = vsub.f32 0.0, %v3791
      %v3856 = vsub.f32 0.0, %v3792
      %v3857 = vsub.f32 0.0, %v3793
      %v3858 = vsub.f32 0.0, %v3794
      %v3859 = vsub.f32 0.0, %v3795
      %v3860 = vsub.f32 0.0, %v3796
      %v3861 = vsub.f32 0.0, %v3797
      %v3862 = vsub.f32 0.0, %v3798
      %v3863 = vsub.f32 0.0, %v3799
      %v3864 = vsub.f32 0.0, %v3800
      %v3865 = vsub.f32 0.0, %v3801
      %v3866 = vsub.f32 0.0, %v3802
      %v3867 = vsub.f32 0.0, %v3803
      %v3868 = vsub.f32 0.0, %v3804
      %v3869 = vsub.f32 0.0, %v3805
      %v3870 = vsub.f32 0.0, %v3806
      %v3871 = vsub.f32 0.0, %v3807
      %v3872 = vsub.f32 0.0, %v3808
      %v3873 = vsub.f32 0.0, %v3809
      %v3874 = vsub.f32 0.0, %v3810
      %v3875 = vsub.f32 0.0, %v3811
      %v3876 = vsub.f32 0.0, %v3812
      %v3877 = vsub.f32 0.0, %v3813
      %v3878 = vsub.f32 0.0, %v3814
      %v3879 = vsub.f32 0.0, %v3815
      %v3880 = vsub.f32 0.0, %v3816
      %v3881 = vsub.f32 0.0, %v3817
      %v3882 = vsub.f32 0.0, %v3818
      %v3883 = vsub.f32 0.0, %v3819
      %v3884 = vsub.f32 0.0, %v3820
      %v3885 = vsub.f32 0.0, %v3821
      %v3886 = vsub.f32 0.0, %v3822
      %v3887 = vsub.f32 0.0, %v3823
      %v3888 = vsub.f32 0.0, %v3824
      %v3889 = vsub.f32 0.0, %v3825
      %v3890 = vsub.f32 0.0, %v3826
      %v3891 = vsub.f32 0.0, %v3827
      %v3892 = vsub.f32 0.0, %v3828
      %v3893 = vsub.f32 0.0, %v3829
      %v3894 = vsub.f32 0.0, %v3830
      %v3895 = vsub.f32 0.0, %v3831
      %v3896 = vsub.f32 0.0, %v3832
      %v3897 = vsub.f32 0.0, %v3833
      %v3898 = vsub.f32 0.0, %v3834
      %v3899 = vmul.f32 %v3835, 1.442695
      %v3900 = vpow.pop %v3899
      %v3901 = vmul.f32 %v3836, 1.442695
      %v3902 = vpow.pop %v3901
      %v3903 = vmul.f32 %v3837, 1.442695
      %v3904 = vpow.pop %v3903
      %v3905 = vmul.f32 %v3838, 1.442695
      %v3906 = vpow.pop %v3905
      %v3907 = vmul.f32 %v3839, 1.442695
      %v3908 = vpow.pop %v3907
      %v3909 = vmul.f32 %v3840, 1.442695
      %v3910 = vpow.pop %v3909
      %v3911 = vmul.f32 %v3841, 1.442695
      %v3912 = vpow.pop %v3911
      %v3913 = vmul.f32 %v3842, 1.442695
      %v3914 = vpow.pop %v3913
      %v3915 = vmul.f32 %v3843, 1.442695
      %v3916 = vpow.pop %v3915
      %v3917 = vmul.f32 %v3844, 1.442695
      %v3918 = vpow.pop %v3917
      %v3919 = vmul.f32 %v3845, 1.442695
      %v3920 = vpow.pop %v3919
      %v3921 = vmul.f32 %v3846, 1.442695
      %v3922 = vpow.pop %v3921
      %v3923 = vmul.f32 %v3847, 1.442695
      %v3924 = vpow.pop %v3923
      %v3925 = vmul.f32 %v3848, 1.442695
      %v3926 = vpow.pop %v3925
      %v3927 = vmul.f32 %v3849, 1.442695
      %v3928 = vpow.pop %v3927
      %v3929 = vmul.f32 %v3850, 1.442695
      %v3930 = vpow.pop %v3929
      %v3931 = vmul.f32 %v3851, 1.442695
      %v3932 = vpow.pop %v3931
      %v3933 = vmul.f32 %v3852, 1.442695
      %v3934 = vpow.pop %v3933
      %v3935 = vmul.f32 %v3853, 1.442695
      %v3936 = vpow.pop %v3935
      %v3937 = vmul.f32 %v3854, 1.442695
      %v3938 = vpow.pop %v3937
      %v3939 = vmul.f32 %v3855, 1.442695
      %v3940 = vpow.pop %v3939
      %v3941 = vmul.f32 %v3856, 1.442695
      %v3942 = vpow.pop %v3941
      %v3943 = vmul.f32 %v3857, 1.442695
      %v3944 = vpow.pop %v3943
      %v3945 = vmul.f32 %v3858, 1.442695
      %v3946 = vpow.pop %v3945
      %v3947 = vmul.f32 %v3859, 1.442695
      %v3948 = vpow.pop %v3947
      %v3949 = vmul.f32 %v3860, 1.442695
      %v3950 = vpow.pop %v3949
      %v3951 = vmul.f32 %v3861, 1.442695
      %v3952 = vpow.pop %v3951
      %v3953 = vmul.f32 %v3862, 1.442695
      %v3954 = vpow.pop %v3953
      %v3955 = vmul.f32 %v3863, 1.442695
      %v3956 = vpow.pop %v3955
      %v3957 = vmul.f32 %v3864, 1.442695
      %v3958 = vpow.pop %v3957
      %v3959 = vmul.f32 %v3865, 1.442695
      %v3960 = vpow.pop %v3959
      %v3961 = vmul.f32 %v3866, 1.442695
      %v3962 = vpow.pop %v3961
      %v3963 = vmul.f32 %v3867, 1.442695
      %v3964 = vpow.pop %v3963
      %v3965 = vmul.f32 %v3868, 1.442695
      %v3966 = vpow.pop %v3965
      %v3967 = vmul.f32 %v3869, 1.442695
      %v3968 = vpow.pop %v3967
      %v3969 = vmul.f32 %v3870, 1.442695
      %v3970 = vpow.pop %v3969
      %v3971 = vmul.f32 %v3871, 1.442695
      %v3972 = vpow.pop %v3971
      %v3973 = vmul.f32 %v3872, 1.442695
      %v3974 = vpow.pop %v3973
      %v3975 = vmul.f32 %v3873, 1.442695
      %v3976 = vpow.pop %v3975
      %v3977 = vmul.f32 %v3874, 1.442695
      %v3978 = vpow.pop %v3977
      %v3979 = vmul.f32 %v3875, 1.442695
      %v3980 = vpow.pop %v3979
      %v3981 = vmul.f32 %v3876, 1.442695
      %v3982 = vpow.pop %v3981
      %v3983 = vmul.f32 %v3877, 1.442695
      %v3984 = vpow.pop %v3983
      %v3985 = vmul.f32 %v3878, 1.442695
      %v3986 = vpow.pop %v3985
      %v3987 = vmul.f32 %v3879, 1.442695
      %v3988 = vpow.pop %v3987
      %v3989 = vmul.f32 %v3880, 1.442695
      %v3990 = vpow.pop %v3989
      %v3991 = vmul.f32 %v3881, 1.442695
      %v3992 = vpow.pop %v3991
      %v3993 = vmul.f32 %v3882, 1.442695
      %v3994 = vpow.pop %v3993
      %v3995 = vmul.f32 %v3883, 1.442695
      %v3996 = vpow.pop %v3995
      %v3997 = vmul.f32 %v3884, 1.442695
      %v3998 = vpow.pop %v3997
      %v3999 = vmul.f32 %v3885, 1.442695
      %v4000 = vpow.pop %v3999
      %v4001 = vmul.f32 %v3886, 1.442695
      %v4002 = vpow.pop %v4001
      %v4003 = vmul.f32 %v3887, 1.442695
      %v4004 = vpow.pop %v4003
      %v4005 = vmul.f32 %v3888, 1.442695
      %v4006 = vpow.pop %v4005
      %v4007 = vmul.f32 %v3889, 1.442695
      %v4008 = vpow.pop %v4007
      %v4009 = vmul.f32 %v3890, 1.442695
      %v4010 = vpow.pop %v4009
      %v4011 = vmul.f32 %v3891, 1.442695
      %v4012 = vpow.pop %v4011
      %v4013 = vmul.f32 %v3892, 1.442695
      %v4014 = vpow.pop %v4013
      %v4015 = vmul.f32 %v3893, 1.442695
      %v4016 = vpow.pop %v4015
      %v4017 = vmul.f32 %v3894, 1.442695
      %v4018 = vpow.pop %v4017
      %v4019 = vmul.f32 %v3895, 1.442695
      %v4020 = vpow.pop %v4019
      %v4021 = vmul.f32 %v3896, 1.442695
      %v4022 = vpow.pop %v4021
      %v4023 = vmul.f32 %v3897, 1.442695
      %v4024 = vpow.pop %v4023
      %v4025 = vmul.f32 %v3898, 1.442695
      %v4026 = vpow.pop %v4025
      %v4027 = vadd.f32 %v3900, 1.0
      %v4028 = vlog2.pop %v4027
      %v4029 = vmul.f32 %v4028, 0.6931472
      %v4030 = vmul.f32 -0.5, %v3900
      %v4031 = vadd.f32 %v4030, 1.0
      %v4032 = vmul.f32 %v4031, %v3900
      %v4033 = vand.u32 2147483647, %v3900
      %vm4034 = vcmp.lt.f32.partialorder %v4033, 0.0004427343
      %v4035 = vsel %vm4034, %v4032, %v4029
      %v4036 = vadd.f32 %v3902, 1.0
      %v4037 = vlog2.pop %v4036
      %v4038 = vmul.f32 %v4037, 0.6931472
      %v4039 = vmul.f32 -0.5, %v3902
      %v4040 = vadd.f32 %v4039, 1.0
      %v4041 = vmul.f32 %v4040, %v3902
      %v4042 = vand.u32 2147483647, %v3902
      %vm4043 = vcmp.lt.f32.partialorder %v4042, 0.0004427343
      %v4044 = vsel %vm4043, %v4041, %v4038
      %v4045 = vadd.f32 %v3904, 1.0
      %v4046 = vlog2.pop %v4045
      %v4047 = vmul.f32 %v4046, 0.6931472
      %v4048 = vmul.f32 -0.5, %v3904
      %v4049 = vadd.f32 %v4048, 1.0
      %v4050 = vmul.f32 %v4049, %v3904
      %v4051 = vand.u32 2147483647, %v3904
      %vm4052 = vcmp.lt.f32.partialorder %v4051, 0.0004427343
      %v4053 = vsel %vm4052, %v4050, %v4047
      %v4054 = vadd.f32 %v3906, 1.0
      %v4055 = vlog2.pop %v4054
      %v4056 = vmul.f32 %v4055, 0.6931472
      %v4057 = vmul.f32 -0.5, %v3906
      %v4058 = vadd.f32 %v4057, 1.0
      %v4059 = vmul.f32 %v4058, %v3906
      %v4060 = vand.u32 2147483647, %v3906
      %vm4061 = vcmp.lt.f32.partialorder %v4060, 0.0004427343
      %v4062 = vsel %vm4061, %v4059, %v4056
      %v4063 = vadd.f32 %v3908, 1.0
      %v4064 = vlog2.pop %v4063
      %v4065 = vmul.f32 %v4064, 0.6931472
      %v4066 = vmul.f32 -0.5, %v3908
      %v4067 = vadd.f32 %v4066, 1.0
      %v4068 = vmul.f32 %v4067, %v3908
      %v4069 = vand.u32 2147483647, %v3908
      %vm4070 = vcmp.lt.f32.partialorder %v4069, 0.0004427343
      %v4071 = vsel %vm4070, %v4068, %v4065
      %v4072 = vadd.f32 %v3910, 1.0
      %v4073 = vlog2.pop %v4072
      %v4074 = vmul.f32 %v4073, 0.6931472
      %v4075 = vmul.f32 -0.5, %v3910
      %v4076 = vadd.f32 %v4075, 1.0
      %v4077 = vmul.f32 %v4076, %v3910
      %v4078 = vand.u32 2147483647, %v3910
      %vm4079 = vcmp.lt.f32.partialorder %v4078, 0.0004427343
      %v4080 = vsel %vm4079, %v4077, %v4074
      %v4081 = vadd.f32 %v3912, 1.0
      %v4082 = vlog2.pop %v4081
      %v4083 = vmul.f32 %v4082, 0.6931472
      %v4084 = vmul.f32 -0.5, %v3912
      %v4085 = vadd.f32 %v4084, 1.0
      %v4086 = vmul.f32 %v4085, %v3912
      %v4087 = vand.u32 2147483647, %v3912
      %vm4088 = vcmp.lt.f32.partialorder %v4087, 0.0004427343
      %v4089 = vsel %vm4088, %v4086, %v4083
      %v4090 = vadd.f32 %v3914, 1.0
      %v4091 = vlog2.pop %v4090
      %v4092 = vmul.f32 %v4091, 0.6931472
      %v4093 = vmul.f32 -0.5, %v3914
      %v4094 = vadd.f32 %v4093, 1.0
      %v4095 = vmul.f32 %v4094, %v3914
      %v4096 = vand.u32 2147483647, %v3914
      %vm4097 = vcmp.lt.f32.partialorder %v4096, 0.0004427343
      %v4098 = vsel %vm4097, %v4095, %v4092
      %v4099 = vadd.f32 %v3916, 1.0
      %v4100 = vlog2.pop %v4099
      %v4101 = vmul.f32 %v4100, 0.6931472
      %v4102 = vmul.f32 -0.5, %v3916
      %v4103 = vadd.f32 %v4102, 1.0
      %v4104 = vmul.f32 %v4103, %v3916
      %v4105 = vand.u32 2147483647, %v3916
      %vm4106 = vcmp.lt.f32.partialorder %v4105, 0.0004427343
      %v4107 = vsel %vm4106, %v4104, %v4101
      %v4108 = vadd.f32 %v3918, 1.0
      %v4109 = vlog2.pop %v4108
      %v4110 = vmul.f32 %v4109, 0.6931472
      %v4111 = vmul.f32 -0.5, %v3918
      %v4112 = vadd.f32 %v4111, 1.0
      %v4113 = vmul.f32 %v4112, %v3918
      %v4114 = vand.u32 2147483647, %v3918
      %vm4115 = vcmp.lt.f32.partialorder %v4114, 0.0004427343
      %v4116 = vsel %vm4115, %v4113, %v4110
      %v4117 = vadd.f32 %v3920, 1.0
      %v4118 = vlog2.pop %v4117
      %v4119 = vmul.f32 %v4118, 0.6931472
      %v4120 = vmul.f32 -0.5, %v3920
      %v4121 = vadd.f32 %v4120, 1.0
      %v4122 = vmul.f32 %v4121, %v3920
      %v4123 = vand.u32 2147483647, %v3920
      %vm4124 = vcmp.lt.f32.partialorder %v4123, 0.0004427343
      %v4125 = vsel %vm4124, %v4122, %v4119
      %v4126 = vadd.f32 %v3922, 1.0
      %v4127 = vlog2.pop %v4126
      %v4128 = vmul.f32 %v4127, 0.6931472
      %v4129 = vmul.f32 -0.5, %v3922
      %v4130 = vadd.f32 %v4129, 1.0
      %v4131 = vmul.f32 %v4130, %v3922
      %v4132 = vand.u32 2147483647, %v3922
      %vm4133 = vcmp.lt.f32.partialorder %v4132, 0.0004427343
      %v4134 = vsel %vm4133, %v4131, %v4128
      %v4135 = vadd.f32 %v3924, 1.0
      %v4136 = vlog2.pop %v4135
      %v4137 = vmul.f32 %v4136, 0.6931472
      %v4138 = vmul.f32 -0.5, %v3924
      %v4139 = vadd.f32 %v4138, 1.0
      %v4140 = vmul.f32 %v4139, %v3924
      %v4141 = vand.u32 2147483647, %v3924
      %vm4142 = vcmp.lt.f32.partialorder %v4141, 0.0004427343
      %v4143 = vsel %vm4142, %v4140, %v4137
      %v4144 = vadd.f32 %v3926, 1.0
      %v4145 = vlog2.pop %v4144
      %v4146 = vmul.f32 %v4145, 0.6931472
      %v4147 = vmul.f32 -0.5, %v3926
      %v4148 = vadd.f32 %v4147, 1.0
      %v4149 = vmul.f32 %v4148, %v3926
      %v4150 = vand.u32 2147483647, %v3926
      %vm4151 = vcmp.lt.f32.partialorder %v4150, 0.0004427343
      %v4152 = vsel %vm4151, %v4149, %v4146
      %v4153 = vadd.f32 %v3928, 1.0
      %v4154 = vlog2.pop %v4153
      %v4155 = vmul.f32 %v4154, 0.6931472
      %v4156 = vmul.f32 -0.5, %v3928
      %v4157 = vadd.f32 %v4156, 1.0
      %v4158 = vmul.f32 %v4157, %v3928
      %v4159 = vand.u32 2147483647, %v3928
      %vm4160 = vcmp.lt.f32.partialorder %v4159, 0.0004427343
      %v4161 = vsel %vm4160, %v4158, %v4155
      %v4162 = vadd.f32 %v3930, 1.0
      %v4163 = vlog2.pop %v4162
      %v4164 = vmul.f32 %v4163, 0.6931472
      %v4165 = vmul.f32 -0.5, %v3930
      %v4166 = vadd.f32 %v4165, 1.0
      %v4167 = vmul.f32 %v4166, %v3930
      %v4168 = vand.u32 2147483647, %v3930
      %vm4169 = vcmp.lt.f32.partialorder %v4168, 0.0004427343
      %v4170 = vsel %vm4169, %v4167, %v4164
      %v4171 = vadd.f32 %v3932, 1.0
      %v4172 = vlog2.pop %v4171
      %v4173 = vmul.f32 %v4172, 0.6931472
      %v4174 = vmul.f32 -0.5, %v3932
      %v4175 = vadd.f32 %v4174, 1.0
      %v4176 = vmul.f32 %v4175, %v3932
      %v4177 = vand.u32 2147483647, %v3932
      %vm4178 = vcmp.lt.f32.partialorder %v4177, 0.0004427343
      %v4179 = vsel %vm4178, %v4176, %v4173
      %v4180 = vadd.f32 %v3934, 1.0
      %v4181 = vlog2.pop %v4180
      %v4182 = vmul.f32 %v4181, 0.6931472
      %v4183 = vmul.f32 -0.5, %v3934
      %v4184 = vadd.f32 %v4183, 1.0
      %v4185 = vmul.f32 %v4184, %v3934
      %v4186 = vand.u32 2147483647, %v3934
      %vm4187 = vcmp.lt.f32.partialorder %v4186, 0.0004427343
      %v4188 = vsel %vm4187, %v4185, %v4182
      %v4189 = vadd.f32 %v3936, 1.0
      %v4190 = vlog2.pop %v4189
      %v4191 = vmul.f32 %v4190, 0.6931472
      %v4192 = vmul.f32 -0.5, %v3936
      %v4193 = vadd.f32 %v4192, 1.0
      %v4194 = vmul.f32 %v4193, %v3936
      %v4195 = vand.u32 2147483647, %v3936
      %vm4196 = vcmp.lt.f32.partialorder %v4195, 0.0004427343
      %v4197 = vsel %vm4196, %v4194, %v4191
      %v4198 = vadd.f32 %v3938, 1.0
      %v4199 = vlog2.pop %v4198
      %v4200 = vmul.f32 %v4199, 0.6931472
      %v4201 = vmul.f32 -0.5, %v3938
      %v4202 = vadd.f32 %v4201, 1.0
      %v4203 = vmul.f32 %v4202, %v3938
      %v4204 = vand.u32 2147483647, %v3938
      %vm4205 = vcmp.lt.f32.partialorder %v4204, 0.0004427343
      %v4206 = vsel %vm4205, %v4203, %v4200
      %v4207 = vadd.f32 %v3940, 1.0
      %v4208 = vlog2.pop %v4207
      %v4209 = vmul.f32 %v4208, 0.6931472
      %v4210 = vmul.f32 -0.5, %v3940
      %v4211 = vadd.f32 %v4210, 1.0
      %v4212 = vmul.f32 %v4211, %v3940
      %v4213 = vand.u32 2147483647, %v3940
      %vm4214 = vcmp.lt.f32.partialorder %v4213, 0.0004427343
      %v4215 = vsel %vm4214, %v4212, %v4209
      %v4216 = vadd.f32 %v3942, 1.0
      %v4217 = vlog2.pop %v4216
      %v4218 = vmul.f32 %v4217, 0.6931472
      %v4219 = vmul.f32 -0.5, %v3942
      %v4220 = vadd.f32 %v4219, 1.0
      %v4221 = vmul.f32 %v4220, %v3942
      %v4222 = vand.u32 2147483647, %v3942
      %vm4223 = vcmp.lt.f32.partialorder %v4222, 0.0004427343
      %v4224 = vsel %vm4223, %v4221, %v4218
      %v4225 = vadd.f32 %v3944, 1.0
      %v4226 = vlog2.pop %v4225
      %v4227 = vmul.f32 %v4226, 0.6931472
      %v4228 = vmul.f32 -0.5, %v3944
      %v4229 = vadd.f32 %v4228, 1.0
      %v4230 = vmul.f32 %v4229, %v3944
      %v4231 = vand.u32 2147483647, %v3944
      %vm4232 = vcmp.lt.f32.partialorder %v4231, 0.0004427343
      %v4233 = vsel %vm4232, %v4230, %v4227
      %v4234 = vadd.f32 %v3946, 1.0
      %v4235 = vlog2.pop %v4234
      %v4236 = vmul.f32 %v4235, 0.6931472
      %v4237 = vmul.f32 -0.5, %v3946
      %v4238 = vadd.f32 %v4237, 1.0
      %v4239 = vmul.f32 %v4238, %v3946
      %v4240 = vand.u32 2147483647, %v3946
      %vm4241 = vcmp.lt.f32.partialorder %v4240, 0.0004427343
      %v4242 = vsel %vm4241, %v4239, %v4236
      %v4243 = vadd.f32 %v3948, 1.0
      %v4244 = vlog2.pop %v4243
      %v4245 = vmul.f32 %v4244, 0.6931472
      %v4246 = vmul.f32 -0.5, %v3948
      %v4247 = vadd.f32 %v4246, 1.0
      %v4248 = vmul.f32 %v4247, %v3948
      %v4249 = vand.u32 2147483647, %v3948
      %vm4250 = vcmp.lt.f32.partialorder %v4249, 0.0004427343
      %v4251 = vsel %vm4250, %v4248, %v4245
      %v4252 = vadd.f32 %v3950, 1.0
      %v4253 = vlog2.pop %v4252
      %v4254 = vmul.f32 %v4253, 0.6931472
      %v4255 = vmul.f32 -0.5, %v3950
      %v4256 = vadd.f32 %v4255, 1.0
      %v4257 = vmul.f32 %v4256, %v3950
      %v4258 = vand.u32 2147483647, %v3950
      %vm4259 = vcmp.lt.f32.partialorder %v4258, 0.0004427343
      %v4260 = vsel %vm4259, %v4257, %v4254
      %v4261 = vadd.f32 %v3952, 1.0
      %v4262 = vlog2.pop %v4261
      %v4263 = vmul.f32 %v4262, 0.6931472
      %v4264 = vmul.f32 -0.5, %v3952
      %v4265 = vadd.f32 %v4264, 1.0
      %v4266 = vmul.f32 %v4265, %v3952
      %v4267 = vand.u32 2147483647, %v3952
      %vm4268 = vcmp.lt.f32.partialorder %v4267, 0.0004427343
      %v4269 = vsel %vm4268, %v4266, %v4263
      %v4270 = vadd.f32 %v3954, 1.0
      %v4271 = vlog2.pop %v4270
      %v4272 = vmul.f32 %v4271, 0.6931472
      %v4273 = vmul.f32 -0.5, %v3954
      %v4274 = vadd.f32 %v4273, 1.0
      %v4275 = vmul.f32 %v4274, %v3954
      %v4276 = vand.u32 2147483647, %v3954
      %vm4277 = vcmp.lt.f32.partialorder %v4276, 0.0004427343
      %v4278 = vsel %vm4277, %v4275, %v4272
      %v4279 = vadd.f32 %v3956, 1.0
      %v4280 = vlog2.pop %v4279
      %v4281 = vmul.f32 %v4280, 0.6931472
      %v4282 = vmul.f32 -0.5, %v3956
      %v4283 = vadd.f32 %v4282, 1.0
      %v4284 = vmul.f32 %v4283, %v3956
      %v4285 = vand.u32 2147483647, %v3956
      %vm4286 = vcmp.lt.f32.partialorder %v4285, 0.0004427343
      %v4287 = vsel %vm4286, %v4284, %v4281
      %v4288 = vadd.f32 %v3958, 1.0
      %v4289 = vlog2.pop %v4288
      %v4290 = vmul.f32 %v4289, 0.6931472
      %v4291 = vmul.f32 -0.5, %v3958
      %v4292 = vadd.f32 %v4291, 1.0
      %v4293 = vmul.f32 %v4292, %v3958
      %v4294 = vand.u32 2147483647, %v3958
      %vm4295 = vcmp.lt.f32.partialorder %v4294, 0.0004427343
      %v4296 = vsel %vm4295, %v4293, %v4290
      %v4297 = vadd.f32 %v3960, 1.0
      %v4298 = vlog2.pop %v4297
      %v4299 = vmul.f32 %v4298, 0.6931472
      %v4300 = vmul.f32 -0.5, %v3960
      %v4301 = vadd.f32 %v4300, 1.0
      %v4302 = vmul.f32 %v4301, %v3960
      %v4303 = vand.u32 2147483647, %v3960
      %vm4304 = vcmp.lt.f32.partialorder %v4303, 0.0004427343
      %v4305 = vsel %vm4304, %v4302, %v4299
      %v4306 = vadd.f32 %v3962, 1.0
      %v4307 = vlog2.pop %v4306
      %v4308 = vmul.f32 %v4307, 0.6931472
      %v4309 = vmul.f32 -0.5, %v3962
      %v4310 = vadd.f32 %v4309, 1.0
      %v4311 = vmul.f32 %v4310, %v3962
      %v4312 = vand.u32 2147483647, %v3962
      %vm4313 = vcmp.lt.f32.partialorder %v4312, 0.0004427343
      %v4314 = vsel %vm4313, %v4311, %v4308
      %v4315 = vadd.f32 %v3964, 1.0
      %v4316 = vlog2.pop %v4315
      %v4317 = vmul.f32 %v4316, 0.6931472
      %v4318 = vmul.f32 -0.5, %v3964
      %v4319 = vadd.f32 %v4318, 1.0
      %v4320 = vmul.f32 %v4319, %v3964
      %v4321 = vand.u32 2147483647, %v3964
      %vm4322 = vcmp.lt.f32.partialorder %v4321, 0.0004427343
      %v4323 = vsel %vm4322, %v4320, %v4317
      %v4324 = vadd.f32 %v3966, 1.0
      %v4325 = vlog2.pop %v4324
      %v4326 = vmul.f32 %v4325, 0.6931472
      %v4327 = vmul.f32 -0.5, %v3966
      %v4328 = vadd.f32 %v4327, 1.0
      %v4329 = vmul.f32 %v4328, %v3966
      %v4330 = vand.u32 2147483647, %v3966
      %vm4331 = vcmp.lt.f32.partialorder %v4330, 0.0004427343
      %v4332 = vsel %vm4331, %v4329, %v4326
      %v4333 = vadd.f32 %v3968, 1.0
      %v4334 = vlog2.pop %v4333
      %v4335 = vmul.f32 %v4334, 0.6931472
      %v4336 = vmul.f32 -0.5, %v3968
      %v4337 = vadd.f32 %v4336, 1.0
      %v4338 = vmul.f32 %v4337, %v3968
      %v4339 = vand.u32 2147483647, %v3968
      %vm4340 = vcmp.lt.f32.partialorder %v4339, 0.0004427343
      %v4341 = vsel %vm4340, %v4338, %v4335
      %v4342 = vadd.f32 %v3970, 1.0
      %v4343 = vlog2.pop %v4342
      %v4344 = vmul.f32 %v4343, 0.6931472
      %v4345 = vmul.f32 -0.5, %v3970
      %v4346 = vadd.f32 %v4345, 1.0
      %v4347 = vmul.f32 %v4346, %v3970
      %v4348 = vand.u32 2147483647, %v3970
      %vm4349 = vcmp.lt.f32.partialorder %v4348, 0.0004427343
      %v4350 = vsel %vm4349, %v4347, %v4344
      %v4351 = vadd.f32 %v3972, 1.0
      %v4352 = vlog2.pop %v4351
      %v4353 = vmul.f32 %v4352, 0.6931472
      %v4354 = vmul.f32 -0.5, %v3972
      %v4355 = vadd.f32 %v4354, 1.0
      %v4356 = vmul.f32 %v4355, %v3972
      %v4357 = vand.u32 2147483647, %v3972
      %vm4358 = vcmp.lt.f32.partialorder %v4357, 0.0004427343
      %v4359 = vsel %vm4358, %v4356, %v4353
      %v4360 = vadd.f32 %v3974, 1.0
      %v4361 = vlog2.pop %v4360
      %v4362 = vmul.f32 %v4361, 0.6931472
      %v4363 = vmul.f32 -0.5, %v3974
      %v4364 = vadd.f32 %v4363, 1.0
      %v4365 = vmul.f32 %v4364, %v3974
      %v4366 = vand.u32 2147483647, %v3974
      %vm4367 = vcmp.lt.f32.partialorder %v4366, 0.0004427343
      %v4368 = vsel %vm4367, %v4365, %v4362
      %v4369 = vadd.f32 %v3976, 1.0
      %v4370 = vlog2.pop %v4369
      %v4371 = vmul.f32 %v4370, 0.6931472
      %v4372 = vmul.f32 -0.5, %v3976
      %v4373 = vadd.f32 %v4372, 1.0
      %v4374 = vmul.f32 %v4373, %v3976
      %v4375 = vand.u32 2147483647, %v3976
      %vm4376 = vcmp.lt.f32.partialorder %v4375, 0.0004427343
      %v4377 = vsel %vm4376, %v4374, %v4371
      %v4378 = vadd.f32 %v3978, 1.0
      %v4379 = vlog2.pop %v4378
      %v4380 = vmul.f32 %v4379, 0.6931472
      %v4381 = vmul.f32 -0.5, %v3978
      %v4382 = vadd.f32 %v4381, 1.0
      %v4383 = vmul.f32 %v4382, %v3978
      %v4384 = vand.u32 2147483647, %v3978
      %vm4385 = vcmp.lt.f32.partialorder %v4384, 0.0004427343
      %v4386 = vsel %vm4385, %v4383, %v4380
      %v4387 = vadd.f32 %v3980, 1.0
      %v4388 = vlog2.pop %v4387
      %v4389 = vmul.f32 %v4388, 0.6931472
      %v4390 = vmul.f32 -0.5, %v3980
      %v4391 = vadd.f32 %v4390, 1.0
      %v4392 = vmul.f32 %v4391, %v3980
      %v4393 = vand.u32 2147483647, %v3980
      %vm4394 = vcmp.lt.f32.partialorder %v4393, 0.0004427343
      %v4395 = vsel %vm4394, %v4392, %v4389
      %v4396 = vadd.f32 %v3982, 1.0
      %v4397 = vlog2.pop %v4396
      %v4398 = vmul.f32 %v4397, 0.6931472
      %v4399 = vmul.f32 -0.5, %v3982
      %v4400 = vadd.f32 %v4399, 1.0
      %v4401 = vmul.f32 %v4400, %v3982
      %v4402 = vand.u32 2147483647, %v3982
      %vm4403 = vcmp.lt.f32.partialorder %v4402, 0.0004427343
      %v4404 = vsel %vm4403, %v4401, %v4398
      %v4405 = vadd.f32 %v3984, 1.0
      %v4406 = vlog2.pop %v4405
      %v4407 = vmul.f32 %v4406, 0.6931472
      %v4408 = vmul.f32 -0.5, %v3984
      %v4409 = vadd.f32 %v4408, 1.0
      %v4410 = vmul.f32 %v4409, %v3984
      %v4411 = vand.u32 2147483647, %v3984
      %vm4412 = vcmp.lt.f32.partialorder %v4411, 0.0004427343
      %v4413 = vsel %vm4412, %v4410, %v4407
      %v4414 = vadd.f32 %v3986, 1.0
      %v4415 = vlog2.pop %v4414
      %v4416 = vmul.f32 %v4415, 0.6931472
      %v4417 = vmul.f32 -0.5, %v3986
      %v4418 = vadd.f32 %v4417, 1.0
      %v4419 = vmul.f32 %v4418, %v3986
      %v4420 = vand.u32 2147483647, %v3986
      %vm4421 = vcmp.lt.f32.partialorder %v4420, 0.0004427343
      %v4422 = vsel %vm4421, %v4419, %v4416
      %v4423 = vadd.f32 %v3988, 1.0
      %v4424 = vlog2.pop %v4423
      %v4425 = vmul.f32 %v4424, 0.6931472
      %v4426 = vmul.f32 -0.5, %v3988
      %v4427 = vadd.f32 %v4426, 1.0
      %v4428 = vmul.f32 %v4427, %v3988
      %v4429 = vand.u32 2147483647, %v3988
      %vm4430 = vcmp.lt.f32.partialorder %v4429, 0.0004427343
      %v4431 = vsel %vm4430, %v4428, %v4425
      %v4432 = vadd.f32 %v3990, 1.0
      %v4433 = vlog2.pop %v4432
      %v4434 = vmul.f32 %v4433, 0.6931472
      %v4435 = vmul.f32 -0.5, %v3990
      %v4436 = vadd.f32 %v4435, 1.0
      %v4437 = vmul.f32 %v4436, %v3990
      %v4438 = vand.u32 2147483647, %v3990
      %vm4439 = vcmp.lt.f32.partialorder %v4438, 0.0004427343
      %v4440 = vsel %vm4439, %v4437, %v4434
      %v4441 = vadd.f32 %v3992, 1.0
      %v4442 = vlog2.pop %v4441
      %v4443 = vmul.f32 %v4442, 0.6931472
      %v4444 = vmul.f32 -0.5, %v3992
      %v4445 = vadd.f32 %v4444, 1.0
      %v4446 = vmul.f32 %v4445, %v3992
      %v4447 = vand.u32 2147483647, %v3992
      %vm4448 = vcmp.lt.f32.partialorder %v4447, 0.0004427343
      %v4449 = vsel %vm4448, %v4446, %v4443
      %v4450 = vadd.f32 %v3994, 1.0
      %v4451 = vlog2.pop %v4450
      %v4452 = vmul.f32 %v4451, 0.6931472
      %v4453 = vmul.f32 -0.5, %v3994
      %v4454 = vadd.f32 %v4453, 1.0
      %v4455 = vmul.f32 %v4454, %v3994
      %v4456 = vand.u32 2147483647, %v3994
      %vm4457 = vcmp.lt.f32.partialorder %v4456, 0.0004427343
      %v4458 = vsel %vm4457, %v4455, %v4452
      %v4459 = vadd.f32 %v3996, 1.0
      %v4460 = vlog2.pop %v4459
      %v4461 = vmul.f32 %v4460, 0.6931472
      %v4462 = vmul.f32 -0.5, %v3996
      %v4463 = vadd.f32 %v4462, 1.0
      %v4464 = vmul.f32 %v4463, %v3996
      %v4465 = vand.u32 2147483647, %v3996
      %vm4466 = vcmp.lt.f32.partialorder %v4465, 0.0004427343
      %v4467 = vsel %vm4466, %v4464, %v4461
      %v4468 = vadd.f32 %v3998, 1.0
      %v4469 = vlog2.pop %v4468
      %v4470 = vmul.f32 %v4469, 0.6931472
      %v4471 = vmul.f32 -0.5, %v3998
      %v4472 = vadd.f32 %v4471, 1.0
      %v4473 = vmul.f32 %v4472, %v3998
      %v4474 = vand.u32 2147483647, %v3998
      %vm4475 = vcmp.lt.f32.partialorder %v4474, 0.0004427343
      %v4476 = vsel %vm4475, %v4473, %v4470
      %v4477 = vadd.f32 %v4000, 1.0
      %v4478 = vlog2.pop %v4477
      %v4479 = vmul.f32 %v4478, 0.6931472
      %v4480 = vmul.f32 -0.5, %v4000
      %v4481 = vadd.f32 %v4480, 1.0
      %v4482 = vmul.f32 %v4481, %v4000
      %v4483 = vand.u32 2147483647, %v4000
      %vm4484 = vcmp.lt.f32.partialorder %v4483, 0.0004427343
      %v4485 = vsel %vm4484, %v4482, %v4479
      %v4486 = vadd.f32 %v4002, 1.0
      %v4487 = vlog2.pop %v4486
      %v4488 = vmul.f32 %v4487, 0.6931472
      %v4489 = vmul.f32 -0.5, %v4002
      %v4490 = vadd.f32 %v4489, 1.0
      %v4491 = vmul.f32 %v4490, %v4002
      %v4492 = vand.u32 2147483647, %v4002
      %vm4493 = vcmp.lt.f32.partialorder %v4492, 0.0004427343
      %v4494 = vsel %vm4493, %v4491, %v4488
      %v4495 = vadd.f32 %v4004, 1.0
      %v4496 = vlog2.pop %v4495
      %v4497 = vmul.f32 %v4496, 0.6931472
      %v4498 = vmul.f32 -0.5, %v4004
      %v4499 = vadd.f32 %v4498, 1.0
      %v4500 = vmul.f32 %v4499, %v4004
      %v4501 = vand.u32 2147483647, %v4004
      %vm4502 = vcmp.lt.f32.partialorder %v4501, 0.0004427343
      %v4503 = vsel %vm4502, %v4500, %v4497
      %v4504 = vadd.f32 %v4006, 1.0
      %v4505 = vlog2.pop %v4504
      %v4506 = vmul.f32 %v4505, 0.6931472
      %v4507 = vmul.f32 -0.5, %v4006
      %v4508 = vadd.f32 %v4507, 1.0
      %v4509 = vmul.f32 %v4508, %v4006
      %v4510 = vand.u32 2147483647, %v4006
      %vm4511 = vcmp.lt.f32.partialorder %v4510, 0.0004427343
      %v4512 = vsel %vm4511, %v4509, %v4506
      %v4513 = vadd.f32 %v4008, 1.0
      %v4514 = vlog2.pop %v4513
      %v4515 = vmul.f32 %v4514, 0.6931472
      %v4516 = vmul.f32 -0.5, %v4008
      %v4517 = vadd.f32 %v4516, 1.0
      %v4518 = vmul.f32 %v4517, %v4008
      %v4519 = vand.u32 2147483647, %v4008
      %vm4520 = vcmp.lt.f32.partialorder %v4519, 0.0004427343
      %v4521 = vsel %vm4520, %v4518, %v4515
      %v4522 = vadd.f32 %v4010, 1.0
      %v4523 = vlog2.pop %v4522
      %v4524 = vmul.f32 %v4523, 0.6931472
      %v4525 = vmul.f32 -0.5, %v4010
      %v4526 = vadd.f32 %v4525, 1.0
      %v4527 = vmul.f32 %v4526, %v4010
      %v4528 = vand.u32 2147483647, %v4010
      %vm4529 = vcmp.lt.f32.partialorder %v4528, 0.0004427343
      %v4530 = vsel %vm4529, %v4527, %v4524
      %v4531 = vadd.f32 %v4012, 1.0
      %v4532 = vlog2.pop %v4531
      %v4533 = vmul.f32 %v4532, 0.6931472
      %v4534 = vmul.f32 -0.5, %v4012
      %v4535 = vadd.f32 %v4534, 1.0
      %v4536 = vmul.f32 %v4535, %v4012
      %v4537 = vand.u32 2147483647, %v4012
      %vm4538 = vcmp.lt.f32.partialorder %v4537, 0.0004427343
      %v4539 = vsel %vm4538, %v4536, %v4533
      %v4540 = vadd.f32 %v4014, 1.0
      %v4541 = vlog2.pop %v4540
      %v4542 = vmul.f32 %v4541, 0.6931472
      %v4543 = vmul.f32 -0.5, %v4014
      %v4544 = vadd.f32 %v4543, 1.0
      %v4545 = vmul.f32 %v4544, %v4014
      %v4546 = vand.u32 2147483647, %v4014
      %vm4547 = vcmp.lt.f32.partialorder %v4546, 0.0004427343
      %v4548 = vsel %vm4547, %v4545, %v4542
      %v4549 = vadd.f32 %v4016, 1.0
      %v4550 = vlog2.pop %v4549
      %v4551 = vmul.f32 %v4550, 0.6931472
      %v4552 = vmul.f32 -0.5, %v4016
      %v4553 = vadd.f32 %v4552, 1.0
      %v4554 = vmul.f32 %v4553, %v4016
      %v4555 = vand.u32 2147483647, %v4016
      %vm4556 = vcmp.lt.f32.partialorder %v4555, 0.0004427343
      %v4557 = vsel %vm4556, %v4554, %v4551
      %v4558 = vadd.f32 %v4018, 1.0
      %v4559 = vlog2.pop %v4558
      %v4560 = vmul.f32 %v4559, 0.6931472
      %v4561 = vmul.f32 -0.5, %v4018
      %v4562 = vadd.f32 %v4561, 1.0
      %v4563 = vmul.f32 %v4562, %v4018
      %v4564 = vand.u32 2147483647, %v4018
      %vm4565 = vcmp.lt.f32.partialorder %v4564, 0.0004427343
      %v4566 = vsel %vm4565, %v4563, %v4560
      %v4567 = vadd.f32 %v4020, 1.0
      %v4568 = vlog2.pop %v4567
      %v4569 = vmul.f32 %v4568, 0.6931472
      %v4570 = vmul.f32 -0.5, %v4020
      %v4571 = vadd.f32 %v4570, 1.0
      %v4572 = vmul.f32 %v4571, %v4020
      %v4573 = vand.u32 2147483647, %v4020
      %vm4574 = vcmp.lt.f32.partialorder %v4573, 0.0004427343
      %v4575 = vsel %vm4574, %v4572, %v4569
      %v4576 = vadd.f32 %v4022, 1.0
      %v4577 = vlog2.pop %v4576
      %v4578 = vmul.f32 %v4577, 0.6931472
      %v4579 = vmul.f32 -0.5, %v4022
      %v4580 = vadd.f32 %v4579, 1.0
      %v4581 = vmul.f32 %v4580, %v4022
      %v4582 = vand.u32 2147483647, %v4022
      %vm4583 = vcmp.lt.f32.partialorder %v4582, 0.0004427343
      %v4584 = vsel %vm4583, %v4581, %v4578
      %v4585 = vadd.f32 %v4024, 1.0
      %v4586 = vlog2.pop %v4585
      %v4587 = vmul.f32 %v4586, 0.6931472
      %v4588 = vmul.f32 -0.5, %v4024
      %v4589 = vadd.f32 %v4588, 1.0
      %v4590 = vmul.f32 %v4589, %v4024
      %v4591 = vand.u32 2147483647, %v4024
      %vm4592 = vcmp.lt.f32.partialorder %v4591, 0.0004427343
      %v4593 = vsel %vm4592, %v4590, %v4587
      %v4594 = vadd.f32 %v4026, 1.0
      %v4595 = vlog2.pop %v4594
      %v4596 = vmul.f32 %v4595, 0.6931472
      %v4597 = vmul.f32 -0.5, %v4026
      %v4598 = vadd.f32 %v4597, 1.0
      %v4599 = vmul.f32 %v4598, %v4026
      %v4600 = vand.u32 2147483647, %v4026
      %vm4601 = vcmp.lt.f32.partialorder %v4600, 0.0004427343
      %v4602 = vsel %vm4601, %v4599, %v4596
      %v4603 = vadd.f32 %v3579, %v4035
      %v4604 = vadd.f32 %v3580, %v4044
      %v4605 = vadd.f32 %v3581, %v4053
      %v4606 = vadd.f32 %v3582, %v4062
      %v4607 = vadd.f32 %v3583, %v4071
      %v4608 = vadd.f32 %v3584, %v4080
      %v4609 = vadd.f32 %v3585, %v4089
      %v4610 = vadd.f32 %v3586, %v4098
      %v4611 = vadd.f32 %v3587, %v4107
      %v4612 = vadd.f32 %v3588, %v4116
      %v4613 = vadd.f32 %v3589, %v4125
      %v4614 = vadd.f32 %v3590, %v4134
      %v4615 = vadd.f32 %v3591, %v4143
      %v4616 = vadd.f32 %v3592, %v4152
      %v4617 = vadd.f32 %v3593, %v4161
      %v4618 = vadd.f32 %v3594, %v4170
      %v4619 = vadd.f32 %v3595, %v4179
      %v4620 = vadd.f32 %v3596, %v4188
      %v4621 = vadd.f32 %v3597, %v4197
      %v4622 = vadd.f32 %v3598, %v4206
      %v4623 = vadd.f32 %v3599, %v4215
      %v4624 = vadd.f32 %v3600, %v4224
      %v4625 = vadd.f32 %v3601, %v4233
      %v4626 = vadd.f32 %v3602, %v4242
      %v4627 = vadd.f32 %v3603, %v4251
      %v4628 = vadd.f32 %v3604, %v4260
      %v4629 = vadd.f32 %v3605, %v4269
      %v4630 = vadd.f32 %v3606, %v4278
      %v4631 = vadd.f32 %v3607, %v4287
      %v4632 = vadd.f32 %v3608, %v4296
      %v4633 = vadd.f32 %v3609, %v4305
      %v4634 = vadd.f32 %v3610, %v4314
      %v4635 = vadd.f32 %v3611, %v4323
      %v4636 = vadd.f32 %v3612, %v4332
      %v4637 = vadd.f32 %v3613, %v4341
      %v4638 = vadd.f32 %v3614, %v4350
      %v4639 = vadd.f32 %v3615, %v4359
      %v4640 = vadd.f32 %v3616, %v4368
      %v4641 = vadd.f32 %v3617, %v4377
      %v4642 = vadd.f32 %v3618, %v4386
      %v4643 = vadd.f32 %v3619, %v4395
      %v4644 = vadd.f32 %v3620, %v4404
      %v4645 = vadd.f32 %v3621, %v4413
      %v4646 = vadd.f32 %v3622, %v4422
      %v4647 = vadd.f32 %v3623, %v4431
      %v4648 = vadd.f32 %v3624, %v4440
      %v4649 = vadd.f32 %v3625, %v4449
      %v4650 = vadd.f32 %v3626, %v4458
      %v4651 = vadd.f32 %v3627, %v4467
      %v4652 = vadd.f32 %v3628, %v4476
      %v4653 = vadd.f32 %v3629, %v4485
      %v4654 = vadd.f32 %v3630, %v4494
      %v4655 = vadd.f32 %v3631, %v4503
      %v4656 = vadd.f32 %v3632, %v4512
      %v4657 = vadd.f32 %v3633, %v4521
      %v4658 = vadd.f32 %v3634, %v4530
      %v4659 = vadd.f32 %v3635, %v4539
      %v4660 = vadd.f32 %v3636, %v4548
      %v4661 = vadd.f32 %v3637, %v4557
      %v4662 = vadd.f32 %v3638, %v4566
      %v4663 = vadd.f32 %v3639, %v4575
      %v4664 = vadd.f32 %v3640, %v4584
      %v4665 = vadd.f32 %v3641, %v4593
      %v4666 = vadd.f32 %v3642, %v4602
      %v4667 = vsel %vm3643, %v3707, %v4603
      %v4668 = vsel %vm3644, %v3708, %v4604
      %v4669 = vsel %vm3645, %v3709, %v4605
      %v4670 = vsel %vm3646, %v3710, %v4606
      %v4671 = vsel %vm3647, %v3711, %v4607
      %v4672 = vsel %vm3648, %v3712, %v4608
      %v4673 = vsel %vm3649, %v3713, %v4609
      %v4674 = vsel %vm3650, %v3714, %v4610
      %v4675 = vsel %vm3651, %v3715, %v4611
      %v4676 = vsel %vm3652, %v3716, %v4612
      %v4677 = vsel %vm3653, %v3717, %v4613
      %v4678 = vsel %vm3654, %v3718, %v4614
      %v4679 = vsel %vm3655, %v3719, %v4615
      %v4680 = vsel %vm3656, %v3720, %v4616
      %v4681 = vsel %vm3657, %v3721, %v4617
      %v4682 = vsel %vm3658, %v3722, %v4618
      %v4683 = vsel %vm3659, %v3723, %v4619
      %v4684 = vsel %vm3660, %v3724, %v4620
      %v4685 = vsel %vm3661, %v3725, %v4621
      %v4686 = vsel %vm3662, %v3726, %v4622
      %v4687 = vsel %vm3663, %v3727, %v4623
      %v4688 = vsel %vm3664, %v3728, %v4624
      %v4689 = vsel %vm3665, %v3729, %v4625
      %v4690 = vsel %vm3666, %v3730, %v4626
      %v4691 = vsel %vm3667, %v3731, %v4627
      %v4692 = vsel %vm3668, %v3732, %v4628
      %v4693 = vsel %vm3669, %v3733, %v4629
      %v4694 = vsel %vm3670, %v3734, %v4630
      %v4695 = vsel %vm3671, %v3735, %v4631
      %v4696 = vsel %vm3672, %v3736, %v4632
      %v4697 = vsel %vm3673, %v3737, %v4633
      %v4698 = vsel %vm3674, %v3738, %v4634
      %v4699 = vsel %vm3675, %v3739, %v4635
      %v4700 = vsel %vm3676, %v3740, %v4636
      %v4701 = vsel %vm3677, %v3741, %v4637
      %v4702 = vsel %vm3678, %v3742, %v4638
      %v4703 = vsel %vm3679, %v3743, %v4639
      %v4704 = vsel %vm3680, %v3744, %v4640
      %v4705 = vsel %vm3681, %v3745, %v4641
      %v4706 = vsel %vm3682, %v3746, %v4642
      %v4707 = vsel %vm3683, %v3747, %v4643
      %v4708 = vsel %vm3684, %v3748, %v4644
      %v4709 = vsel %vm3685, %v3749, %v4645
      %v4710 = vsel %vm3686, %v3750, %v4646
      %v4711 = vsel %vm3687, %v3751, %v4647
      %v4712 = vsel %vm3688, %v3752, %v4648
      %v4713 = vsel %vm3689, %v3753, %v4649
      %v4714 = vsel %vm3690, %v3754, %v4650
      %v4715 = vsel %vm3691, %v3755, %v4651
      %v4716 = vsel %vm3692, %v3756, %v4652
      %v4717 = vsel %vm3693, %v3757, %v4653
      %v4718 = vsel %vm3694, %v3758, %v4654
      %v4719 = vsel %vm3695, %v3759, %v4655
      %v4720 = vsel %vm3696, %v3760, %v4656
      %v4721 = vsel %vm3697, %v3761, %v4657
      %v4722 = vsel %vm3698, %v3762, %v4658
      %v4723 = vsel %vm3699, %v3763, %v4659
      %v4724 = vsel %vm3700, %v3764, %v4660
      %v4725 = vsel %vm3701, %v3765, %v4661
      %v4726 = vsel %vm3702, %v3766, %v4662
      %v4727 = vsel %vm3703, %v3767, %v4663
      %v4728 = vsel %vm3704, %v3768, %v4664
      %v4729 = vsel %vm3705, %v3769, %v4665
      %v4730 = vsel %vm3706, %v3770, %v4666
      %v4731 = vsub.f32 %v3515, %v4667
      %v4732 = vsub.f32 %v3516, %v4668
      %v4733 = vsub.f32 %v3517, %v4669
      %v4734 = vsub.f32 %v3518, %v4670
      %v4735 = vsub.f32 %v3519, %v4671
      %v4736 = vsub.f32 %v3520, %v4672
      %v4737 = vsub.f32 %v3521, %v4673
      %v4738 = vsub.f32 %v3522, %v4674
      %v4739 = vsub.f32 %v3523, %v4675
      %v4740 = vsub.f32 %v3524, %v4676
      %v4741 = vsub.f32 %v3525, %v4677
      %v4742 = vsub.f32 %v3526, %v4678
      %v4743 = vsub.f32 %v3527, %v4679
      %v4744 = vsub.f32 %v3528, %v4680
      %v4745 = vsub.f32 %v3529, %v4681
      %v4746 = vsub.f32 %v3530, %v4682
      %v4747 = vsub.f32 %v3531, %v4683
      %v4748 = vsub.f32 %v3532, %v4684
      %v4749 = vsub.f32 %v3533, %v4685
      %v4750 = vsub.f32 %v3534, %v4686
      %v4751 = vsub.f32 %v3535, %v4687
      %v4752 = vsub.f32 %v3536, %v4688
      %v4753 = vsub.f32 %v3537, %v4689
      %v4754 = vsub.f32 %v3538, %v4690
      %v4755 = vsub.f32 %v3539, %v4691
      %v4756 = vsub.f32 %v3540, %v4692
      %v4757 = vsub.f32 %v3541, %v4693
      %v4758 = vsub.f32 %v3542, %v4694
      %v4759 = vsub.f32 %v3543, %v4695
      %v4760 = vsub.f32 %v3544, %v4696
      %v4761 = vsub.f32 %v3545, %v4697
      %v4762 = vsub.f32 %v3546, %v4698
      %v4763 = vsub.f32 %v3547, %v4699
      %v4764 = vsub.f32 %v3548, %v4700
      %v4765 = vsub.f32 %v3549, %v4701
      %v4766 = vsub.f32 %v3550, %v4702
      %v4767 = vsub.f32 %v3551, %v4703
      %v4768 = vsub.f32 %v3552, %v4704
      %v4769 = vsub.f32 %v3553, %v4705
      %v4770 = vsub.f32 %v3554, %v4706
      %v4771 = vsub.f32 %v3555, %v4707
      %v4772 = vsub.f32 %v3556, %v4708
      %v4773 = vsub.f32 %v3557, %v4709
      %v4774 = vsub.f32 %v3558, %v4710
      %v4775 = vsub.f32 %v3559, %v4711
      %v4776 = vsub.f32 %v3560, %v4712
      %v4777 = vsub.f32 %v3561, %v4713
      %v4778 = vsub.f32 %v3562, %v4714
      %v4779 = vsub.f32 %v3563, %v4715
      %v4780 = vsub.f32 %v3564, %v4716
      %v4781 = vsub.f32 %v3565, %v4717
      %v4782 = vsub.f32 %v3566, %v4718
      %v4783 = vsub.f32 %v3567, %v4719
      %v4784 = vsub.f32 %v3568, %v4720
      %v4785 = vsub.f32 %v3569, %v4721
      %v4786 = vsub.f32 %v3570, %v4722
      %v4787 = vsub.f32 %v3571, %v4723
      %v4788 = vsub.f32 %v3572, %v4724
      %v4789 = vsub.f32 %v3573, %v4725
      %v4790 = vsub.f32 %v3574, %v4726
      %v4791 = vsub.f32 %v3575, %v4727
      %v4792 = vsub.f32 %v3576, %v4728
      %v4793 = vsub.f32 %v3577, %v4729
      %v4794 = vsub.f32 %v3578, %v4730
      %v4795 = vadd.f32 %v4731, %v4732
      %v4796 = vadd.f32 %v4795, %v4733
      %v4797 = vadd.f32 %v4796, %v4734
      %v4798 = vadd.f32 %v4797, %v4735
      %v4799 = vadd.f32 %v4798, %v4736
      %v4800 = vadd.f32 %v4799, %v4737
      %v4801 = vadd.f32 %v4800, %v4738
      %v4802 = vadd.f32 %v4801, %v4739
      %v4803 = vadd.f32 %v4802, %v4740
      %v4804 = vadd.f32 %v4803, %v4741
      %v4805 = vadd.f32 %v4804, %v4742
      %v4806 = vadd.f32 %v4805, %v4743
      %v4807 = vadd.f32 %v4806, %v4744
      %v4808 = vadd.f32 %v4807, %v4745
      %v4809 = vadd.f32 %v4808, %v4746
      %v4810 = vadd.f32 %v4809, %v4747
      %v4811 = vadd.f32 %v4810, %v4748
      %v4812 = vadd.f32 %v4811, %v4749
      %v4813 = vadd.f32 %v4812, %v4750
      %v4814 = vadd.f32 %v4813, %v4751
      %v4815 = vadd.f32 %v4814, %v4752
      %v4816 = vadd.f32 %v4815, %v4753
      %v4817 = vadd.f32 %v4816, %v4754
      %v4818 = vadd.f32 %v4817, %v4755
      %v4819 = vadd.f32 %v4818, %v4756
      %v4820 = vadd.f32 %v4819, %v4757
      %v4821 = vadd.f32 %v4820, %v4758
      %v4822 = vadd.f32 %v4821, %v4759
      %v4823 = vadd.f32 %v4822, %v4760
      %v4824 = vadd.f32 %v4823, %v4761
      %v4825 = vadd.f32 %v4824, %v4762
      %v4826 = vadd.f32 %v4825, %v4763
      %v4827 = vadd.f32 %v4826, %v4764
      %v4828 = vadd.f32 %v4827, %v4765
      %v4829 = vadd.f32 %v4828, %v4766
      %v4830 = vadd.f32 %v4829, %v4767
      %v4831 = vadd.f32 %v4830, %v4768
      %v4832 = vadd.f32 %v4831, %v4769
      %v4833 = vadd.f32 %v4832, %v4770
      %v4834 = vadd.f32 %v4833, %v4771
      %v4835 = vadd.f32 %v4834, %v4772
      %v4836 = vadd.f32 %v4835, %v4773
      %v4837 = vadd.f32 %v4836, %v4774
      %v4838 = vadd.f32 %v4837, %v4775
      %v4839 = vadd.f32 %v4838, %v4776
      %v4840 = vadd.f32 %v4839, %v4777
      %v4841 = vadd.f32 %v4840, %v4778
      %v4842 = vadd.f32 %v4841, %v4779
      %v4843 = vadd.f32 %v4842, %v4780
      %v4844 = vadd.f32 %v4843, %v4781
      %v4845 = vadd.f32 %v4844, %v4782
      %v4846 = vadd.f32 %v4845, %v4783
      %v4847 = vadd.f32 %v4846, %v4784
      %v4848 = vadd.f32 %v4847, %v4785
      %v4849 = vadd.f32 %v4848, %v4786
      %v4850 = vadd.f32 %v4849, %v4787
      %v4851 = vadd.f32 %v4850, %v4788
      %v4852 = vadd.f32 %v4851, %v4789
      %v4853 = vadd.f32 %v4852, %v4790
      %v4854 = vadd.f32 %v4853, %v4791
      %v4855 = vadd.f32 %v4854, %v4792
      %v4856 = vadd.f32 %v4855, %v4793
      %v4857 = vadd.f32 %v4856, %v4794
      %4858 = vadd.xlane.f32.xlu0 %v4857
      %v4859 = vpop.xlane.xlu0 %4858
      %v4860 = vrot.slane %v4859, 4
      %v4861 = vadd.f32 %v4859, %v4860
      %v4862 = vrot.slane %v4861, 2
      %v4863 = vadd.f32 %v4861, %v4862
      %v4864 = vrot.slane %v4863, 1
      %v4865 = vadd.f32 %v4863, %v4864
      %s4866 = vtos %v4865
      %v4867 = vstv %s4866
      %v4868 = vadd.f32 %v3010, %v4867
      %vm4869 = vcmask 0
      %4870 = vst.msk [vmem:[%s271] sm:$0x1] %vm4869, %v4868
      %p4871 = scmp.lt.s32.totalorder %s17, 1
      %s4872 = scalar_select %p4871, %s17, 1
      %s4873 = scalar_lea.vmem %s6, %s4872
      // Predicated region
      $region45: #{elbo_sgvb.1} parent=43 // pred_check
        %p4874 = pneg %p171
      $region46: #{elbo_sgvb.1} parent=43 // pred_check_branch
        %4876 = sbr.rel (%p4874) target = $region48
      $region47: #{elbo_sgvb.1} parent=43 // pred_region
        _
      $region48: #{elbo_sgvb.1} parent=43 // pred_fallthru
        _
    $region44: #{elbo_sgvb.1} parent=5 // pred_fallthru
      _
    %p4877 = scmp.le.s32.totalorder 2, %s12
    // Predicated region
    $region49: #{elbo_sgvb.1} parent=5 // pred_check
      %p4878 = pneg %p4877
    $region50: #{elbo_sgvb.1} parent=5 // pred_check_branch
      %4880 = sbr.rel (%p4878) target = $region52
    $region51: #{elbo_sgvb.1} parent=5 // pred_region
      %s4881 = ssub.s32 %s12, 2
      // Predicated region
      $region53: #{elbo_sgvb.1} parent=51 // pred_check
        %p4882 = pneg %p177
      $region54: #{elbo_sgvb.1} parent=51 // pred_check_branch
        %4884 = sbr.rel (%p4882) target = $region56
      $region55: #{elbo_sgvb.1} parent=51 // pred_region
        %p4885 = scmp.lt.s32.totalorder %s18, 1
        %s4886 = scalar_select %p4885, %s18, 1
        %s4887 = scalar_lea.vmem %s6, %s4886
      $region56: #{elbo_sgvb.1} parent=51 // pred_fallthru
        _
    $region52: #{elbo_sgvb.1} parent=5 // pred_fallthru
      _
  $region6: #{elbo_sgvb.1} parent=0 // loop_footer
    %s16 = sadd.s32 1, %s12
  $region7: #{elbo_sgvb.1} parent=0 // loop_footer_branch
    %11 = sbr.rel target = $region3
  $region8: #{elbo_sgvb.1} parent=0 // loop_exit
    _

</llo_original>
